<compile_context>
chip_gen: v5e
topology: v5e:2x2
jax: 0.10.0
libtpu: 0.0.40
codegen_flags: <defaults>
</compile_context>

<pallas_src>
from functools import partial

import jax
import jax.numpy as jnp
from jax import lax
from jax.experimental import pallas as pl
from jax.experimental.pallas import tpu as pltpu

# ----------------------------- model config (small, synthetic) -----------------------------
VOCAB = 256
D = 128            # hidden size
H = 4              # attention heads
HD = D // H        # head dim = 32
FFN = 256          # MLP intermediate
LAYERS = 2
S_MAX = 16         # fixed padded sequence length
EOS_ID = 0         # synthetic terminator id (stands in for eos / <|eot_id|>)


def _rms(x, w):
    var = jnp.mean(x * x, axis=-1, keepdims=True)
    return x * lax.rsqrt(var + 1e-5) * w


# ----------------------------- single fused generation kernel -----------------------------

def _generate_kernel(tokens_ref, len_ref, embed_ref, attn_norm_ref, wqkv_ref, wo_ref,
                     mlp_norm_ref, wgu_ref, wd_ref, final_norm_ref, lm_head_ref,
                     cos_ref, sin_ref, rot_ref,
                     tokens_out_ref, len_out_ref, *, max_new_tokens):
    """Whole greedy decode loop (max_new_tokens steps) fused into one kernel."""
    # --- constants hoisted out of the decode loop (built in-kernel, no HBM mask DMA) ---
    qi = lax.broadcasted_iota(jnp.int32, (S_MAX, S_MAX), 0)
    kj = lax.broadcasted_iota(jnp.int32, (S_MAX, S_MAX), 1)
    causal = kj <= qi                                               # static causal mask
    row_ids = lax.broadcasted_iota(jnp.int32, (S_MAX, 1), 0)
    vocab_lane = lax.broadcasted_iota(jnp.int32, (1, VOCAB), 1)
    tok_lane = lax.broadcasted_iota(jnp.int32, (S_MAX, VOCAB), 1)
    cos = cos_ref[...]                                              # (S, D) f32, head-tiled
    sin = sin_ref[...]

    def forward(tokens_col, length):
        """One full Llama-style forward; returns next-token logits (1, VOCAB) f32."""
        # Embedding gather as a one-hot bf16 matmul (in-kernel, MXU).
        one_hot = jnp.where(tok_lane == tokens_col, 1.0, 0.0).astype(jnp.bfloat16)
        x = jnp.dot(one_hot, embed_ref[...], preferred_element_type=jnp.float32)   # (S, D)

        rot = rot_ref[...]                                          # (D, D) bf16 block-diag
        for l in range(LAYERS):
            # ---------------- attention block ----------------
            h = _rms(x, attn_norm_ref[l]).astype(jnp.bfloat16)      # (S, D)
            qkv = jnp.dot(h, wqkv_ref[l], preferred_element_type=jnp.float32)      # (S, 3D)
            q = qkv[:, :D]
            k = qkv[:, D:2 * D]
            v = qkv[:, 2 * D:].astype(jnp.bfloat16)
            # RoPE: x*cos + rotate_half(x)*sin; rotate_half = one block-diag bf16 matmul.
            q = q * cos + jnp.dot(q.astype(jnp.bfloat16), rot,
                                  preferred_element_type=jnp.float32) * sin
            k = k * cos + jnp.dot(k.astype(jnp.bfloat16), rot,
                                  preferred_element_type=jnp.float32) * sin
            q = q.astype(jnp.bfloat16)
            k = k.astype(jnp.bfloat16)

            # Per-head scores/softmax (tiny at S=16); output heads concatenated lane-dense
            # so the output projection is ONE (S,128)@(128,128) Wo matmul.
            o_heads = []
            for hh in range(H):
                sl = slice(hh * HD, (hh + 1) * HD)
                s = lax.dot_general(q[:, sl], k[:, sl], (((1,), (1,)), ((), ())),
                                    preferred_element_type=jnp.float32)            # (S, S)
                s = jnp.where(causal, s, -1e30)
                s = s - jnp.max(s, axis=-1, keepdims=True)
                p = jnp.exp(s)
                p = p * pl.reciprocal(jnp.sum(p, axis=-1, keepdims=True), approx=True)
                o_heads.append(jnp.dot(p.astype(jnp.bfloat16), v[:, sl],
                                       preferred_element_type=jnp.float32))        # (S, HD)
            o_all = jnp.concatenate(o_heads, axis=-1).astype(jnp.bfloat16)          # (S, D)
            x = x + jnp.dot(o_all, wo_ref[l], preferred_element_type=jnp.float32)

            # ---------------- SwiGLU MLP block (fused gate/up) ----------------
            h2 = _rms(x, mlp_norm_ref[l]).astype(jnp.bfloat16)
            gu = jnp.dot(h2, wgu_ref[l], preferred_element_type=jnp.float32)        # (S, 2F)
            g = gu[:, :FFN]
            u = gu[:, FFN:]
            act = (g * jax.nn.sigmoid(g) * u).astype(jnp.bfloat16)
            x = x + jnp.dot(act, wd_ref[l], preferred_element_type=jnp.float32)

        # final norm + LM head only on the last valid row (lane-dense (1, VOCAB) output)
        sel = jnp.where(row_ids == (length - 1), 1.0, 0.0)          # (S, 1)
        last = jnp.sum(x * sel, axis=0, keepdims=True)              # (1, D)
        last = _rms(last, final_norm_ref[...])
        return jnp.dot(last.astype(jnp.bfloat16), lm_head_ref[...],
                       preferred_element_type=jnp.float32)           # (1, VOCAB)

    def body(step, carry):
        tokens_col, length, done = carry                             # (S,1) (1,1) (1,1) i32
        logits = forward(tokens_col, length)
        # greedy argmax (first occurrence), kept fully vectorized
        m = jnp.max(logits, axis=-1, keepdims=True)
        nxt = jnp.min(jnp.where(logits >= m, vocab_lane, VOCAB),
                      axis=-1, keepdims=True)                        # (1,1) i32
        is_eos = (nxt == EOS_ID)
        can_write = (done == 0) & (~is_eos) & (length < S_MAX)       # (1,1) bool
        write_mask = (row_ids == length) & can_write                 # (S,1) bool
        tokens_col = jnp.where(write_mask, nxt, tokens_col)
        length = jnp.where(can_write, length + 1, length)
        done = jnp.where(is_eos | (length >= S_MAX), 1, done)
        return tokens_col, length, done

    tokens0 = tokens_ref[...]                                        # (S, 1) i32
    length0 = len_ref[...]                                           # (1, 1) i32
    done0 = jnp.zeros((1, 1), jnp.int32)
    tokens_f, length_f, _ = lax.fori_loop(0, max_new_tokens, body,
                                          (tokens0, length0, done0))
    tokens_out_ref[...] = tokens_f
    len_out_ref[...] = length_f


# ----------------------------- params / RoPE tables -----------------------------

def init_params(key):
    def w(k, shape, scale=0.02):
        return scale * jax.random.normal(k, shape, dtype=jnp.float32)

    ks = jax.random.split(key, 9)
    qk_scale = 1.0 / (HD ** 0.5)
    # fused per-layer QKV (attention scale folded into Wq at init)
    wq = w(ks[1], (LAYERS, D, D)) * qk_scale
    wk = w(ks[2], (LAYERS, D, D))
    wv = w(ks[3], (LAYERS, D, D))
    wqkv = jnp.concatenate([wq, wk, wv], axis=-1).astype(jnp.bfloat16)      # (L, D, 3D)
    # fused gate/up
    wg = w(ks[5], (LAYERS, D, FFN))
    wu = w(ks[6], (LAYERS, D, FFN))
    wgu = jnp.concatenate([wg, wu], axis=-1).astype(jnp.bfloat16)           # (L, D, 2F)
    return {
        'embed': w(ks[0], (VOCAB, D)).astype(jnp.bfloat16),
        'wqkv': wqkv,
        'wo': w(ks[4], (LAYERS, D, D)).astype(jnp.bfloat16),
        'wgu': wgu,
        'wd': w(ks[7], (LAYERS, FFN, D)).astype(jnp.bfloat16),
        'lm_head': w(ks[8], (D, VOCAB)).astype(jnp.bfloat16),
        'attn_norm': jnp.ones((LAYERS, 1, D), jnp.float32),
        'mlp_norm': jnp.ones((LAYERS, 1, D), jnp.float32),
        'final_norm': jnp.ones((1, D), jnp.float32),
    }


def make_rope_tables():
    half = HD // 2
    inv_freq = 1.0 / (10000.0 ** (jnp.arange(half, dtype=jnp.float32) / half))
    pos = jnp.arange(S_MAX, dtype=jnp.float32)
    ang = pos[:, None] * inv_freq[None, :]                     # (S, half)
    cos = jnp.concatenate([jnp.cos(ang), jnp.cos(ang)], axis=-1)   # (S, HD)
    sin = jnp.concatenate([jnp.sin(ang), jnp.sin(ang)], axis=-1)
    # pre-tiled to the lane-dense head-concat layout consumed by the kernel
    cos_t = jnp.tile(cos, (1, H))                              # (S, D)
    sin_t = jnp.tile(sin, (1, H))
    # per-head rotate-half matrix:  x @ rot_head == concat(-x2, x1)
    eye = jnp.eye(half, dtype=jnp.float32)
    zero = jnp.zeros((half, half), jnp.float32)
    rot_head = jnp.block([[zero, eye], [-eye, zero]])          # (HD, HD)
    # block-diagonal over the H heads -> one full-width (D, D) bf16 matmul per q/k
    rot_block = jnp.kron(jnp.eye(H, dtype=jnp.float32), rot_head).astype(jnp.bfloat16)
    return cos_t, sin_t, rot_block


# ----------------------------- single-dispatch greedy generation -----------------------------

def build_generate(max_new_tokens):
    cos_t, sin_t, rot_block = make_rope_tables()
    kernel = partial(_generate_kernel, max_new_tokens=max_new_tokens)

    @jax.jit
    def generate(params, tokens0, length0):
        operands = (tokens0, length0,
                    params['embed'], params['attn_norm'], params['wqkv'], params['wo'],
                    params['mlp_norm'], params['wgu'], params['wd'],
                    params['final_norm'], params['lm_head'],
                    cos_t, sin_t, rot_block)
        return pl.pallas_call(
            kernel,
            out_shape=(jax.ShapeDtypeStruct((S_MAX, 1), jnp.int32),
                       jax.ShapeDtypeStruct((1, 1), jnp.int32)),
            in_specs=[pl.BlockSpec(memory_space=pltpu.MemorySpace.VMEM)
                      for _ in operands],
            out_specs=(pl.BlockSpec(memory_space=pltpu.MemorySpace.VMEM),
                       pl.BlockSpec(memory_space=pltpu.MemorySpace.VMEM)),
        )(*operands)

    return generate


def llm_chat_generate(params, prompt_tokens, max_new_tokens=4):
    """Greedy generation (do_sample=False), stopping at EOS_ID (terminator stand-in).

    Returns (newly generated token ids, padded token buffer) — the analogue of
    `generated_text[len(prompt):]` from the original module.
    """
    plen = int(prompt_tokens.shape[0])
    tokens0 = jnp.zeros((S_MAX, 1), jnp.int32).at[:plen, 0].set(prompt_tokens)
    length0 = jnp.full((1, 1), plen, jnp.int32)
    generate = build_generate(max_new_tokens)
    tokens, length = generate(params, tokens0, length0)
    final_len = int(jax.device_get(length)[0, 0])
    toks = jax.device_get(tokens)[:, 0]
    generated = [int(t) for t in toks[plen:final_len]]
    return generated, tokens


if __name__ == "__main__":
    key = jax.random.PRNGKey(0)
    pkey, tkey = jax.random.split(key)
    params = init_params(pkey)

    # TODO(synk): a real prompt would go through tokenizer.apply_chat_template; synthetic ids here.
    prompt_len = 8
    prompt_tokens = jax.random.randint(tkey, (prompt_len,), 1, VOCAB, dtype=jnp.int32)

    generated, final_tokens = llm_chat_generate(params, prompt_tokens, max_new_tokens=4)
    jax.block_until_ready(final_tokens)
    print("KERNEL_OK")
</pallas_src>

<mosaic_0001>
module attributes {stable_mosaic.version = 11 : i64} {
  func.func @_generate_kernel(%arg0: memref<16x1xi32, #tpu.memory_space<vmem>>, %arg1: memref<1x1xi32, #tpu.memory_space<vmem>>, %arg2: memref<256x128xbf16, #tpu.memory_space<vmem>>, %arg3: memref<2x1x128xf32, #tpu.memory_space<vmem>>, %arg4: memref<2x128x384xbf16, #tpu.memory_space<vmem>>, %arg5: memref<2x128x128xbf16, #tpu.memory_space<vmem>>, %arg6: memref<2x1x128xf32, #tpu.memory_space<vmem>>, %arg7: memref<2x128x512xbf16, #tpu.memory_space<vmem>>, %arg8: memref<2x256x128xbf16, #tpu.memory_space<vmem>>, %arg9: memref<1x128xf32, #tpu.memory_space<vmem>>, %arg10: memref<128x256xbf16, #tpu.memory_space<vmem>>, %arg11: memref<16x128xf32, #tpu.memory_space<vmem>>, %arg12: memref<16x128xf32, #tpu.memory_space<vmem>>, %arg13: memref<128x128xbf16, #tpu.memory_space<vmem>>, %arg14: memref<16x1xi32, #tpu.memory_space<vmem>>, %arg15: memref<1x1xi32, #tpu.memory_space<vmem>>) attributes {dimension_semantics = [], scalar_prefetch = 0 : i64, scratch_operands = 0 : i64, tpu.core_type = #tpu.core_type<tc>} {
    %0 = tpu.iota {dimensions = array<i32: 0>} : vector<16x16xi32>
    %1 = tpu.iota {dimensions = array<i32: 1>} : vector<16x16xi32>
    %2 = arith.cmpi sle, %1, %0 : vector<16x16xi32>
    %3 = tpu.iota {dimensions = array<i32: 0>} : vector<16x1xi32>
    %4 = tpu.iota {dimensions = array<i32: 1>} : vector<1x256xi32>
    %5 = tpu.iota {dimensions = array<i32: 1>} : vector<16x256xi32>
    %c0 = arith.constant 0 : index
    %c0_0 = arith.constant 0 : index
    %6 = vector.load %arg11[%c0, %c0_0] : memref<16x128xf32, #tpu.memory_space<vmem>>, vector<16x128xf32>
    %c0_1 = arith.constant 0 : index
    %c0_2 = arith.constant 0 : index
    %7 = vector.load %arg12[%c0_1, %c0_2] : memref<16x128xf32, #tpu.memory_space<vmem>>, vector<16x128xf32>
    %c0_3 = arith.constant 0 : index
    %c0_4 = arith.constant 0 : index
    %8 = vector.load %arg0[%c0_3, %c0_4] : memref<16x1xi32, #tpu.memory_space<vmem>>, vector<16x1xi32>
    %c0_5 = arith.constant 0 : index
    %c0_6 = arith.constant 0 : index
    %9 = vector.load %arg1[%c0_5, %c0_6] : memref<1x1xi32, #tpu.memory_space<vmem>>, vector<1x1xi32>
    %c0_i32 = arith.constant 0 : i32
    %10 = vector.broadcast %c0_i32 : i32 to vector<1x1xi32>
    %c0_i32_7 = arith.constant 0 : i32
    %c4_i32 = arith.constant 4 : i32
    %11 = arith.addi %c0_i32_7, %c4_i32 : i32
    %c1_i32 = arith.constant 1 : i32
    %12:3 = scf.for %arg16 = %c0_i32_7 to %11 step %c1_i32 iter_args(%arg17 = %8, %arg18 = %9, %arg19 = %10) -> (vector<16x1xi32>, vector<1x1xi32>, vector<1x1xi32>)  : i32 {
      %15 = vector.broadcast %arg17 : vector<16x1xi32> to vector<16x256xi32>
      %16 = arith.cmpi eq, %5, %15 : vector<16x256xi32>
      %cst = arith.constant 1.000000e+00 : f32
      %cst_12 = arith.constant 0.000000e+00 : f32
      %17 = vector.broadcast %cst : f32 to vector<16x256xf32>
      %18 = vector.broadcast %cst_12 : f32 to vector<16x256xf32>
      %19 = arith.select %16, %17, %18 : vector<16x256xi1>, vector<16x256xf32>
      %20 = arith.truncf %19 : vector<16x256xf32> to vector<16x256xbf16>
      %c0_13 = arith.constant 0 : index
      %c0_14 = arith.constant 0 : index
      %21 = vector.load %arg2[%c0_13, %c0_14] : memref<256x128xbf16, #tpu.memory_space<vmem>>, vector<256x128xbf16>
      %cst_15 = arith.constant dense<0.000000e+00> : vector<16x128xf32>
      %22 = tpu.matmul %20, %21, %cst_15 {dimension_numbers = #tpu.dot_dimension_numbers<[1], [0], [0], [1], [0, 0, 1, 1], [], []>} : vector<16x256xbf16>, vector<256x128xbf16>, vector<16x128xf32> -> vector<16x128xf32>
      %c0_16 = arith.constant 0 : index
      %c0_17 = arith.constant 0 : index
      %23 = vector.load %arg13[%c0_16, %c0_17] : memref<128x128xbf16, #tpu.memory_space<vmem>>, vector<128x128xbf16>
      %c0_18 = arith.constant 0 : index
      %c0_19 = arith.constant 0 : index
      %c0_20 = arith.constant 0 : index
      %24 = vector.load %arg3[%c0_18, %c0_19, %c0_20] : memref<2x1x128xf32, #tpu.memory_space<vmem>>, vector<1x1x128xf32>
      %25 = vector.shape_cast %24 : vector<1x1x128xf32> to vector<1x128xf32>
      %26 = arith.mulf %22, %22 : vector<16x128xf32>
      %cst_21 = arith.constant dense<0.000000e+00> : vector<16xf32>
      %27 = vector.multi_reduction <add>, %26, %cst_21 [1] : vector<16x128xf32> to vector<16xf32>
      %28 = vector.shape_cast %27 : vector<16xf32> to vector<16x1xf32>
      %cst_22 = arith.constant 1.280000e+02 : f32
      %29 = vector.broadcast %cst_22 : f32 to vector<16x1xf32>
      %30 = arith.divf %28, %29 : vector<16x1xf32>
      %cst_23 = arith.constant 9.99999974E-6 : f32
      %31 = vector.broadcast %cst_23 : f32 to vector<16x1xf32>
      %32 = arith.addf %30, %31 : vector<16x1xf32>
      %33 = math.rsqrt %32 : vector<16x1xf32>
      %34 = vector.broadcast %33 : vector<16x1xf32> to vector<16x128xf32>
      %35 = arith.mulf %22, %34 : vector<16x128xf32>
      %36 = vector.broadcast %25 : vector<1x128xf32> to vector<16x128xf32>
      %37 = arith.mulf %35, %36 : vector<16x128xf32>
      %38 = arith.truncf %37 : vector<16x128xf32> to vector<16x128xbf16>
      %c0_24 = arith.constant 0 : index
      %c0_25 = arith.constant 0 : index
      %c0_26 = arith.constant 0 : index
      %39 = vector.load %arg4[%c0_24, %c0_25, %c0_26] : memref<2x128x384xbf16, #tpu.memory_space<vmem>>, vector<1x128x384xbf16>
      %40 = vector.shape_cast %39 : vector<1x128x384xbf16> to vector<128x384xbf16>
      %cst_27 = arith.constant dense<0.000000e+00> : vector<16x384xf32>
      %41 = tpu.matmul %38, %40, %cst_27 {dimension_numbers = #tpu.dot_dimension_numbers<[1], [0], [0], [1], [0, 0, 1, 1], [], []>} : vector<16x128xbf16>, vector<128x384xbf16>, vector<16x384xf32> -> vector<16x384xf32>
      %42 = vector.extract_strided_slice %41 {offsets = [0, 0], sizes = [16, 128], strides = [1, 1]} : vector<16x384xf32> to vector<16x128xf32>
      %43 = vector.extract_strided_slice %41 {offsets = [0, 128], sizes = [16, 128], strides = [1, 1]} : vector<16x384xf32> to vector<16x128xf32>
      %44 = vector.extract_strided_slice %41 {offsets = [0, 256], sizes = [16, 128], strides = [1, 1]} : vector<16x384xf32> to vector<16x128xf32>
      %45 = arith.truncf %44 : vector<16x128xf32> to vector<16x128xbf16>
      %46 = arith.mulf %42, %6 : vector<16x128xf32>
      %47 = arith.truncf %42 : vector<16x128xf32> to vector<16x128xbf16>
      %cst_28 = arith.constant dense<0.000000e+00> : vector<16x128xf32>
      %48 = tpu.matmul %47, %23, %cst_28 {dimension_numbers = #tpu.dot_dimension_numbers<[1], [0], [0], [1], [0, 0, 1, 1], [], []>} : vector<16x128xbf16>, vector<128x128xbf16>, vector<16x128xf32> -> vector<16x128xf32>
      %49 = arith.mulf %48, %7 : vector<16x128xf32>
      %50 = arith.addf %46, %49 : vector<16x128xf32>
      %51 = arith.mulf %43, %6 : vector<16x128xf32>
      %52 = arith.truncf %43 : vector<16x128xf32> to vector<16x128xbf16>
      %cst_29 = arith.constant dense<0.000000e+00> : vector<16x128xf32>
      %53 = tpu.matmul %52, %23, %cst_29 {dimension_numbers = #tpu.dot_dimension_numbers<[1], [0], [0], [1], [0, 0, 1, 1], [], []>} : vector<16x128xbf16>, vector<128x128xbf16>, vector<16x128xf32> -> vector<16x128xf32>
      %54 = arith.mulf %53, %7 : vector<16x128xf32>
      %55 = arith.addf %51, %54 : vector<16x128xf32>
      %56 = arith.truncf %50 : vector<16x128xf32> to vector<16x128xbf16>
      %57 = arith.truncf %55 : vector<16x128xf32> to vector<16x128xbf16>
      %58 = vector.extract_strided_slice %56 {offsets = [0, 0], sizes = [16, 32], strides = [1, 1]} : vector<16x128xbf16> to vector<16x32xbf16>
      %59 = vector.extract_strided_slice %57 {offsets = [0, 0], sizes = [16, 32], strides = [1, 1]} : vector<16x128xbf16> to vector<16x32xbf16>
      %cst_30 = arith.constant dense<0.000000e+00> : vector<16x16xf32>
      %60 = tpu.matmul %58, %59, %cst_30 {dimension_numbers = #tpu.dot_dimension_numbers<[1], [1], [0], [0], [0, 0, 1, 0], [], []>} : vector<16x32xbf16>, vector<16x32xbf16>, vector<16x16xf32> -> vector<16x16xf32>
      %cst_31 = arith.constant -1.000000e+30 : f32
      %61 = vector.broadcast %cst_31 : f32 to vector<16x16xf32>
      %62 = arith.select %2, %60, %61 : vector<16x16xi1>, vector<16x16xf32>
      %cst_32 = arith.constant dense<0xFF800000> : vector<16xf32>
      %63 = vector.multi_reduction <maximumf>, %62, %cst_32 [1] : vector<16x16xf32> to vector<16xf32>
      %64 = vector.shape_cast %63 : vector<16xf32> to vector<16x1xf32>
      %65 = vector.broadcast %64 : vector<16x1xf32> to vector<16x16xf32>
      %66 = arith.subf %62, %65 : vector<16x16xf32>
      %67 = math.exp %66 : vector<16x16xf32>
      %cst_33 = arith.constant dense<0.000000e+00> : vector<16xf32>
      %68 = vector.multi_reduction <add>, %67, %cst_33 [1] : vector<16x16xf32> to vector<16xf32>
      %69 = vector.shape_cast %68 : vector<16xf32> to vector<16x1xf32>
      %70 = tpu.reciprocal %69 {approx = true} : vector<16x1xf32> -> vector<16x1xf32>
      %71 = vector.broadcast %70 : vector<16x1xf32> to vector<16x16xf32>
      %72 = arith.mulf %67, %71 : vector<16x16xf32>
      %73 = arith.truncf %72 : vector<16x16xf32> to vector<16x16xbf16>
      %74 = vector.extract_strided_slice %45 {offsets = [0, 0], sizes = [16, 32], strides = [1, 1]} : vector<16x128xbf16> to vector<16x32xbf16>
      %cst_34 = arith.constant dense<0.000000e+00> : vector<16x32xf32>
      %75 = tpu.matmul %73, %74, %cst_34 {dimension_numbers = #tpu.dot_dimension_numbers<[1], [0], [0], [1], [0, 0, 1, 1], [], []>} : vector<16x16xbf16>, vector<16x32xbf16>, vector<16x32xf32> -> vector<16x32xf32>
      %76 = vector.extract_strided_slice %56 {offsets = [0, 32], sizes = [16, 32], strides = [1, 1]} : vector<16x128xbf16> to vector<16x32xbf16>
      %77 = vector.extract_strided_slice %57 {offsets = [0, 32], sizes = [16, 32], strides = [1, 1]} : vector<16x128xbf16> to vector<16x32xbf16>
      %cst_35 = arith.constant dense<0.000000e+00> : vector<16x16xf32>
      %78 = tpu.matmul %76, %77, %cst_35 {dimension_numbers = #tpu.dot_dimension_numbers<[1], [1], [0], [0], [0, 0, 1, 0], [], []>} : vector<16x32xbf16>, vector<16x32xbf16>, vector<16x16xf32> -> vector<16x16xf32>
      %cst_36 = arith.constant -1.000000e+30 : f32
      %79 = vector.broadcast %cst_36 : f32 to vector<16x16xf32>
      %80 = arith.select %2, %78, %79 : vector<16x16xi1>, vector<16x16xf32>
      %cst_37 = arith.constant dense<0xFF800000> : vector<16xf32>
      %81 = vector.multi_reduction <maximumf>, %80, %cst_37 [1] : vector<16x16xf32> to vector<16xf32>
      %82 = vector.shape_cast %81 : vector<16xf32> to vector<16x1xf32>
      %83 = vector.broadcast %82 : vector<16x1xf32> to vector<16x16xf32>
      %84 = arith.subf %80, %83 : vector<16x16xf32>
      %85 = math.exp %84 : vector<16x16xf32>
      %cst_38 = arith.constant dense<0.000000e+00> : vector<16xf32>
      %86 = vector.multi_reduction <add>, %85, %cst_38 [1] : vector<16x16xf32> to vector<16xf32>
      %87 = vector.shape_cast %86 : vector<16xf32> to vector<16x1xf32>
      %88 = tpu.reciprocal %87 {approx = true} : vector<16x1xf32> -> vector<16x1xf32>
      %89 = vector.broadcast %88 : vector<16x1xf32> to vector<16x16xf32>
      %90 = arith.mulf %85, %89 : vector<16x16xf32>
      %91 = arith.truncf %90 : vector<16x16xf32> to vector<16x16xbf16>
      %92 = vector.extract_strided_slice %45 {offsets = [0, 32], sizes = [16, 32], strides = [1, 1]} : vector<16x128xbf16> to vector<16x32xbf16>
      %cst_39 = arith.constant dense<0.000000e+00> : vector<16x32xf32>
      %93 = tpu.matmul %91, %92, %cst_39 {dimension_numbers = #tpu.dot_dimension_numbers<[1], [0], [0], [1], [0, 0, 1, 1], [], []>} : vector<16x16xbf16>, vector<16x32xbf16>, vector<16x32xf32> -> vector<16x32xf32>
      %94 = vector.extract_strided_slice %56 {offsets = [0, 64], sizes = [16, 32], strides = [1, 1]} : vector<16x128xbf16> to vector<16x32xbf16>
      %95 = vector.extract_strided_slice %57 {offsets = [0, 64], sizes = [16, 32], strides = [1, 1]} : vector<16x128xbf16> to vector<16x32xbf16>
      %cst_40 = arith.constant dense<0.000000e+00> : vector<16x16xf32>
      %96 = tpu.matmul %94, %95, %cst_40 {dimension_numbers = #tpu.dot_dimension_numbers<[1], [1], [0], [0], [0, 0, 1, 0], [], []>} : vector<16x32xbf16>, vector<16x32xbf16>, vector<16x16xf32> -> vector<16x16xf32>
      %cst_41 = arith.constant -1.000000e+30 : f32
      %97 = vector.broadcast %cst_41 : f32 to vector<16x16xf32>
      %98 = arith.select %2, %96, %97 : vector<16x16xi1>, vector<16x16xf32>
      %cst_42 = arith.constant dense<0xFF800000> : vector<16xf32>
      %99 = vector.multi_reduction <maximumf>, %98, %cst_42 [1] : vector<16x16xf32> to vector<16xf32>
      %100 = vector.shape_cast %99 : vector<16xf32> to vector<16x1xf32>
      %101 = vector.broadcast %100 : vector<16x1xf32> to vector<16x16xf32>
      %102 = arith.subf %98, %101 : vector<16x16xf32>
      %103 = math.exp %102 : vector<16x16xf32>
      %cst_43 = arith.constant dense<0.000000e+00> : vector<16xf32>
      %104 = vector.multi_reduction <add>, %103, %cst_43 [1] : vector<16x16xf32> to vector<16xf32>
      %105 = vector.shape_cast %104 : vector<16xf32> to vector<16x1xf32>
      %106 = tpu.reciprocal %105 {approx = true} : vector<16x1xf32> -> vector<16x1xf32>
      %107 = vector.broadcast %106 : vector<16x1xf32> to vector<16x16xf32>
      %108 = arith.mulf %103, %107 : vector<16x16xf32>
      %109 = arith.truncf %108 : vector<16x16xf32> to vector<16x16xbf16>
      %110 = vector.extract_strided_slice %45 {offsets = [0, 64], sizes = [16, 32], strides = [1, 1]} : vector<16x128xbf16> to vector<16x32xbf16>
      %cst_44 = arith.constant dense<0.000000e+00> : vector<16x32xf32>
      %111 = tpu.matmul %109, %110, %cst_44 {dimension_numbers = #tpu.dot_dimension_numbers<[1], [0], [0], [1], [0, 0, 1, 1], [], []>} : vector<16x16xbf16>, vector<16x32xbf16>, vector<16x32xf32> -> vector<16x32xf32>
      %112 = vector.extract_strided_slice %56 {offsets = [0, 96], sizes = [16, 32], strides = [1, 1]} : vector<16x128xbf16> to vector<16x32xbf16>
      %113 = vector.extract_strided_slice %57 {offsets = [0, 96], sizes = [16, 32], strides = [1, 1]} : vector<16x128xbf16> to vector<16x32xbf16>
      %cst_45 = arith.constant dense<0.000000e+00> : vector<16x16xf32>
      %114 = tpu.matmul %112, %113, %cst_45 {dimension_numbers = #tpu.dot_dimension_numbers<[1], [1], [0], [0], [0, 0, 1, 0], [], []>} : vector<16x32xbf16>, vector<16x32xbf16>, vector<16x16xf32> -> vector<16x16xf32>
      %cst_46 = arith.constant -1.000000e+30 : f32
      %115 = vector.broadcast %cst_46 : f32 to vector<16x16xf32>
      %116 = arith.select %2, %114, %115 : vector<16x16xi1>, vector<16x16xf32>
      %cst_47 = arith.constant dense<0xFF800000> : vector<16xf32>
      %117 = vector.multi_reduction <maximumf>, %116, %cst_47 [1] : vector<16x16xf32> to vector<16xf32>
      %118 = vector.shape_cast %117 : vector<16xf32> to vector<16x1xf32>
      %119 = vector.broadcast %118 : vector<16x1xf32> to vector<16x16xf32>
      %120 = arith.subf %116, %119 : vector<16x16xf32>
      %121 = math.exp %120 : vector<16x16xf32>
      %cst_48 = arith.constant dense<0.000000e+00> : vector<16xf32>
      %122 = vector.multi_reduction <add>, %121, %cst_48 [1] : vector<16x16xf32> to vector<16xf32>
      %123 = vector.shape_cast %122 : vector<16xf32> to vector<16x1xf32>
      %124 = tpu.reciprocal %123 {approx = true} : vector<16x1xf32> -> vector<16x1xf32>
      %125 = vector.broadcast %124 : vector<16x1xf32> to vector<16x16xf32>
      %126 = arith.mulf %121, %125 : vector<16x16xf32>
      %127 = arith.truncf %126 : vector<16x16xf32> to vector<16x16xbf16>
      %128 = vector.extract_strided_slice %45 {offsets = [0, 96], sizes = [16, 32], strides = [1, 1]} : vector<16x128xbf16> to vector<16x32xbf16>
      %cst_49 = arith.constant dense<0.000000e+00> : vector<16x32xf32>
      %129 = tpu.matmul %127, %128, %cst_49 {dimension_numbers = #tpu.dot_dimension_numbers<[1], [0], [0], [1], [0, 0, 1, 1], [], []>} : vector<16x16xbf16>, vector<16x32xbf16>, vector<16x32xf32> -> vector<16x32xf32>
      %130 = tpu.concatenate %75, %93, %111, %129 in 1 : vector<16x32xf32>, vector<16x32xf32>, vector<16x32xf32>, vector<16x32xf32> -> vector<16x128xf32>
      %131 = arith.truncf %130 : vector<16x128xf32> to vector<16x128xbf16>
      %c0_50 = arith.constant 0 : index
      %c0_51 = arith.constant 0 : index
      %c0_52 = arith.constant 0 : index
      %132 = vector.load %arg5[%c0_50, %c0_51, %c0_52] : memref<2x128x128xbf16, #tpu.memory_space<vmem>>, vector<1x128x128xbf16>
      %133 = vector.shape_cast %132 : vector<1x128x128xbf16> to vector<128x128xbf16>
      %cst_53 = arith.constant dense<0.000000e+00> : vector<16x128xf32>
      %134 = tpu.matmul %131, %133, %cst_53 {dimension_numbers = #tpu.dot_dimension_numbers<[1], [0], [0], [1], [0, 0, 1, 1], [], []>} : vector<16x128xbf16>, vector<128x128xbf16>, vector<16x128xf32> -> vector<16x128xf32>
      %135 = arith.addf %22, %134 : vector<16x128xf32>
      %c0_54 = arith.constant 0 : index
      %c0_55 = arith.constant 0 : index
      %c0_56 = arith.constant 0 : index
      %136 = vector.load %arg6[%c0_54, %c0_55, %c0_56] : memref<2x1x128xf32, #tpu.memory_space<vmem>>, vector<1x1x128xf32>
      %137 = vector.shape_cast %136 : vector<1x1x128xf32> to vector<1x128xf32>
      %138 = arith.mulf %135, %135 : vector<16x128xf32>
      %cst_57 = arith.constant dense<0.000000e+00> : vector<16xf32>
      %139 = vector.multi_reduction <add>, %138, %cst_57 [1] : vector<16x128xf32> to vector<16xf32>
      %140 = vector.shape_cast %139 : vector<16xf32> to vector<16x1xf32>
      %cst_58 = arith.constant 1.280000e+02 : f32
      %141 = vector.broadcast %cst_58 : f32 to vector<16x1xf32>
      %142 = arith.divf %140, %141 : vector<16x1xf32>
      %cst_59 = arith.constant 9.99999974E-6 : f32
      %143 = vector.broadcast %cst_59 : f32 to vector<16x1xf32>
      %144 = arith.addf %142, %143 : vector<16x1xf32>
      %145 = math.rsqrt %144 : vector<16x1xf32>
      %146 = vector.broadcast %145 : vector<16x1xf32> to vector<16x128xf32>
      %147 = arith.mulf %135, %146 : vector<16x128xf32>
      %148 = vector.broadcast %137 : vector<1x128xf32> to vector<16x128xf32>
      %149 = arith.mulf %147, %148 : vector<16x128xf32>
      %150 = arith.truncf %149 : vector<16x128xf32> to vector<16x128xbf16>
      %c0_60 = arith.constant 0 : index
      %c0_61 = arith.constant 0 : index
      %c0_62 = arith.constant 0 : index
      %151 = vector.load %arg7[%c0_60, %c0_61, %c0_62] : memref<2x128x512xbf16, #tpu.memory_space<vmem>>, vector<1x128x512xbf16>
      %152 = vector.shape_cast %151 : vector<1x128x512xbf16> to vector<128x512xbf16>
      %cst_63 = arith.constant dense<0.000000e+00> : vector<16x512xf32>
      %153 = tpu.matmul %150, %152, %cst_63 {dimension_numbers = #tpu.dot_dimension_numbers<[1], [0], [0], [1], [0, 0, 1, 1], [], []>} : vector<16x128xbf16>, vector<128x512xbf16>, vector<16x512xf32> -> vector<16x512xf32>
      %154 = vector.extract_strided_slice %153 {offsets = [0, 0], sizes = [16, 256], strides = [1, 1]} : vector<16x512xf32> to vector<16x256xf32>
      %155 = vector.extract_strided_slice %153 {offsets = [0, 256], sizes = [16, 256], strides = [1, 1]} : vector<16x512xf32> to vector<16x256xf32>
      %156 = arith.negf %154 : vector<16x256xf32>
      %157 = math.exp %156 : vector<16x256xf32>
      %cst_64 = arith.constant 1.000000e+00 : f32
      %158 = vector.broadcast %cst_64 : f32 to vector<16x256xf32>
      %159 = arith.addf %158, %157 : vector<16x256xf32>
      %160 = arith.divf %158, %159 : vector<16x256xf32>
      %161 = arith.mulf %154, %160 : vector<16x256xf32>
      %162 = arith.mulf %161, %155 : vector<16x256xf32>
      %163 = arith.truncf %162 : vector<16x256xf32> to vector<16x256xbf16>
      %c0_65 = arith.constant 0 : index
      %c0_66 = arith.constant 0 : index
      %c0_67 = arith.constant 0 : index
      %164 = vector.load %arg8[%c0_65, %c0_66, %c0_67] : memref<2x256x128xbf16, #tpu.memory_space<vmem>>, vector<1x256x128xbf16>
      %165 = vector.shape_cast %164 : vector<1x256x128xbf16> to vector<256x128xbf16>
      %cst_68 = arith.constant dense<0.000000e+00> : vector<16x128xf32>
      %166 = tpu.matmul %163, %165, %cst_68 {dimension_numbers = #tpu.dot_dimension_numbers<[1], [0], [0], [1], [0, 0, 1, 1], [], []>} : vector<16x256xbf16>, vector<256x128xbf16>, vector<16x128xf32> -> vector<16x128xf32>
      %167 = arith.addf %135, %166 : vector<16x128xf32>
      %c1 = arith.constant 1 : index
      %c0_69 = arith.constant 0 : index
      %c0_70 = arith.constant 0 : index
      %168 = vector.load %arg3[%c1, %c0_69, %c0_70] : memref<2x1x128xf32, #tpu.memory_space<vmem>>, vector<1x1x128xf32>
      %169 = vector.shape_cast %168 : vector<1x1x128xf32> to vector<1x128xf32>
      %170 = arith.mulf %167, %167 : vector<16x128xf32>
      %cst_71 = arith.constant dense<0.000000e+00> : vector<16xf32>
      %171 = vector.multi_reduction <add>, %170, %cst_71 [1] : vector<16x128xf32> to vector<16xf32>
      %172 = vector.shape_cast %171 : vector<16xf32> to vector<16x1xf32>
      %cst_72 = arith.constant 1.280000e+02 : f32
      %173 = vector.broadcast %cst_72 : f32 to vector<16x1xf32>
      %174 = arith.divf %172, %173 : vector<16x1xf32>
      %cst_73 = arith.constant 9.99999974E-6 : f32
      %175 = vector.broadcast %cst_73 : f32 to vector<16x1xf32>
      %176 = arith.addf %174, %175 : vector<16x1xf32>
      %177 = math.rsqrt %176 : vector<16x1xf32>
      %178 = vector.broadcast %177 : vector<16x1xf32> to vector<16x128xf32>
      %179 = arith.mulf %167, %178 : vector<16x128xf32>
      %180 = vector.broadcast %169 : vector<1x128xf32> to vector<16x128xf32>
      %181 = arith.mulf %179, %180 : vector<16x128xf32>
      %182 = arith.truncf %181 : vector<16x128xf32> to vector<16x128xbf16>
      %c1_74 = arith.constant 1 : index
      %c0_75 = arith.constant 0 : index
      %c0_76 = arith.constant 0 : index
      %183 = vector.load %arg4[%c1_74, %c0_75, %c0_76] : memref<2x128x384xbf16, #tpu.memory_space<vmem>>, vector<1x128x384xbf16>
      %184 = vector.shape_cast %183 : vector<1x128x384xbf16> to vector<128x384xbf16>
      %cst_77 = arith.constant dense<0.000000e+00> : vector<16x384xf32>
      %185 = tpu.matmul %182, %184, %cst_77 {dimension_numbers = #tpu.dot_dimension_numbers<[1], [0], [0], [1], [0, 0, 1, 1], [], []>} : vector<16x128xbf16>, vector<128x384xbf16>, vector<16x384xf32> -> vector<16x384xf32>
      %186 = vector.extract_strided_slice %185 {offsets = [0, 0], sizes = [16, 128], strides = [1, 1]} : vector<16x384xf32> to vector<16x128xf32>
      %187 = vector.extract_strided_slice %185 {offsets = [0, 128], sizes = [16, 128], strides = [1, 1]} : vector<16x384xf32> to vector<16x128xf32>
      %188 = vector.extract_strided_slice %185 {offsets = [0, 256], sizes = [16, 128], strides = [1, 1]} : vector<16x384xf32> to vector<16x128xf32>
      %189 = arith.truncf %188 : vector<16x128xf32> to vector<16x128xbf16>
      %190 = arith.mulf %186, %6 : vector<16x128xf32>
      %191 = arith.truncf %186 : vector<16x128xf32> to vector<16x128xbf16>
      %cst_78 = arith.constant dense<0.000000e+00> : vector<16x128xf32>
      %192 = tpu.matmul %191, %23, %cst_78 {dimension_numbers = #tpu.dot_dimension_numbers<[1], [0], [0], [1], [0, 0, 1, 1], [], []>} : vector<16x128xbf16>, vector<128x128xbf16>, vector<16x128xf32> -> vector<16x128xf32>
      %193 = arith.mulf %192, %7 : vector<16x128xf32>
      %194 = arith.addf %190, %193 : vector<16x128xf32>
      %195 = arith.mulf %187, %6 : vector<16x128xf32>
      %196 = arith.truncf %187 : vector<16x128xf32> to vector<16x128xbf16>
      %cst_79 = arith.constant dense<0.000000e+00> : vector<16x128xf32>
      %197 = tpu.matmul %196, %23, %cst_79 {dimension_numbers = #tpu.dot_dimension_numbers<[1], [0], [0], [1], [0, 0, 1, 1], [], []>} : vector<16x128xbf16>, vector<128x128xbf16>, vector<16x128xf32> -> vector<16x128xf32>
      %198 = arith.mulf %197, %7 : vector<16x128xf32>
      %199 = arith.addf %195, %198 : vector<16x128xf32>
      %200 = arith.truncf %194 : vector<16x128xf32> to vector<16x128xbf16>
      %201 = arith.truncf %199 : vector<16x128xf32> to vector<16x128xbf16>
      %202 = vector.extract_strided_slice %200 {offsets = [0, 0], sizes = [16, 32], strides = [1, 1]} : vector<16x128xbf16> to vector<16x32xbf16>
      %203 = vector.extract_strided_slice %201 {offsets = [0, 0], sizes = [16, 32], strides = [1, 1]} : vector<16x128xbf16> to vector<16x32xbf16>
      %cst_80 = arith.constant dense<0.000000e+00> : vector<16x16xf32>
      %204 = tpu.matmul %202, %203, %cst_80 {dimension_numbers = #tpu.dot_dimension_numbers<[1], [1], [0], [0], [0, 0, 1, 0], [], []>} : vector<16x32xbf16>, vector<16x32xbf16>, vector<16x16xf32> -> vector<16x16xf32>
      %cst_81 = arith.constant -1.000000e+30 : f32
      %205 = vector.broadcast %cst_81 : f32 to vector<16x16xf32>
      %206 = arith.select %2, %204, %205 : vector<16x16xi1>, vector<16x16xf32>
      %cst_82 = arith.constant dense<0xFF800000> : vector<16xf32>
      %207 = vector.multi_reduction <maximumf>, %206, %cst_82 [1] : vector<16x16xf32> to vector<16xf32>
      %208 = vector.shape_cast %207 : vector<16xf32> to vector<16x1xf32>
      %209 = vector.broadcast %208 : vector<16x1xf32> to vector<16x16xf32>
      %210 = arith.subf %206, %209 : vector<16x16xf32>
      %211 = math.exp %210 : vector<16x16xf32>
      %cst_83 = arith.constant dense<0.000000e+00> : vector<16xf32>
      %212 = vector.multi_reduction <add>, %211, %cst_83 [1] : vector<16x16xf32> to vector<16xf32>
      %213 = vector.shape_cast %212 : vector<16xf32> to vector<16x1xf32>
      %214 = tpu.reciprocal %213 {approx = true} : vector<16x1xf32> -> vector<16x1xf32>
      %215 = vector.broadcast %214 : vector<16x1xf32> to vector<16x16xf32>
      %216 = arith.mulf %211, %215 : vector<16x16xf32>
      %217 = arith.truncf %216 : vector<16x16xf32> to vector<16x16xbf16>
      %218 = vector.extract_strided_slice %189 {offsets = [0, 0], sizes = [16, 32], strides = [1, 1]} : vector<16x128xbf16> to vector<16x32xbf16>
      %cst_84 = arith.constant dense<0.000000e+00> : vector<16x32xf32>
      %219 = tpu.matmul %217, %218, %cst_84 {dimension_numbers = #tpu.dot_dimension_numbers<[1], [0], [0], [1], [0, 0, 1, 1], [], []>} : vector<16x16xbf16>, vector<16x32xbf16>, vector<16x32xf32> -> vector<16x32xf32>
      %220 = vector.extract_strided_slice %200 {offsets = [0, 32], sizes = [16, 32], strides = [1, 1]} : vector<16x128xbf16> to vector<16x32xbf16>
      %221 = vector.extract_strided_slice %201 {offsets = [0, 32], sizes = [16, 32], strides = [1, 1]} : vector<16x128xbf16> to vector<16x32xbf16>
      %cst_85 = arith.constant dense<0.000000e+00> : vector<16x16xf32>
      %222 = tpu.matmul %220, %221, %cst_85 {dimension_numbers = #tpu.dot_dimension_numbers<[1], [1], [0], [0], [0, 0, 1, 0], [], []>} : vector<16x32xbf16>, vector<16x32xbf16>, vector<16x16xf32> -> vector<16x16xf32>
      %cst_86 = arith.constant -1.000000e+30 : f32
      %223 = vector.broadcast %cst_86 : f32 to vector<16x16xf32>
      %224 = arith.select %2, %222, %223 : vector<16x16xi1>, vector<16x16xf32>
      %cst_87 = arith.constant dense<0xFF800000> : vector<16xf32>
      %225 = vector.multi_reduction <maximumf>, %224, %cst_87 [1] : vector<16x16xf32> to vector<16xf32>
      %226 = vector.shape_cast %225 : vector<16xf32> to vector<16x1xf32>
      %227 = vector.broadcast %226 : vector<16x1xf32> to vector<16x16xf32>
      %228 = arith.subf %224, %227 : vector<16x16xf32>
      %229 = math.exp %228 : vector<16x16xf32>
      %cst_88 = arith.constant dense<0.000000e+00> : vector<16xf32>
      %230 = vector.multi_reduction <add>, %229, %cst_88 [1] : vector<16x16xf32> to vector<16xf32>
      %231 = vector.shape_cast %230 : vector<16xf32> to vector<16x1xf32>
      %232 = tpu.reciprocal %231 {approx = true} : vector<16x1xf32> -> vector<16x1xf32>
      %233 = vector.broadcast %232 : vector<16x1xf32> to vector<16x16xf32>
      %234 = arith.mulf %229, %233 : vector<16x16xf32>
      %235 = arith.truncf %234 : vector<16x16xf32> to vector<16x16xbf16>
      %236 = vector.extract_strided_slice %189 {offsets = [0, 32], sizes = [16, 32], strides = [1, 1]} : vector<16x128xbf16> to vector<16x32xbf16>
      %cst_89 = arith.constant dense<0.000000e+00> : vector<16x32xf32>
      %237 = tpu.matmul %235, %236, %cst_89 {dimension_numbers = #tpu.dot_dimension_numbers<[1], [0], [0], [1], [0, 0, 1, 1], [], []>} : vector<16x16xbf16>, vector<16x32xbf16>, vector<16x32xf32> -> vector<16x32xf32>
      %238 = vector.extract_strided_slice %200 {offsets = [0, 64], sizes = [16, 32], strides = [1, 1]} : vector<16x128xbf16> to vector<16x32xbf16>
      %239 = vector.extract_strided_slice %201 {offsets = [0, 64], sizes = [16, 32], strides = [1, 1]} : vector<16x128xbf16> to vector<16x32xbf16>
      %cst_90 = arith.constant dense<0.000000e+00> : vector<16x16xf32>
      %240 = tpu.matmul %238, %239, %cst_90 {dimension_numbers = #tpu.dot_dimension_numbers<[1], [1], [0], [0], [0, 0, 1, 0], [], []>} : vector<16x32xbf16>, vector<16x32xbf16>, vector<16x16xf32> -> vector<16x16xf32>
      %cst_91 = arith.constant -1.000000e+30 : f32
      %241 = vector.broadcast %cst_91 : f32 to vector<16x16xf32>
      %242 = arith.select %2, %240, %241 : vector<16x16xi1>, vector<16x16xf32>
      %cst_92 = arith.constant dense<0xFF800000> : vector<16xf32>
      %243 = vector.multi_reduction <maximumf>, %242, %cst_92 [1] : vector<16x16xf32> to vector<16xf32>
      %244 = vector.shape_cast %243 : vector<16xf32> to vector<16x1xf32>
      %245 = vector.broadcast %244 : vector<16x1xf32> to vector<16x16xf32>
      %246 = arith.subf %242, %245 : vector<16x16xf32>
      %247 = math.exp %246 : vector<16x16xf32>
      %cst_93 = arith.constant dense<0.000000e+00> : vector<16xf32>
      %248 = vector.multi_reduction <add>, %247, %cst_93 [1] : vector<16x16xf32> to vector<16xf32>
      %249 = vector.shape_cast %248 : vector<16xf32> to vector<16x1xf32>
      %250 = tpu.reciprocal %249 {approx = true} : vector<16x1xf32> -> vector<16x1xf32>
      %251 = vector.broadcast %250 : vector<16x1xf32> to vector<16x16xf32>
      %252 = arith.mulf %247, %251 : vector<16x16xf32>
      %253 = arith.truncf %252 : vector<16x16xf32> to vector<16x16xbf16>
      %254 = vector.extract_strided_slice %189 {offsets = [0, 64], sizes = [16, 32], strides = [1, 1]} : vector<16x128xbf16> to vector<16x32xbf16>
      %cst_94 = arith.constant dense<0.000000e+00> : vector<16x32xf32>
      %255 = tpu.matmul %253, %254, %cst_94 {dimension_numbers = #tpu.dot_dimension_numbers<[1], [0], [0], [1], [0, 0, 1, 1], [], []>} : vector<16x16xbf16>, vector<16x32xbf16>, vector<16x32xf32> -> vector<16x32xf32>
      %256 = vector.extract_strided_slice %200 {offsets = [0, 96], sizes = [16, 32], strides = [1, 1]} : vector<16x128xbf16> to vector<16x32xbf16>
      %257 = vector.extract_strided_slice %201 {offsets = [0, 96], sizes = [16, 32], strides = [1, 1]} : vector<16x128xbf16> to vector<16x32xbf16>
      %cst_95 = arith.constant dense<0.000000e+00> : vector<16x16xf32>
      %258 = tpu.matmul %256, %257, %cst_95 {dimension_numbers = #tpu.dot_dimension_numbers<[1], [1], [0], [0], [0, 0, 1, 0], [], []>} : vector<16x32xbf16>, vector<16x32xbf16>, vector<16x16xf32> -> vector<16x16xf32>
      %cst_96 = arith.constant -1.000000e+30 : f32
      %259 = vector.broadcast %cst_96 : f32 to vector<16x16xf32>
      %260 = arith.select %2, %258, %259 : vector<16x16xi1>, vector<16x16xf32>
      %cst_97 = arith.constant dense<0xFF800000> : vector<16xf32>
      %261 = vector.multi_reduction <maximumf>, %260, %cst_97 [1] : vector<16x16xf32> to vector<16xf32>
      %262 = vector.shape_cast %261 : vector<16xf32> to vector<16x1xf32>
      %263 = vector.broadcast %262 : vector<16x1xf32> to vector<16x16xf32>
      %264 = arith.subf %260, %263 : vector<16x16xf32>
      %265 = math.exp %264 : vector<16x16xf32>
      %cst_98 = arith.constant dense<0.000000e+00> : vector<16xf32>
      %266 = vector.multi_reduction <add>, %265, %cst_98 [1] : vector<16x16xf32> to vector<16xf32>
      %267 = vector.shape_cast %266 : vector<16xf32> to vector<16x1xf32>
      %268 = tpu.reciprocal %267 {approx = true} : vector<16x1xf32> -> vector<16x1xf32>
      %269 = vector.broadcast %268 : vector<16x1xf32> to vector<16x16xf32>
      %270 = arith.mulf %265, %269 : vector<16x16xf32>
      %271 = arith.truncf %270 : vector<16x16xf32> to vector<16x16xbf16>
      %272 = vector.extract_strided_slice %189 {offsets = [0, 96], sizes = [16, 32], strides = [1, 1]} : vector<16x128xbf16> to vector<16x32xbf16>
      %cst_99 = arith.constant dense<0.000000e+00> : vector<16x32xf32>
      %273 = tpu.matmul %271, %272, %cst_99 {dimension_numbers = #tpu.dot_dimension_numbers<[1], [0], [0], [1], [0, 0, 1, 1], [], []>} : vector<16x16xbf16>, vector<16x32xbf16>, vector<16x32xf32> -> vector<16x32xf32>
      %274 = tpu.concatenate %219, %237, %255, %273 in 1 : vector<16x32xf32>, vector<16x32xf32>, vector<16x32xf32>, vector<16x32xf32> -> vector<16x128xf32>
      %275 = arith.truncf %274 : vector<16x128xf32> to vector<16x128xbf16>
      %c1_100 = arith.constant 1 : index
      %c0_101 = arith.constant 0 : index
      %c0_102 = arith.constant 0 : index
      %276 = vector.load %arg5[%c1_100, %c0_101, %c0_102] : memref<2x128x128xbf16, #tpu.memory_space<vmem>>, vector<1x128x128xbf16>
      %277 = vector.shape_cast %276 : vector<1x128x128xbf16> to vector<128x128xbf16>
      %cst_103 = arith.constant dense<0.000000e+00> : vector<16x128xf32>
      %278 = tpu.matmul %275, %277, %cst_103 {dimension_numbers = #tpu.dot_dimension_numbers<[1], [0], [0], [1], [0, 0, 1, 1], [], []>} : vector<16x128xbf16>, vector<128x128xbf16>, vector<16x128xf32> -> vector<16x128xf32>
      %279 = arith.addf %167, %278 : vector<16x128xf32>
      %c1_104 = arith.constant 1 : index
      %c0_105 = arith.constant 0 : index
      %c0_106 = arith.constant 0 : index
      %280 = vector.load %arg6[%c1_104, %c0_105, %c0_106] : memref<2x1x128xf32, #tpu.memory_space<vmem>>, vector<1x1x128xf32>
      %281 = vector.shape_cast %280 : vector<1x1x128xf32> to vector<1x128xf32>
      %282 = arith.mulf %279, %279 : vector<16x128xf32>
      %cst_107 = arith.constant dense<0.000000e+00> : vector<16xf32>
      %283 = vector.multi_reduction <add>, %282, %cst_107 [1] : vector<16x128xf32> to vector<16xf32>
      %284 = vector.shape_cast %283 : vector<16xf32> to vector<16x1xf32>
      %cst_108 = arith.constant 1.280000e+02 : f32
      %285 = vector.broadcast %cst_108 : f32 to vector<16x1xf32>
      %286 = arith.divf %284, %285 : vector<16x1xf32>
      %cst_109 = arith.constant 9.99999974E-6 : f32
      %287 = vector.broadcast %cst_109 : f32 to vector<16x1xf32>
      %288 = arith.addf %286, %287 : vector<16x1xf32>
      %289 = math.rsqrt %288 : vector<16x1xf32>
      %290 = vector.broadcast %289 : vector<16x1xf32> to vector<16x128xf32>
      %291 = arith.mulf %279, %290 : vector<16x128xf32>
      %292 = vector.broadcast %281 : vector<1x128xf32> to vector<16x128xf32>
      %293 = arith.mulf %291, %292 : vector<16x128xf32>
      %294 = arith.truncf %293 : vector<16x128xf32> to vector<16x128xbf16>
      %c1_110 = arith.constant 1 : index
      %c0_111 = arith.constant 0 : index
      %c0_112 = arith.constant 0 : index
      %295 = vector.load %arg7[%c1_110, %c0_111, %c0_112] : memref<2x128x512xbf16, #tpu.memory_space<vmem>>, vector<1x128x512xbf16>
      %296 = vector.shape_cast %295 : vector<1x128x512xbf16> to vector<128x512xbf16>
      %cst_113 = arith.constant dense<0.000000e+00> : vector<16x512xf32>
      %297 = tpu.matmul %294, %296, %cst_113 {dimension_numbers = #tpu.dot_dimension_numbers<[1], [0], [0], [1], [0, 0, 1, 1], [], []>} : vector<16x128xbf16>, vector<128x512xbf16>, vector<16x512xf32> -> vector<16x512xf32>
      %298 = vector.extract_strided_slice %297 {offsets = [0, 0], sizes = [16, 256], strides = [1, 1]} : vector<16x512xf32> to vector<16x256xf32>
      %299 = vector.extract_strided_slice %297 {offsets = [0, 256], sizes = [16, 256], strides = [1, 1]} : vector<16x512xf32> to vector<16x256xf32>
      %300 = arith.negf %298 : vector<16x256xf32>
      %301 = math.exp %300 : vector<16x256xf32>
      %cst_114 = arith.constant 1.000000e+00 : f32
      %302 = vector.broadcast %cst_114 : f32 to vector<16x256xf32>
      %303 = arith.addf %302, %301 : vector<16x256xf32>
      %304 = arith.divf %302, %303 : vector<16x256xf32>
      %305 = arith.mulf %298, %304 : vector<16x256xf32>
      %306 = arith.mulf %305, %299 : vector<16x256xf32>
      %307 = arith.truncf %306 : vector<16x256xf32> to vector<16x256xbf16>
      %c1_115 = arith.constant 1 : index
      %c0_116 = arith.constant 0 : index
      %c0_117 = arith.constant 0 : index
      %308 = vector.load %arg8[%c1_115, %c0_116, %c0_117] : memref<2x256x128xbf16, #tpu.memory_space<vmem>>, vector<1x256x128xbf16>
      %309 = vector.shape_cast %308 : vector<1x256x128xbf16> to vector<256x128xbf16>
      %cst_118 = arith.constant dense<0.000000e+00> : vector<16x128xf32>
      %310 = tpu.matmul %307, %309, %cst_118 {dimension_numbers = #tpu.dot_dimension_numbers<[1], [0], [0], [1], [0, 0, 1, 1], [], []>} : vector<16x256xbf16>, vector<256x128xbf16>, vector<16x128xf32> -> vector<16x128xf32>
      %311 = arith.addf %279, %310 : vector<16x128xf32>
      %c1_i32_119 = arith.constant 1 : i32
      %312 = vector.broadcast %c1_i32_119 : i32 to vector<1x1xi32>
      %313 = arith.subi %arg18, %312 : vector<1x1xi32>
      %314 = vector.broadcast %313 : vector<1x1xi32> to vector<16x1xi32>
      %315 = arith.cmpi eq, %3, %314 : vector<16x1xi32>
      %cst_120 = arith.constant 1.000000e+00 : f32
      %cst_121 = arith.constant 0.000000e+00 : f32
      %316 = vector.broadcast %cst_120 : f32 to vector<16x1xf32>
      %317 = vector.broadcast %cst_121 : f32 to vector<16x1xf32>
      %318 = arith.select %315, %316, %317 : vector<16x1xi1>, vector<16x1xf32>
      %319 = vector.broadcast %318 : vector<16x1xf32> to vector<16x128xf32>
      %320 = arith.mulf %311, %319 : vector<16x128xf32>
      %cst_122 = arith.constant dense<0.000000e+00> : vector<128xf32>
      %321 = vector.multi_reduction <add>, %320, %cst_122 [0] : vector<16x128xf32> to vector<128xf32>
      %322 = vector.shape_cast %321 : vector<128xf32> to vector<1x128xf32>
      %c0_123 = arith.constant 0 : index
      %c0_124 = arith.constant 0 : index
      %323 = vector.load %arg9[%c0_123, %c0_124] : memref<1x128xf32, #tpu.memory_space<vmem>>, vector<1x128xf32>
      %324 = arith.mulf %322, %322 : vector<1x128xf32>
      %cst_125 = arith.constant dense<0.000000e+00> : vector<1xf32>
      %325 = vector.multi_reduction <add>, %324, %cst_125 [1] : vector<1x128xf32> to vector<1xf32>
      %326 = vector.shape_cast %325 : vector<1xf32> to vector<1x1xf32>
      %cst_126 = arith.constant 1.280000e+02 : f32
      %327 = vector.broadcast %cst_126 : f32 to vector<1x1xf32>
      %328 = arith.divf %326, %327 : vector<1x1xf32>
      %cst_127 = arith.constant 9.99999974E-6 : f32
      %329 = vector.broadcast %cst_127 : f32 to vector<1x1xf32>
      %330 = arith.addf %328, %329 : vector<1x1xf32>
      %331 = math.rsqrt %330 : vector<1x1xf32>
      %332 = vector.broadcast %331 : vector<1x1xf32> to vector<1x128xf32>
      %333 = arith.mulf %322, %332 : vector<1x128xf32>
      %334 = arith.mulf %333, %323 : vector<1x128xf32>
      %335 = arith.truncf %334 : vector<1x128xf32> to vector<1x128xbf16>
      %c0_128 = arith.constant 0 : index
      %c0_129 = arith.constant 0 : index
      %336 = vector.load %arg10[%c0_128, %c0_129] : memref<128x256xbf16, #tpu.memory_space<vmem>>, vector<128x256xbf16>
      %cst_130 = arith.constant dense<0.000000e+00> : vector<1x256xf32>
      %337 = tpu.matmul %335, %336, %cst_130 {dimension_numbers = #tpu.dot_dimension_numbers<[1], [0], [0], [1], [0, 0, 1, 1], [], []>} : vector<1x128xbf16>, vector<128x256xbf16>, vector<1x256xf32> -> vector<1x256xf32>
      %cst_131 = arith.constant dense<0xFF800000> : vector<1xf32>
      %338 = vector.multi_reduction <maximumf>, %337, %cst_131 [1] : vector<1x256xf32> to vector<1xf32>
      %339 = vector.shape_cast %338 : vector<1xf32> to vector<1x1xf32>
      %340 = vector.broadcast %339 : vector<1x1xf32> to vector<1x256xf32>
      %341 = arith.cmpf oge, %337, %340 : vector<1x256xf32>
      %c256_i32 = arith.constant 256 : i32
      %342 = vector.broadcast %c256_i32 : i32 to vector<1x256xi32>
      %343 = arith.select %341, %4, %342 : vector<1x256xi1>, vector<1x256xi32>
      %cst_132 = arith.constant dense<2147483647> : vector<1xi32>
      %344 = vector.multi_reduction <minsi>, %343, %cst_132 [1] : vector<1x256xi32> to vector<1xi32>
      %345 = vector.shape_cast %344 : vector<1xi32> to vector<1x1xi32>
      %c0_i32_133 = arith.constant 0 : i32
      %346 = vector.broadcast %c0_i32_133 : i32 to vector<1x1xi32>
      %347 = arith.cmpi eq, %345, %346 : vector<1x1xi32>
      %c0_i32_134 = arith.constant 0 : i32
      %348 = vector.broadcast %c0_i32_134 : i32 to vector<1x1xi32>
      %349 = arith.cmpi eq, %arg19, %348 : vector<1x1xi32>
      %cst_135 = arith.constant dense<true> : vector<1x1xi1>
      %350 = arith.xori %347, %cst_135 : vector<1x1xi1>
      %351 = arith.andi %349, %350 : vector<1x1xi1>
      %c16_i32 = arith.constant 16 : i32
      %352 = vector.broadcast %c16_i32 : i32 to vector<1x1xi32>
      %353 = arith.cmpi slt, %arg18, %352 : vector<1x1xi32>
      %354 = arith.andi %351, %353 : vector<1x1xi1>
      %355 = vector.broadcast %arg18 : vector<1x1xi32> to vector<16x1xi32>
      %356 = arith.cmpi eq, %3, %355 : vector<16x1xi32>
      %357 = vector.broadcast %354 : vector<1x1xi1> to vector<16x1xi1>
      %358 = arith.andi %356, %357 : vector<16x1xi1>
      %359 = vector.shape_cast %345 : vector<1x1xi32> to vector<1x1xi32>
      %360 = vector.broadcast %359 : vector<1x1xi32> to vector<16x1xi32>
      %361 = arith.select %358, %360, %arg17 : vector<16x1xi1>, vector<16x1xi32>
      %c1_i32_136 = arith.constant 1 : i32
      %362 = vector.broadcast %c1_i32_136 : i32 to vector<1x1xi32>
      %363 = arith.addi %arg18, %362 : vector<1x1xi32>
      %364 = arith.select %354, %363, %arg18 : vector<1x1xi1>, vector<1x1xi32>
      %c16_i32_137 = arith.constant 16 : i32
      %365 = vector.broadcast %c16_i32_137 : i32 to vector<1x1xi32>
      %366 = arith.cmpi sge, %364, %365 : vector<1x1xi32>
      %367 = arith.ori %347, %366 : vector<1x1xi1>
      %c1_i32_138 = arith.constant 1 : i32
      %368 = vector.broadcast %c1_i32_138 : i32 to vector<1x1xi32>
      %369 = arith.select %367, %368, %arg19 : vector<1x1xi1>, vector<1x1xi32>
      scf.yield %361, %364, %369 : vector<16x1xi32>, vector<1x1xi32>, vector<1x1xi32>
    }
    %c0_8 = arith.constant 0 : index
    %c0_9 = arith.constant 0 : index
    %13 = vector.load %arg14[%c0_8, %c0_9] : memref<16x1xi32, #tpu.memory_space<vmem>>, vector<16x1xi32>
    tpu.vector_store %arg14[%c0_8, %c0_9], %12#0 {strides = array<i32>} : memref<16x1xi32, #tpu.memory_space<vmem>>, vector<16x1xi32>,
    %c0_10 = arith.constant 0 : index
    %c0_11 = arith.constant 0 : index
    %14 = vector.load %arg15[%c0_10, %c0_11] : memref<1x1xi32, #tpu.memory_space<vmem>>, vector<1x1xi32>
    tpu.vector_store %arg15[%c0_10, %c0_11], %12#1 {strides = array<i32>} : memref<1x1xi32, #tpu.memory_space<vmem>>, vector<1x1xi32>,
    return
  }
}

</mosaic_0001>

<llo_original>
// kernel: generate.1
$region0: #{generate.1}
  #allocation0 [shape = 'u32[]', space=smem, size = 0x4, offset = 0x4, fixed_abs, tag = 'smem constant byte address 0x4 - core index']
  #allocation1 [shape = 'u32[72,128]{1,0:T(1,128)}', space=vmem, size = 0x9000, scoped, tag = 'internal scratch']
  #allocation2 [shape = 's32[1,1]{1,0:T(1,128)S(1)}', space=vmem, size = 0x200, scoped, tag = 'scoped memory for generate.1']
  %s0 = inlined_call_operand.vmem [shape: s32[16,1], index: 0, kind: input, shape index: {}]
  %s1 = inlined_call_operand.<no memory space> [shape: s32[1,1], index: 1, kind: input, shape index: {}]
  %s2 = inlined_call_operand.hbm [shape: bf16[256,128], index: 2, kind: input, shape index: {}]
  %s3 = inlined_call_operand.vmem [shape: f32[2,1,128], index: 3, kind: input, shape index: {}]
  %s4 = inlined_call_operand.hbm [shape: bf16[2,128,384], index: 4, kind: input, shape index: {}]
  %s5 = inlined_call_operand.hbm [shape: bf16[2,128,128], index: 5, kind: input, shape index: {}]
  %s6 = inlined_call_operand.vmem [shape: f32[2,1,128], index: 6, kind: input, shape index: {}]
  %s7 = inlined_call_operand.hbm [shape: bf16[2,128,512], index: 7, kind: input, shape index: {}]
  %s8 = inlined_call_operand.hbm [shape: bf16[2,256,128], index: 8, kind: input, shape index: {}]
  %s9 = inlined_call_operand.hbm [shape: f32[1,128], index: 9, kind: input, shape index: {}]
  %s10 = inlined_call_operand.hbm [shape: bf16[128,256], index: 10, kind: input, shape index: {}]
  %s11 = inlined_call_operand.hbm [shape: f32[16,128], index: 11, kind: input, shape index: {}]
  %s12 = inlined_call_operand.vmem [shape: f32[16,128], index: 12, kind: input, shape index: {}]
  %s13 = inlined_call_operand.hbm [shape: bf16[128,128], index: 13, kind: input, shape index: {}]
  %s14 = inlined_call_operand.vmem [shape: s32[16,1], index: 14, kind: output, shape index: {0}]
  %s15 = inlined_call_operand.hbm [shape: s32[1,1], index: 15, kind: output, shape index: {1}]
  %16 = xla_tuple %s14, %s15
  %s17 = sld [smem:[#allocation0]]
  $region117: #{generate.1} parent=0
    _
  %s19 = ssub.s32 1, %s17
  %s20 = scalar_select 0, %s19, %s17
  %v21 = vstv %s1
  %22 = vst [vmem:[#allocation2] sm:$0x1] %v21
  $region1: #{generate.1} parent=0
    #allocation3 [shape = 'u8[65536]{0}', space=vmem, size = 0x10000, scoped, tag = 'input window, operand 2, single buffered']
    #allocation4 [shape = 's32[1]{0}', space=sflag, size = 0x4, scoped, tag = 'scoped memory for generate.1']
    #allocation5 [shape = 's32[1]{0}', space=sflag, size = 0x4, scoped, tag = 'scoped memory for generate.1']
    #allocation6 [shape = 'u8[196608]{0}', space=vmem, size = 0x30000, scoped, tag = 'input window, operand 4, single buffered']
    #allocation7 [shape = 's32[1]{0}', space=sflag, size = 0x4, scoped, tag = 'scoped memory for generate.1']
    #allocation8 [shape = 'u8[65536]{0}', space=vmem, size = 0x10000, scoped, tag = 'input window, operand 5, single buffered']
    #allocation9 [shape = 'u8[262144]{0}', space=vmem, size = 0x40000, scoped, tag = 'input window, operand 7, single buffered']
    #allocation10 [shape = 's32[1]{0}', space=sflag, size = 0x4, scoped, tag = 'scoped memory for generate.1']
    #allocation11 [shape = 'u8[131072]{0}', space=vmem, size = 0x20000, scoped, tag = 'input window, operand 8, single buffered']
    #allocation12 [shape = 'u8[512]{0}', space=vmem, size = 0x400, scoped, tag = 'input window, operand 9, single buffered']
    #allocation13 [shape = 's32[1]{0}', space=sflag, size = 0x4, scoped, tag = 'scoped memory for generate.1']
    #allocation14 [shape = 'u8[65536]{0}', space=vmem, size = 0x10000, scoped, tag = 'input window, operand 10, single buffered']
    #allocation15 [shape = 'u8[8192]{0}', space=vmem, size = 0x2000, scoped, tag = 'input window, operand 11, single buffered']
    #allocation16 [shape = 's32[1]{0}', space=sflag, size = 0x4, scoped, tag = 'scoped memory for generate.1']
    #allocation17 [shape = 'u8[32768]{0}', space=vmem, size = 0x8000, scoped, tag = 'input window, operand 13, single buffered']
    #allocation18 [shape = 'u8[512]{0}', space=vmem, size = 0x400, scoped, tag = 'output window, operand 1, single buffered']
    %23 = vsyncpa [#allocation4], 0
    %24 = vsyncpa [#allocation7], 0
    %25 = vsyncpa [#allocation10], 0
    %26 = vsyncpa [#allocation13], 0
    %27 = vsyncpa [#allocation16], 0
    %28 = vsyncpa [#allocation5], 0
    // Predicated region
    $region2: #{generate.1} parent=1 // pred_check
      _
    $region3: #{generate.1} parent=1 // pred_check_branch
      %30 = sbr.rel (0) target = $region5
    $region4: #{generate.1} parent=1 // pred_region
      _
    $region5: #{generate.1} parent=1 // pred_fallthru
      _
    // Predicated region
    $region6: #{generate.1} parent=1 // pred_check
      _
    $region7: #{generate.1} parent=1 // pred_check_branch
      %32 = sbr.rel (0) target = $region9
    $region8: #{generate.1} parent=1 // pred_region
      _
    $region9: #{generate.1} parent=1 // pred_fallthru
      _
    // Predicated region
    $region10: #{generate.1} parent=1 // pred_check
      _
    $region11: #{generate.1} parent=1 // pred_check_branch
      %34 = sbr.rel (0) target = $region13
    $region12: #{generate.1} parent=1 // pred_region
      %36 = vsyncadd [#allocation4], 0
      %s37 = sshll.u32 %s2, 4
      %s38 = int_to_ptr.hbm [resolvable:$true] %s37
      %s39 = sshll.u32 [#allocation3], 4
      %s40 = int_to_ptr.vmem [resolvable:$true] %s39
      %45 = dma.hbm_to_vmem [thread:$0]  %s38, 2048, %s40, [#allocation4], 64, 64, 4
    $region13: #{generate.1} parent=1 // pred_fallthru
      _
    // Predicated region
    $region14: #{generate.1} parent=1 // pred_check
      _
    $region15: #{generate.1} parent=1 // pred_check_branch
      %47 = sbr.rel (0) target = $region17
    $region16: #{generate.1} parent=1 // pred_region
      _
    $region17: #{generate.1} parent=1 // pred_fallthru
      _
    // Predicated region
    $region18: #{generate.1} parent=1 // pred_check
      _
    $region19: #{generate.1} parent=1 // pred_check_branch
      %49 = sbr.rel (0) target = $region21
    $region20: #{generate.1} parent=1 // pred_region
      %51 = vsyncadd [#allocation7], 0
      %s52 = sshll.u32 %s4, 4
      %s53 = int_to_ptr.hbm [resolvable:$true] %s52
      %s54 = sshll.u32 [#allocation6], 4
      %s55 = int_to_ptr.vmem [resolvable:$true] %s54
      %60 = dma.hbm_to_vmem [thread:$0]  %s53, 6144, %s55, [#allocation7], 192, 192, 12
    $region21: #{generate.1} parent=1 // pred_fallthru
      _
    // Predicated region
    $region22: #{generate.1} parent=1 // pred_check
      _
    $region23: #{generate.1} parent=1 // pred_check_branch
      %62 = sbr.rel (0) target = $region25
    $region24: #{generate.1} parent=1 // pred_region
      %64 = vsyncadd [#allocation7], 0
      %s65 = sshll.u32 %s5, 4
      %s66 = int_to_ptr.hbm [resolvable:$true] %s65
      %s67 = sshll.u32 [#allocation8], 4
      %s68 = int_to_ptr.vmem [resolvable:$true] %s67
      %73 = dma.hbm_to_vmem [thread:$0]  %s66, 2048, %s68, [#allocation7], 64, 64, 4
    $region25: #{generate.1} parent=1 // pred_fallthru
      _
    // Predicated region
    $region26: #{generate.1} parent=1 // pred_check
      _
    $region27: #{generate.1} parent=1 // pred_check_branch
      %75 = sbr.rel (0) target = $region29
    $region28: #{generate.1} parent=1 // pred_region
      _
    $region29: #{generate.1} parent=1 // pred_fallthru
      _
    // Predicated region
    $region30: #{generate.1} parent=1 // pred_check
      _
    $region31: #{generate.1} parent=1 // pred_check_branch
      %77 = sbr.rel (0) target = $region33
    $region32: #{generate.1} parent=1 // pred_region
      %79 = vsyncadd [#allocation10], 0
      %s80 = sshll.u32 %s7, 4
      %s81 = int_to_ptr.hbm [resolvable:$true] %s80
      %s82 = sshll.u32 [#allocation9], 4
      %s83 = int_to_ptr.vmem [resolvable:$true] %s82
      %88 = dma.hbm_to_vmem [thread:$0]  %s81, 8192, %s83, [#allocation10], 256, 256, 16
    $region33: #{generate.1} parent=1 // pred_fallthru
      _
    // Predicated region
    $region34: #{generate.1} parent=1 // pred_check
      _
    $region35: #{generate.1} parent=1 // pred_check_branch
      %90 = sbr.rel (0) target = $region37
    $region36: #{generate.1} parent=1 // pred_region
      %92 = vsyncadd [#allocation10], 0
      %s93 = sshll.u32 %s8, 4
      %s94 = int_to_ptr.hbm [resolvable:$true] %s93
      %s95 = sshll.u32 [#allocation11], 4
      %s96 = int_to_ptr.vmem [resolvable:$true] %s95
      %101 = dma.hbm_to_vmem [thread:$0]  %s94, 4096, %s96, [#allocation10], 64, 64, 4
    $region37: #{generate.1} parent=1 // pred_fallthru
      _
    // Predicated region
    $region38: #{generate.1} parent=1 // pred_check
      _
    $region39: #{generate.1} parent=1 // pred_check_branch
      %103 = sbr.rel (0) target = $region41
    $region40: #{generate.1} parent=1 // pred_region
      %105 = vsyncadd [#allocation13], 0
      %s107 = sshll.u32 %s9, 4
      %s108 = int_to_ptr.hbm [resolvable:$true] %s107
      %s109 = sshll.u32 [#allocation12], 4
      %s110 = int_to_ptr.vmem [resolvable:$true] %s109
      %112 = dma.hbm_to_vmem [thread:$0]  %s108, 16, %s110, [#allocation13]
    $region41: #{generate.1} parent=1 // pred_fallthru
      _
    // Predicated region
    $region42: #{generate.1} parent=1 // pred_check
      _
    $region43: #{generate.1} parent=1 // pred_check_branch
      %114 = sbr.rel (0) target = $region45
    $region44: #{generate.1} parent=1 // pred_region
      %116 = vsyncadd [#allocation13], 0
      %s117 = sshll.u32 %s10, 4
      %s118 = int_to_ptr.hbm [resolvable:$true] %s117
      %s119 = sshll.u32 [#allocation14], 4
      %s120 = int_to_ptr.vmem [resolvable:$true] %s119
      %125 = dma.hbm_to_vmem [thread:$0]  %s118, 2048, %s120, [#allocation13], 128, 128, 8
    $region45: #{generate.1} parent=1 // pred_fallthru
      _
    // Predicated region
    $region46: #{generate.1} parent=1 // pred_check
      _
    $region47: #{generate.1} parent=1 // pred_check_branch
      %127 = sbr.rel (0) target = $region49
    $region48: #{generate.1} parent=1 // pred_region
      %129 = vsyncadd [#allocation16], 0
      %s130 = sshll.u32 %s11, 4
      %s131 = int_to_ptr.hbm [resolvable:$true] %s130
      %s132 = sshll.u32 [#allocation15], 4
      %s133 = int_to_ptr.vmem [resolvable:$true] %s132
      %138 = dma.hbm_to_vmem [thread:$0]  %s131, 256, %s133, [#allocation16], 128, 128, 8
    $region49: #{generate.1} parent=1 // pred_fallthru
      _
    // Predicated region
    $region50: #{generate.1} parent=1 // pred_check
      _
    $region51: #{generate.1} parent=1 // pred_check_branch
      %140 = sbr.rel (0) target = $region53
    $region52: #{generate.1} parent=1 // pred_region
      _
    $region53: #{generate.1} parent=1 // pred_fallthru
      _
    // Predicated region
    $region54: #{generate.1} parent=1 // pred_check
      _
    $region55: #{generate.1} parent=1 // pred_check_branch
      %142 = sbr.rel (0) target = $region57
    $region56: #{generate.1} parent=1 // pred_region
      %144 = vsyncadd [#allocation16], 0
      %s145 = sshll.u32 %s13, 4
      %s146 = int_to_ptr.hbm [resolvable:$true] %s145
      %s147 = sshll.u32 [#allocation17], 4
      %s148 = int_to_ptr.vmem [resolvable:$true] %s147
      %153 = dma.hbm_to_vmem [thread:$0]  %s146, 1024, %s148, [#allocation16], 64, 64, 4
    $region57: #{generate.1} parent=1 // pred_fallthru
      _
    // Predicated region
    $region58: #{generate.1} parent=1 // pred_check
      _
    $region59: #{generate.1} parent=1 // pred_check_branch
      %155 = sbr.rel (0) target = $region61
    $region60: #{generate.1} parent=1 // pred_region
      %157 = dma.done [#allocation4], 2048
    $region61: #{generate.1} parent=1 // pred_fallthru
      _
    // Predicated region
    $region62: #{generate.1} parent=1 // pred_check
      _
    $region63: #{generate.1} parent=1 // pred_check_branch
      %159 = sbr.rel (0) target = $region65
    $region64: #{generate.1} parent=1 // pred_region
      %161 = dma.done [#allocation7], 6144
    $region65: #{generate.1} parent=1 // pred_fallthru
      _
    // Predicated region
    $region66: #{generate.1} parent=1 // pred_check
      _
    $region67: #{generate.1} parent=1 // pred_check_branch
      %163 = sbr.rel (0) target = $region69
    $region68: #{generate.1} parent=1 // pred_region
      %165 = dma.done [#allocation7], 2048
    $region69: #{generate.1} parent=1 // pred_fallthru
      _
    // Predicated region
    $region70: #{generate.1} parent=1 // pred_check
      _
    $region71: #{generate.1} parent=1 // pred_check_branch
      %167 = sbr.rel (0) target = $region73
    $region72: #{generate.1} parent=1 // pred_region
      %169 = dma.done [#allocation10], 8192
    $region73: #{generate.1} parent=1 // pred_fallthru
      _
    // Predicated region
    $region74: #{generate.1} parent=1 // pred_check
      _
    $region75: #{generate.1} parent=1 // pred_check_branch
      %171 = sbr.rel (0) target = $region77
    $region76: #{generate.1} parent=1 // pred_region
      %173 = dma.done [#allocation10], 4096
    $region77: #{generate.1} parent=1 // pred_fallthru
      _
    // Predicated region
    $region78: #{generate.1} parent=1 // pred_check
      _
    $region79: #{generate.1} parent=1 // pred_check_branch
      %175 = sbr.rel (0) target = $region81
    $region80: #{generate.1} parent=1 // pred_region
      %177 = dma.done [#allocation13], 16
    $region81: #{generate.1} parent=1 // pred_fallthru
      _
    // Predicated region
    $region82: #{generate.1} parent=1 // pred_check
      _
    $region83: #{generate.1} parent=1 // pred_check_branch
      %179 = sbr.rel (0) target = $region85
    $region84: #{generate.1} parent=1 // pred_region
      %181 = dma.done [#allocation13], 2048
    $region85: #{generate.1} parent=1 // pred_fallthru
      _
    // Predicated region
    $region86: #{generate.1} parent=1 // pred_check
      _
    $region87: #{generate.1} parent=1 // pred_check_branch
      %183 = sbr.rel (0) target = $region89
    $region88: #{generate.1} parent=1 // pred_region
      %185 = dma.done [#allocation16], 256
    $region89: #{generate.1} parent=1 // pred_fallthru
      _
    // Predicated region
    $region90: #{generate.1} parent=1 // pred_check
      _
    $region91: #{generate.1} parent=1 // pred_check_branch
      %187 = sbr.rel (0) target = $region93
    $region92: #{generate.1} parent=1 // pred_region
      %189 = dma.done [#allocation16], 1024
    $region93: #{generate.1} parent=1 // pred_fallthru
      _
    %v191 = vlaneseq
    %v192 = vshrl.u32 %v191, 7
    %v193 = vadd.s32 %v192, 8
    %v194 = vlaneseq
    %v195 = vand.u32 %v194, 127
    %vm196 = vcmp.le.s32.totalorder %v195, %v192
    %vm197 = vcmp.le.s32.totalorder %v195, %v193
    %v198 = vadd.s32 %v195, 128
    %v199 = vld [vmem:[#allocation15] sm:$0xff]
    %v200 = vld [vmem:[#allocation15 + $0x8] sm:$0xff]
    %v201 = vld [vmem:[%s12] sm:$0xff]
    %v202 = vld [vmem:[%s12 + $0x8] sm:$0xff]
    %v203 = vld [vmem:[%s0] sm:$0xff]
    %v204 = vld [vmem:[%s0 + $0x8] sm:$0xff]
    %v205 = vld [vmem:[#allocation2] sm:$0x1]
    loop: start=0, step=1, limit=4
    $region94: #{generate.1} parent=1 // loop_pre_header
      _
    $region95: #{generate.1} parent=1 // loop_header
      %s207 = sphi 0, %s211
      %p208 = scmp.ge.s32.totalorder %s207, 4
      %v212 = vphi %v203, %v3110
      %v213 = vphi %v204, %v3111
      %v214 = vphi %v205, %v3113
      %v215 = vphi 0, %v3116
    $region96: #{generate.1} parent=1 // loop_header_branch
      %210 = sbr.rel (%p208) target = $region100
    $region97: #{generate.1} parent=1 // loop_body
      %216 = vset.pattern.permute.xlu0 0
      %217 = vperm.xlu0 %216, %v212
      %v218 = vpop.permute.xlu0 %217
      %219 = vset.pattern.permute.xlu0 0
      %220 = vperm.xlu0 %219, %v213
      %v221 = vpop.permute.xlu0 %220
      %vm222 = vcmp.eq.s32.totalorder %v195, %v218
      %vm223 = vcmp.eq.s32.totalorder %v198, %v218
      %vm224 = vcmp.eq.s32.totalorder %v195, %v221
      %vm225 = vcmp.eq.s32.totalorder %v198, %v221
      %v226 = vsel %vm222, 1.0, 0.0
      %v227 = vsel %vm223, 1.0, 0.0
      %v228 = vsel %vm224, 1.0, 0.0
      %v229 = vsel %vm225, 1.0, 0.0
      %v230 = vpack.c.bf16 %v228, %v226
      %v231 = vpack.c.bf16 %v229, %v227
      %v232 = vld [vmem:[#allocation3] sm:$0xf]
      %v233 = vld [vmem:[#allocation3 + $0x4] sm:$0xf]
      %v234 = vld [vmem:[#allocation3 + $0x8] sm:$0xf]
      %v235 = vld [vmem:[#allocation3 + $0xc] sm:$0xf]
      %v236 = vld [vmem:[#allocation3 + $0x10] sm:$0xf]
      %v237 = vld [vmem:[#allocation3 + $0x14] sm:$0xf]
      %v238 = vld [vmem:[#allocation3 + $0x18] sm:$0xf]
      %v239 = vld [vmem:[#allocation3 + $0x1c] sm:$0xf]
      %v240 = vld [vmem:[#allocation3 + $0x20] sm:$0xf]
      %v241 = vld [vmem:[#allocation3 + $0x24] sm:$0xf]
      %v242 = vld [vmem:[#allocation3 + $0x28] sm:$0xf]
      %v243 = vld [vmem:[#allocation3 + $0x2c] sm:$0xf]
      %v244 = vld [vmem:[#allocation3 + $0x30] sm:$0xf]
      %v245 = vld [vmem:[#allocation3 + $0x34] sm:$0xf]
      %v246 = vld [vmem:[#allocation3 + $0x38] sm:$0xf]
      %v247 = vld [vmem:[#allocation3 + $0x3c] sm:$0xf]
      %v248 = vld [vmem:[#allocation3 + $0x40] sm:$0xf]
      %v249 = vld [vmem:[#allocation3 + $0x44] sm:$0xf]
      %v250 = vld [vmem:[#allocation3 + $0x48] sm:$0xf]
      %v251 = vld [vmem:[#allocation3 + $0x4c] sm:$0xf]
      %v252 = vld [vmem:[#allocation3 + $0x50] sm:$0xf]
      %v253 = vld [vmem:[#allocation3 + $0x54] sm:$0xf]
      %v254 = vld [vmem:[#allocation3 + $0x58] sm:$0xf]
      %v255 = vld [vmem:[#allocation3 + $0x5c] sm:$0xf]
      %v256 = vld [vmem:[#allocation3 + $0x60] sm:$0xf]
      %v257 = vld [vmem:[#allocation3 + $0x64] sm:$0xf]
      %v258 = vld [vmem:[#allocation3 + $0x68] sm:$0xf]
      %v259 = vld [vmem:[#allocation3 + $0x6c] sm:$0xf]
      %v260 = vld [vmem:[#allocation3 + $0x70] sm:$0xf]
      %v261 = vld [vmem:[#allocation3 + $0x74] sm:$0xf]
      %v262 = vld [vmem:[#allocation3 + $0x78] sm:$0xf]
      %v263 = vld [vmem:[#allocation3 + $0x7c] sm:$0xf]
      %v296 = vunpack.c.l.b16 %v232
      %v297 = vunpack.c.l.b16 %v233
      %v298 = vunpack.c.l.b16 %v234
      %v299 = vunpack.c.l.b16 %v235
      %v300 = vunpack.c.l.b16 %v236
      %v301 = vunpack.c.l.b16 %v237
      %v302 = vunpack.c.l.b16 %v238
      %v303 = vunpack.c.l.b16 %v239
      %v304 = vunpack.c.l.b16 %v240
      %v305 = vunpack.c.l.b16 %v241
      %v306 = vunpack.c.l.b16 %v242
      %v307 = vunpack.c.l.b16 %v243
      %v308 = vunpack.c.l.b16 %v244
      %v309 = vunpack.c.l.b16 %v245
      %v310 = vunpack.c.l.b16 %v246
      %v311 = vunpack.c.l.b16 %v247
      %v312 = vunpack.c.l.b16 %v248
      %v313 = vunpack.c.l.b16 %v249
      %v314 = vunpack.c.l.b16 %v250
      %v315 = vunpack.c.l.b16 %v251
      %v316 = vunpack.c.l.b16 %v252
      %v317 = vunpack.c.l.b16 %v253
      %v318 = vunpack.c.l.b16 %v254
      %v319 = vunpack.c.l.b16 %v255
      %v320 = vunpack.c.l.b16 %v256
      %v321 = vunpack.c.l.b16 %v257
      %v322 = vunpack.c.l.b16 %v258
      %v323 = vunpack.c.l.b16 %v259
      %v324 = vunpack.c.l.b16 %v260
      %v325 = vunpack.c.l.b16 %v261
      %v326 = vunpack.c.l.b16 %v262
      %v327 = vunpack.c.l.b16 %v263
      %v328 = vpack.c.b16 %v297, %v296
      %v329 = vpack.c.b16 %v299, %v298
      %v330 = vpack.c.b16 %v301, %v300
      %v331 = vpack.c.b16 %v303, %v302
      %v332 = vpack.c.b16 %v305, %v304
      %v333 = vpack.c.b16 %v307, %v306
      %v334 = vpack.c.b16 %v309, %v308
      %v335 = vpack.c.b16 %v311, %v310
      %v336 = vpack.c.b16 %v313, %v312
      %v337 = vpack.c.b16 %v315, %v314
      %v338 = vpack.c.b16 %v317, %v316
      %v339 = vpack.c.b16 %v319, %v318
      %v340 = vpack.c.b16 %v321, %v320
      %v341 = vpack.c.b16 %v323, %v322
      %v342 = vpack.c.b16 %v325, %v324
      %v343 = vpack.c.b16 %v327, %v326
      %360 = vmatpush.bf16.msra.mxu0 %v335
      %361 = vmatpush.bf16.msra.mxu0 %v334
      %362 = vmatpush.bf16.msra.mxu0 %v333
      %363 = vmatpush.bf16.msra.mxu0 %v332
      %364 = vmatpush.bf16.msra.mxu0 %v331
      %365 = vmatpush.bf16.msra.mxu0 %v330
      %366 = vmatpush.bf16.msra.mxu0 %v329
      %367 = vmatpush.bf16.msra.mxu0 %v328
      %368 = vmatmul.bf16.gmra.mxu0 %v230
      %v369 = vpop.f32.mrf.mxu0
      %v370 = vadd.f32 0.0, %v369
      %v371 = vpop.f32.mrf.mxu0
      %v372 = vadd.f32 0.0, %v371
      %373 = vdwg.mxu0
      %374 = vmatpush.bf16.msra.mxu0 %v343
      %375 = vmatpush.bf16.msra.mxu0 %v342
      %376 = vmatpush.bf16.msra.mxu0 %v341
      %377 = vmatpush.bf16.msra.mxu0 %v340
      %378 = vmatpush.bf16.msra.mxu0 %v339
      %379 = vmatpush.bf16.msra.mxu0 %v338
      %380 = vmatpush.bf16.msra.mxu0 %v337
      %381 = vmatpush.bf16.msra.mxu0 %v336
      %382 = vmatmul.bf16.gmra.mxu0 %v231
      %v383 = vpop.f32.mrf.mxu0
      %v384 = vadd.f32 %v370, %v383
      %v385 = vpop.f32.mrf.mxu0
      %v386 = vadd.f32 %v372, %v385
      %387 = vdwg.mxu0
      %v388 = vld [vmem:[#allocation17] sm:$0xf]
      %v389 = vld [vmem:[#allocation17 + $0x4] sm:$0xf]
      %v390 = vld [vmem:[#allocation17 + $0x8] sm:$0xf]
      %v391 = vld [vmem:[#allocation17 + $0xc] sm:$0xf]
      %v392 = vld [vmem:[#allocation17 + $0x10] sm:$0xf]
      %v393 = vld [vmem:[#allocation17 + $0x14] sm:$0xf]
      %v394 = vld [vmem:[#allocation17 + $0x18] sm:$0xf]
      %v395 = vld [vmem:[#allocation17 + $0x1c] sm:$0xf]
      %v396 = vld [vmem:[#allocation17 + $0x20] sm:$0xf]
      %v397 = vld [vmem:[#allocation17 + $0x24] sm:$0xf]
      %v398 = vld [vmem:[#allocation17 + $0x28] sm:$0xf]
      %v399 = vld [vmem:[#allocation17 + $0x2c] sm:$0xf]
      %v400 = vld [vmem:[#allocation17 + $0x30] sm:$0xf]
      %v401 = vld [vmem:[#allocation17 + $0x34] sm:$0xf]
      %v402 = vld [vmem:[#allocation17 + $0x38] sm:$0xf]
      %v403 = vld [vmem:[#allocation17 + $0x3c] sm:$0xf]
      %v404 = vld [vmem:[%s3] sm:$0x1]
      %v405 = vmul.f32 %v384, %v384
      %v406 = vmul.f32 %v386, %v386
      %407 = vadd.xlane.f32.xlu0 %v405
      %v408 = vpop.xlane.xlu0 %407
      %409 = vadd.xlane.f32.xlu0 %v406
      %v410 = vpop.xlane.xlu0 %409
      %v411 = vrcp.pop 128.0
      %v412 = vmul.f32 128.0, %v411
      %v413 = vsub.f32 1.0, %v412
      %v414 = vmul.f32 %v411, %v413
      %v415 = vadd.f32 %v411, %v414
      %vm416 = vweird.f32 %v411
      %v417 = vsel %vm416, %v411, %v415
      %v418 = vmul.f32 %v408, %v417
      %v419 = vmul.f32 %v410, %v417
      %v420 = vadd.f32 %v418, 1e-05
      %v421 = vadd.f32 %v419, 1e-05
      %v422 = vrsqrt.pop %v420
      %v423 = vmul.f32 %v422, %v420
      %v424 = vmul.f32 %v423, %v422
      %v425 = vmul.f32 0.5, %v424
      %v426 = vsub.f32 1.5, %v425
      %v427 = vmul.f32 %v422, %v426
      %vm428 = vweird.f32 %v420
      %vm429 = vweird.f32 %v422
      %vm430 = vmor %vm428, %vm429
      %v431 = vsel %vm430, %v422, %v427
      %v432 = vrsqrt.pop %v421
      %v433 = vmul.f32 %v432, %v421
      %v434 = vmul.f32 %v433, %v432
      %v435 = vmul.f32 0.5, %v434
      %v436 = vsub.f32 1.5, %v435
      %v437 = vmul.f32 %v432, %v436
      %vm438 = vweird.f32 %v421
      %vm439 = vweird.f32 %v432
      %vm440 = vmor %vm438, %vm439
      %v441 = vsel %vm440, %v432, %v437
      %v442 = vmul.f32 %v384, %v431
      %v443 = vmul.f32 %v386, %v441
      %v445 = vperm.slane %v404, 0
      %v447 = vmul.f32 %v442, %v445
      %v448 = vmul.f32 %v443, %v445
      %v449 = vpack.c.bf16 %v448, %v447
      %v450 = vld [vmem:[#allocation6] sm:$0xff]
      %v451 = vld [vmem:[#allocation6 + $0x8] sm:$0xf]
      %v452 = vld [vmem:[#allocation6 + $0xc] sm:$0xff]
      %v453 = vld [vmem:[#allocation6 + $0x14] sm:$0xf]
      %v454 = vld [vmem:[#allocation6 + $0x18] sm:$0xff]
      %v455 = vld [vmem:[#allocation6 + $0x20] sm:$0xf]
      %v456 = vld [vmem:[#allocation6 + $0x24] sm:$0xff]
      %v457 = vld [vmem:[#allocation6 + $0x2c] sm:$0xf]
      %v458 = vld [vmem:[#allocation6 + $0x30] sm:$0xff]
      %v459 = vld [vmem:[#allocation6 + $0x38] sm:$0xf]
      %v460 = vld [vmem:[#allocation6 + $0x3c] sm:$0xff]
      %v461 = vld [vmem:[#allocation6 + $0x44] sm:$0xf]
      %v462 = vld [vmem:[#allocation6 + $0x48] sm:$0xff]
      %v463 = vld [vmem:[#allocation6 + $0x50] sm:$0xf]
      %v464 = vld [vmem:[#allocation6 + $0x54] sm:$0xff]
      %v465 = vld [vmem:[#allocation6 + $0x5c] sm:$0xf]
      %v466 = vld [vmem:[#allocation6 + $0x60] sm:$0xff]
      %v467 = vld [vmem:[#allocation6 + $0x68] sm:$0xf]
      %v468 = vld [vmem:[#allocation6 + $0x6c] sm:$0xff]
      %v469 = vld [vmem:[#allocation6 + $0x74] sm:$0xf]
      %v470 = vld [vmem:[#allocation6 + $0x78] sm:$0xff]
      %v471 = vld [vmem:[#allocation6 + $0x80] sm:$0xf]
      %v472 = vld [vmem:[#allocation6 + $0x84] sm:$0xff]
      %v473 = vld [vmem:[#allocation6 + $0x8c] sm:$0xf]
      %v474 = vld [vmem:[#allocation6 + $0x90] sm:$0xff]
      %v475 = vld [vmem:[#allocation6 + $0x98] sm:$0xf]
      %v476 = vld [vmem:[#allocation6 + $0x9c] sm:$0xff]
      %v477 = vld [vmem:[#allocation6 + $0xa4] sm:$0xf]
      %v478 = vld [vmem:[#allocation6 + $0xa8] sm:$0xff]
      %v479 = vld [vmem:[#allocation6 + $0xb0] sm:$0xf]
      %v480 = vld [vmem:[#allocation6 + $0xb4] sm:$0xff]
      %v481 = vld [vmem:[#allocation6 + $0xbc] sm:$0xf]
      %v514 = vunpack.c.l.b16 %v450
      %v515 = vunpack.c.h.b16 %v450
      %v516 = vunpack.c.l.b16 %v451
      %v517 = vunpack.c.l.b16 %v452
      %v518 = vunpack.c.h.b16 %v452
      %v519 = vunpack.c.l.b16 %v453
      %v520 = vunpack.c.l.b16 %v454
      %v521 = vunpack.c.h.b16 %v454
      %v522 = vunpack.c.l.b16 %v455
      %v523 = vunpack.c.l.b16 %v456
      %v524 = vunpack.c.h.b16 %v456
      %v525 = vunpack.c.l.b16 %v457
      %v526 = vunpack.c.l.b16 %v458
      %v527 = vunpack.c.h.b16 %v458
      %v528 = vunpack.c.l.b16 %v459
      %v529 = vunpack.c.l.b16 %v460
      %v530 = vunpack.c.h.b16 %v460
      %v531 = vunpack.c.l.b16 %v461
      %v532 = vunpack.c.l.b16 %v462
      %v533 = vunpack.c.h.b16 %v462
      %v534 = vunpack.c.l.b16 %v463
      %v535 = vunpack.c.l.b16 %v464
      %v536 = vunpack.c.h.b16 %v464
      %v537 = vunpack.c.l.b16 %v465
      %v538 = vunpack.c.l.b16 %v466
      %v539 = vunpack.c.h.b16 %v466
      %v540 = vunpack.c.l.b16 %v467
      %v541 = vunpack.c.l.b16 %v468
      %v542 = vunpack.c.h.b16 %v468
      %v543 = vunpack.c.l.b16 %v469
      %v544 = vunpack.c.l.b16 %v470
      %v545 = vunpack.c.h.b16 %v470
      %v546 = vunpack.c.l.b16 %v471
      %v547 = vunpack.c.l.b16 %v472
      %v548 = vunpack.c.h.b16 %v472
      %v549 = vunpack.c.l.b16 %v473
      %v550 = vunpack.c.l.b16 %v474
      %v551 = vunpack.c.h.b16 %v474
      %v552 = vunpack.c.l.b16 %v475
      %v553 = vunpack.c.l.b16 %v476
      %v554 = vunpack.c.h.b16 %v476
      %v555 = vunpack.c.l.b16 %v477
      %v556 = vunpack.c.l.b16 %v478
      %v557 = vunpack.c.h.b16 %v478
      %v558 = vunpack.c.l.b16 %v479
      %v559 = vunpack.c.l.b16 %v480
      %v560 = vunpack.c.h.b16 %v480
      %v561 = vunpack.c.l.b16 %v481
      %v562 = vpack.c.b16 %v517, %v514
      %v563 = vpack.c.b16 %v518, %v515
      %v564 = vpack.c.b16 %v519, %v516
      %v565 = vpack.c.b16 %v523, %v520
      %v566 = vpack.c.b16 %v524, %v521
      %v567 = vpack.c.b16 %v525, %v522
      %v568 = vpack.c.b16 %v529, %v526
      %v569 = vpack.c.b16 %v530, %v527
      %v570 = vpack.c.b16 %v531, %v528
      %v571 = vpack.c.b16 %v535, %v532
      %v572 = vpack.c.b16 %v536, %v533
      %v573 = vpack.c.b16 %v537, %v534
      %v574 = vpack.c.b16 %v541, %v538
      %v575 = vpack.c.b16 %v542, %v539
      %v576 = vpack.c.b16 %v543, %v540
      %v577 = vpack.c.b16 %v547, %v544
      %v578 = vpack.c.b16 %v548, %v545
      %v579 = vpack.c.b16 %v549, %v546
      %v580 = vpack.c.b16 %v553, %v550
      %v581 = vpack.c.b16 %v554, %v551
      %v582 = vpack.c.b16 %v555, %v552
      %v583 = vpack.c.b16 %v559, %v556
      %v584 = vpack.c.b16 %v560, %v557
      %v585 = vpack.c.b16 %v561, %v558
      %610 = vmatpush.bf16.msra.mxu0 %v583
      %611 = vmatpush.bf16.msra.mxu0 %v580
      %612 = vmatpush.bf16.msra.mxu0 %v577
      %613 = vmatpush.bf16.msra.mxu0 %v574
      %614 = vmatpush.bf16.msra.mxu0 %v571
      %615 = vmatpush.bf16.msra.mxu0 %v568
      %616 = vmatpush.bf16.msra.mxu0 %v565
      %617 = vmatpush.bf16.msra.mxu0 %v562
      %618 = vmatmul.bf16.gmra.mxu0 %v449
      %v619 = vpop.f32.mrf.mxu0
      %v620 = vadd.f32 0.0, %v619
      %v621 = vpop.f32.mrf.mxu0
      %v622 = vadd.f32 0.0, %v621
      %623 = vdwg.mxu0
      %624 = vmatpush.bf16.msra.mxu0 %v584
      %625 = vmatpush.bf16.msra.mxu0 %v581
      %626 = vmatpush.bf16.msra.mxu0 %v578
      %627 = vmatpush.bf16.msra.mxu0 %v575
      %628 = vmatpush.bf16.msra.mxu0 %v572
      %629 = vmatpush.bf16.msra.mxu0 %v569
      %630 = vmatpush.bf16.msra.mxu0 %v566
      %631 = vmatpush.bf16.msra.mxu0 %v563
      %632 = vmatmul.bf16.gmra.mxu0 %v449
      %v633 = vpop.f32.mrf.mxu0
      %v634 = vadd.f32 0.0, %v633
      %v635 = vpop.f32.mrf.mxu0
      %v636 = vadd.f32 0.0, %v635
      %637 = vdwg.mxu0
      %638 = vmatpush.bf16.msra.mxu0 %v585
      %639 = vmatpush.bf16.msra.mxu0 %v582
      %640 = vmatpush.bf16.msra.mxu0 %v579
      %641 = vmatpush.bf16.msra.mxu0 %v576
      %642 = vmatpush.bf16.msra.mxu0 %v573
      %643 = vmatpush.bf16.msra.mxu0 %v570
      %644 = vmatpush.bf16.msra.mxu0 %v567
      %645 = vmatpush.bf16.msra.mxu0 %v564
      %646 = vmatmul.bf16.gmra.mxu0 %v449
      %v647 = vpop.f32.mrf.mxu0
      %v648 = vadd.f32 0.0, %v647
      %v649 = vpop.f32.mrf.mxu0
      %v650 = vadd.f32 0.0, %v649
      %651 = vdwg.mxu0
      %v652 = vpack.c.bf16 %v648, %v648
      %v653 = vpack.c.bf16 %v650, %v650
      %v654 = vmul.f32 %v620, %v199
      %v655 = vmul.f32 %v622, %v200
      %v656 = vpack.c.bf16 %v622, %v620
      %v673 = vunpack.c.l.b16 %v388
      %v674 = vunpack.c.l.b16 %v389
      %v675 = vunpack.c.l.b16 %v390
      %v676 = vunpack.c.l.b16 %v391
      %v677 = vunpack.c.l.b16 %v392
      %v678 = vunpack.c.l.b16 %v393
      %v679 = vunpack.c.l.b16 %v394
      %v680 = vunpack.c.l.b16 %v395
      %v681 = vunpack.c.l.b16 %v396
      %v682 = vunpack.c.l.b16 %v397
      %v683 = vunpack.c.l.b16 %v398
      %v684 = vunpack.c.l.b16 %v399
      %v685 = vunpack.c.l.b16 %v400
      %v686 = vunpack.c.l.b16 %v401
      %v687 = vunpack.c.l.b16 %v402
      %v688 = vunpack.c.l.b16 %v403
      %v689 = vpack.c.b16 %v674, %v673
      %v690 = vpack.c.b16 %v676, %v675
      %v691 = vpack.c.b16 %v678, %v677
      %v692 = vpack.c.b16 %v680, %v679
      %v693 = vpack.c.b16 %v682, %v681
      %v694 = vpack.c.b16 %v684, %v683
      %v695 = vpack.c.b16 %v686, %v685
      %v696 = vpack.c.b16 %v688, %v687
      %705 = vmatpush.bf16.msra.mxu0 %v696
      %706 = vmatpush.bf16.msra.mxu0 %v695
      %707 = vmatpush.bf16.msra.mxu0 %v694
      %708 = vmatpush.bf16.msra.mxu0 %v693
      %709 = vmatpush.bf16.msra.mxu0 %v692
      %710 = vmatpush.bf16.msra.mxu0 %v691
      %711 = vmatpush.bf16.msra.mxu0 %v690
      %712 = vmatpush.bf16.msra.mxu0 %v689
      %713 = vmatmul.bf16.gmra.mxu0 %v656
      %v714 = vpop.f32.mrf.mxu0
      %v715 = vadd.f32 0.0, %v714
      %v716 = vpop.f32.mrf.mxu0
      %v717 = vadd.f32 0.0, %v716
      %718 = vdwg.mxu0
      %v719 = vmul.f32 %v715, %v201
      %v720 = vmul.f32 %v717, %v202
      %v721 = vadd.f32 %v654, %v719
      %v722 = vadd.f32 %v655, %v720
      %v723 = vmul.f32 %v634, %v199
      %v724 = vmul.f32 %v636, %v200
      %v725 = vpack.c.bf16 %v636, %v634
      %726 = vmatpush.bf16.msra.mxu0 %v696
      %727 = vmatpush.bf16.msra.mxu0 %v695
      %728 = vmatpush.bf16.msra.mxu0 %v694
      %729 = vmatpush.bf16.msra.mxu0 %v693
      %730 = vmatpush.bf16.msra.mxu0 %v692
      %731 = vmatpush.bf16.msra.mxu0 %v691
      %732 = vmatpush.bf16.msra.mxu0 %v690
      %733 = vmatpush.bf16.msra.mxu0 %v689
      %734 = vmatmul.bf16.gmra.mxu0 %v725
      %v735 = vpop.f32.mrf.mxu0
      %v736 = vadd.f32 0.0, %v735
      %v737 = vpop.f32.mrf.mxu0
      %v738 = vadd.f32 0.0, %v737
      %739 = vdwg.mxu0
      %v740 = vmul.f32 %v736, %v201
      %v741 = vmul.f32 %v738, %v202
      %v742 = vadd.f32 %v723, %v740
      %v743 = vadd.f32 %v724, %v741
      %v744 = vpack.c.bf16 %v721, %v721
      %v745 = vpack.c.bf16 %v722, %v722
      %v746 = vpack.c.bf16 %v742, %v742
      %v747 = vpack.c.bf16 %v743, %v743
      %v750 = vunpack.c.l.b16 %v744
      %v751 = vunpack.c.l.b16 %v745
      %v752 = vpack.c.b16 %v751, %v750
      %v755 = vunpack.c.l.b16 %v746
      %v756 = vunpack.c.l.b16 %v747
      %v757 = vpack.c.b16 %v756, %v755
      %vm758 = vcmask 261120
      %v760 = vsel %vm758, %v752, 0
      %v763 = vsel %vm758, %v757, 0
      %765 = vmatpush.bf16.xpose.msra.mxu0 0
      %766 = vmatpush.bf16.xpose.msra.mxu0 0
      %767 = vmatpush.bf16.xpose.msra.mxu0 0
      %768 = vmatpush.bf16.xpose.msra.mxu0 0
      %769 = vmatpush.bf16.xpose.msra.mxu0 0
      %770 = vmatpush.bf16.xpose.msra.mxu0 0
      %771 = vmatpush.bf16.xpose.msra.mxu0 0
      %772 = vmatpush.bf16.xpose.msra.mxu0 %v763
      %773 = vmatmul.bf16.gmra.mxu0 %v760
      %v774 = vpop.f32.mrf.mxu0
      %v775 = vadd.f32 0.0, %v774
      %v776 = vpop.f32.mrf.mxu0
      %v777 = vadd.f32 0.0, %v776
      %778 = vdwg.mxu0
      %v779 = vsel %vm196, %v775, -1e+30
      %v780 = vsel %vm197, %v777, -1e+30
      %vm781 = vcmask 130048
      %v782 = vsel %vm781, %v779, -inf
      %783 = vmax.xlane.f32.xlu0 %v782
      %v784 = vpop.xlane.xlu0 %783
      %v785 = vsel %vm781, %v780, -inf
      %786 = vmax.xlane.f32.xlu0 %v785
      %v787 = vpop.xlane.xlu0 %786
      %v788 = vsub.f32 %v779, %v784
      %v789 = vsub.f32 %v780, %v787
      %v790 = vmul.f32 %v788, 1.442695
      %v791 = vpow.pop %v790
      %v792 = vmul.f32 %v789, 1.442695
      %v793 = vpow.pop %v792
      %v794 = vsel %vm781, %v791, 0.0
      %795 = vadd.xlane.f32.xlu0 %v794
      %v796 = vpop.xlane.xlu0 %795
      %v797 = vsel %vm781, %v793, 0.0
      %798 = vadd.xlane.f32.xlu0 %v797
      %v799 = vpop.xlane.xlu0 %798
      %v800 = vrcp.pop %v796
      %v801 = vrcp.pop %v799
      %v802 = vmul.f32 %v791, %v800
      %v803 = vmul.f32 %v793, %v801
      %v804 = vpack.c.bf16 %v803, %v802
      %v807 = vunpack.c.l.b16 %v652
      %v808 = vunpack.c.l.b16 %v653
      %v809 = vpack.c.b16 %v808, %v807
      %v812 = vsel %vm781, %v804, 0
      %814 = vmatpush.bf16.msra.mxu0 0
      %815 = vmatpush.bf16.msra.mxu0 0
      %816 = vmatpush.bf16.msra.mxu0 0
      %817 = vmatpush.bf16.msra.mxu0 0
      %818 = vmatpush.bf16.msra.mxu0 0
      %819 = vmatpush.bf16.msra.mxu0 0
      %820 = vmatpush.bf16.msra.mxu0 0
      %821 = vmatpush.bf16.msra.mxu0 %v809
      %822 = vmatmul.bf16.gmra.mxu0 %v812
      %v823 = vpop.f32.mrf.mxu0
      %v824 = vadd.f32 0.0, %v823
      %v825 = vpop.f32.mrf.mxu0
      %v826 = vadd.f32 0.0, %v825
      %827 = vdwg.mxu0
      %828 = vrot.lane.b32.xlu0 %v752, 96
      %v829 = vpop.permute.xlu0 %828
      %830 = vrot.lane.b32.xlu0 %v757, 96
      %v831 = vpop.permute.xlu0 %830
      %v833 = vsel %vm758, %v829, 0
      %v836 = vsel %vm758, %v831, 0
      %838 = vmatpush.bf16.xpose.msra.mxu0 0
      %839 = vmatpush.bf16.xpose.msra.mxu0 0
      %840 = vmatpush.bf16.xpose.msra.mxu0 0
      %841 = vmatpush.bf16.xpose.msra.mxu0 0
      %842 = vmatpush.bf16.xpose.msra.mxu0 0
      %843 = vmatpush.bf16.xpose.msra.mxu0 0
      %844 = vmatpush.bf16.xpose.msra.mxu0 0
      %845 = vmatpush.bf16.xpose.msra.mxu0 %v836
      %846 = vmatmul.bf16.gmra.mxu0 %v833
      %v847 = vpop.f32.mrf.mxu0
      %v848 = vadd.f32 0.0, %v847
      %v849 = vpop.f32.mrf.mxu0
      %v850 = vadd.f32 0.0, %v849
      %851 = vdwg.mxu0
      %v852 = vsel %vm196, %v848, -1e+30
      %v853 = vsel %vm197, %v850, -1e+30
      %v854 = vsel %vm781, %v852, -inf
      %855 = vmax.xlane.f32.xlu0 %v854
      %v856 = vpop.xlane.xlu0 %855
      %v857 = vsel %vm781, %v853, -inf
      %858 = vmax.xlane.f32.xlu0 %v857
      %v859 = vpop.xlane.xlu0 %858
      %v860 = vsub.f32 %v852, %v856
      %v861 = vsub.f32 %v853, %v859
      %v862 = vmul.f32 %v860, 1.442695
      %v863 = vpow.pop %v862
      %v864 = vmul.f32 %v861, 1.442695
      %v865 = vpow.pop %v864
      %v866 = vsel %vm781, %v863, 0.0
      %867 = vadd.xlane.f32.xlu0 %v866
      %v868 = vpop.xlane.xlu0 %867
      %v869 = vsel %vm781, %v865, 0.0
      %870 = vadd.xlane.f32.xlu0 %v869
      %v871 = vpop.xlane.xlu0 %870
      %v872 = vrcp.pop %v868
      %v873 = vrcp.pop %v871
      %v874 = vmul.f32 %v863, %v872
      %v875 = vmul.f32 %v865, %v873
      %v876 = vpack.c.bf16 %v875, %v874
      %877 = vrot.lane.b32.xlu0 %v809, 96
      %v878 = vpop.permute.xlu0 %877
      %v881 = vsel %vm781, %v876, 0
      %883 = vmatpush.bf16.msra.mxu0 0
      %884 = vmatpush.bf16.msra.mxu0 0
      %885 = vmatpush.bf16.msra.mxu0 0
      %886 = vmatpush.bf16.msra.mxu0 0
      %887 = vmatpush.bf16.msra.mxu0 0
      %888 = vmatpush.bf16.msra.mxu0 0
      %889 = vmatpush.bf16.msra.mxu0 0
      %890 = vmatpush.bf16.msra.mxu0 %v878
      %891 = vmatmul.bf16.gmra.mxu0 %v881
      %v892 = vpop.f32.mrf.mxu0
      %v893 = vadd.f32 0.0, %v892
      %v894 = vpop.f32.mrf.mxu0
      %v895 = vadd.f32 0.0, %v894
      %896 = vdwg.mxu0
      %897 = vrot.lane.b32.xlu0 %v752, 64
      %v898 = vpop.permute.xlu0 %897
      %899 = vrot.lane.b32.xlu0 %v757, 64
      %v900 = vpop.permute.xlu0 %899
      %v902 = vsel %vm758, %v898, 0
      %v905 = vsel %vm758, %v900, 0
      %907 = vmatpush.bf16.xpose.msra.mxu0 0
      %908 = vmatpush.bf16.xpose.msra.mxu0 0
      %909 = vmatpush.bf16.xpose.msra.mxu0 0
      %910 = vmatpush.bf16.xpose.msra.mxu0 0
      %911 = vmatpush.bf16.xpose.msra.mxu0 0
      %912 = vmatpush.bf16.xpose.msra.mxu0 0
      %913 = vmatpush.bf16.xpose.msra.mxu0 0
      %914 = vmatpush.bf16.xpose.msra.mxu0 %v905
      %915 = vmatmul.bf16.gmra.mxu0 %v902
      %v916 = vpop.f32.mrf.mxu0
      %v917 = vadd.f32 0.0, %v916
      %v918 = vpop.f32.mrf.mxu0
      %v919 = vadd.f32 0.0, %v918
      %920 = vdwg.mxu0
      %v921 = vsel %vm196, %v917, -1e+30
      %v922 = vsel %vm197, %v919, -1e+30
      %v923 = vsel %vm781, %v921, -inf
      %924 = vmax.xlane.f32.xlu0 %v923
      %v925 = vpop.xlane.xlu0 %924
      %v926 = vsel %vm781, %v922, -inf
      %927 = vmax.xlane.f32.xlu0 %v926
      %v928 = vpop.xlane.xlu0 %927
      %v929 = vsub.f32 %v921, %v925
      %v930 = vsub.f32 %v922, %v928
      %v931 = vmul.f32 %v929, 1.442695
      %v932 = vpow.pop %v931
      %v933 = vmul.f32 %v930, 1.442695
      %v934 = vpow.pop %v933
      %v935 = vsel %vm781, %v932, 0.0
      %936 = vadd.xlane.f32.xlu0 %v935
      %v937 = vpop.xlane.xlu0 %936
      %v938 = vsel %vm781, %v934, 0.0
      %939 = vadd.xlane.f32.xlu0 %v938
      %v940 = vpop.xlane.xlu0 %939
      %v941 = vrcp.pop %v937
      %v942 = vrcp.pop %v940
      %v943 = vmul.f32 %v932, %v941
      %v944 = vmul.f32 %v934, %v942
      %v945 = vpack.c.bf16 %v944, %v943
      %946 = vrot.lane.b32.xlu0 %v809, 64
      %v947 = vpop.permute.xlu0 %946
      %v950 = vsel %vm781, %v945, 0
      %952 = vmatpush.bf16.msra.mxu0 0
      %953 = vmatpush.bf16.msra.mxu0 0
      %954 = vmatpush.bf16.msra.mxu0 0
      %955 = vmatpush.bf16.msra.mxu0 0
      %956 = vmatpush.bf16.msra.mxu0 0
      %957 = vmatpush.bf16.msra.mxu0 0
      %958 = vmatpush.bf16.msra.mxu0 0
      %959 = vmatpush.bf16.msra.mxu0 %v947
      %960 = vmatmul.bf16.gmra.mxu0 %v950
      %v961 = vpop.f32.mrf.mxu0
      %v962 = vadd.f32 0.0, %v961
      %v963 = vpop.f32.mrf.mxu0
      %v964 = vadd.f32 0.0, %v963
      %965 = vdwg.mxu0
      %966 = vrot.lane.b32.xlu0 %v752, 32
      %v967 = vpop.permute.xlu0 %966
      %968 = vrot.lane.b32.xlu0 %v757, 32
      %v969 = vpop.permute.xlu0 %968
      %v971 = vsel %vm758, %v967, 0
      %v974 = vsel %vm758, %v969, 0
      %976 = vmatpush.bf16.xpose.msra.mxu0 0
      %977 = vmatpush.bf16.xpose.msra.mxu0 0
      %978 = vmatpush.bf16.xpose.msra.mxu0 0
      %979 = vmatpush.bf16.xpose.msra.mxu0 0
      %980 = vmatpush.bf16.xpose.msra.mxu0 0
      %981 = vmatpush.bf16.xpose.msra.mxu0 0
      %982 = vmatpush.bf16.xpose.msra.mxu0 0
      %983 = vmatpush.bf16.xpose.msra.mxu0 %v974
      %984 = vmatmul.bf16.gmra.mxu0 %v971
      %v985 = vpop.f32.mrf.mxu0
      %v986 = vadd.f32 0.0, %v985
      %v987 = vpop.f32.mrf.mxu0
      %v988 = vadd.f32 0.0, %v987
      %989 = vdwg.mxu0
      %v990 = vsel %vm196, %v986, -1e+30
      %v991 = vsel %vm197, %v988, -1e+30
      %v992 = vsel %vm781, %v990, -inf
      %993 = vmax.xlane.f32.xlu0 %v992
      %v994 = vpop.xlane.xlu0 %993
      %v995 = vsel %vm781, %v991, -inf
      %996 = vmax.xlane.f32.xlu0 %v995
      %v997 = vpop.xlane.xlu0 %996
      %v998 = vsub.f32 %v990, %v994
      %v999 = vsub.f32 %v991, %v997
      %v1000 = vmul.f32 %v998, 1.442695
      %v1001 = vpow.pop %v1000
      %v1002 = vmul.f32 %v999, 1.442695
      %v1003 = vpow.pop %v1002
      %v1004 = vsel %vm781, %v1001, 0.0
      %1005 = vadd.xlane.f32.xlu0 %v1004
      %v1006 = vpop.xlane.xlu0 %1005
      %v1007 = vsel %vm781, %v1003, 0.0
      %1008 = vadd.xlane.f32.xlu0 %v1007
      %v1009 = vpop.xlane.xlu0 %1008
      %v1010 = vrcp.pop %v1006
      %v1011 = vrcp.pop %v1009
      %v1012 = vmul.f32 %v1001, %v1010
      %v1013 = vmul.f32 %v1003, %v1011
      %v1014 = vpack.c.bf16 %v1013, %v1012
      %1015 = vrot.lane.b32.xlu0 %v809, 32
      %v1016 = vpop.permute.xlu0 %1015
      %v1019 = vsel %vm781, %v1014, 0
      %1021 = vmatpush.bf16.msra.mxu0 0
      %1022 = vmatpush.bf16.msra.mxu0 0
      %1023 = vmatpush.bf16.msra.mxu0 0
      %1024 = vmatpush.bf16.msra.mxu0 0
      %1025 = vmatpush.bf16.msra.mxu0 0
      %1026 = vmatpush.bf16.msra.mxu0 0
      %1027 = vmatpush.bf16.msra.mxu0 0
      %1028 = vmatpush.bf16.msra.mxu0 %v1016
      %1029 = vmatmul.bf16.gmra.mxu0 %v1019
      %v1030 = vpop.f32.mrf.mxu0
      %v1031 = vadd.f32 0.0, %v1030
      %v1032 = vpop.f32.mrf.mxu0
      %v1033 = vadd.f32 0.0, %v1032
      %1034 = vdwg.mxu0
      %1037 = vrot.lane.b32.xlu0 %v893, 32
      %v1038 = vpop.permute.xlu0 %1037
      %1039 = vrot.lane.b32.xlu0 %v895, 32
      %v1040 = vpop.permute.xlu0 %1039
      %1045 = vrot.lane.b32.xlu0 %v962, 64
      %v1046 = vpop.permute.xlu0 %1045
      %1047 = vrot.lane.b32.xlu0 %v964, 64
      %v1048 = vpop.permute.xlu0 %1047
      %1053 = vrot.lane.b32.xlu0 %v1031, 96
      %v1054 = vpop.permute.xlu0 %1053
      %1055 = vrot.lane.b32.xlu0 %v1033, 96
      %v1056 = vpop.permute.xlu0 %1055
      %v1059 = vsel %vm758, %v824, %v1038
      %v1060 = vsel %vm758, %v826, %v1040
      %vm1061 = vcmask 523264
      %v1062 = vsel %vm1061, %v1059, %v1046
      %v1063 = vsel %vm1061, %v1060, %v1048
      %vm1064 = vcmask 785408
      %v1065 = vsel %vm1064, %v1062, %v1054
      %v1066 = vsel %vm1064, %v1063, %v1056
      %v1067 = vpack.c.bf16 %v1066, %v1065
      %v1068 = vld [vmem:[#allocation8] sm:$0xf]
      %v1069 = vld [vmem:[#allocation8 + $0x4] sm:$0xf]
      %v1070 = vld [vmem:[#allocation8 + $0x8] sm:$0xf]
      %v1071 = vld [vmem:[#allocation8 + $0xc] sm:$0xf]
      %v1072 = vld [vmem:[#allocation8 + $0x10] sm:$0xf]
      %v1073 = vld [vmem:[#allocation8 + $0x14] sm:$0xf]
      %v1074 = vld [vmem:[#allocation8 + $0x18] sm:$0xf]
      %v1075 = vld [vmem:[#allocation8 + $0x1c] sm:$0xf]
      %v1076 = vld [vmem:[#allocation8 + $0x20] sm:$0xf]
      %v1077 = vld [vmem:[#allocation8 + $0x24] sm:$0xf]
      %v1078 = vld [vmem:[#allocation8 + $0x28] sm:$0xf]
      %v1079 = vld [vmem:[#allocation8 + $0x2c] sm:$0xf]
      %v1080 = vld [vmem:[#allocation8 + $0x30] sm:$0xf]
      %v1081 = vld [vmem:[#allocation8 + $0x34] sm:$0xf]
      %v1082 = vld [vmem:[#allocation8 + $0x38] sm:$0xf]
      %v1083 = vld [vmem:[#allocation8 + $0x3c] sm:$0xf]
      %v1100 = vunpack.c.l.b16 %v1068
      %v1101 = vunpack.c.l.b16 %v1069
      %v1102 = vunpack.c.l.b16 %v1070
      %v1103 = vunpack.c.l.b16 %v1071
      %v1104 = vunpack.c.l.b16 %v1072
      %v1105 = vunpack.c.l.b16 %v1073
      %v1106 = vunpack.c.l.b16 %v1074
      %v1107 = vunpack.c.l.b16 %v1075
      %v1108 = vunpack.c.l.b16 %v1076
      %v1109 = vunpack.c.l.b16 %v1077
      %v1110 = vunpack.c.l.b16 %v1078
      %v1111 = vunpack.c.l.b16 %v1079
      %v1112 = vunpack.c.l.b16 %v1080
      %v1113 = vunpack.c.l.b16 %v1081
      %v1114 = vunpack.c.l.b16 %v1082
      %v1115 = vunpack.c.l.b16 %v1083
      %v1116 = vpack.c.b16 %v1101, %v1100
      %v1117 = vpack.c.b16 %v1103, %v1102
      %v1118 = vpack.c.b16 %v1105, %v1104
      %v1119 = vpack.c.b16 %v1107, %v1106
      %v1120 = vpack.c.b16 %v1109, %v1108
      %v1121 = vpack.c.b16 %v1111, %v1110
      %v1122 = vpack.c.b16 %v1113, %v1112
      %v1123 = vpack.c.b16 %v1115, %v1114
      %1132 = vmatpush.bf16.msra.mxu0 %v1123
      %1133 = vmatpush.bf16.msra.mxu0 %v1122
      %1134 = vmatpush.bf16.msra.mxu0 %v1121
      %1135 = vmatpush.bf16.msra.mxu0 %v1120
      %1136 = vmatpush.bf16.msra.mxu0 %v1119
      %1137 = vmatpush.bf16.msra.mxu0 %v1118
      %1138 = vmatpush.bf16.msra.mxu0 %v1117
      %1139 = vmatpush.bf16.msra.mxu0 %v1116
      %1140 = vmatmul.bf16.gmra.mxu0 %v1067
      %v1141 = vpop.f32.mrf.mxu0
      %v1142 = vadd.f32 0.0, %v1141
      %v1143 = vpop.f32.mrf.mxu0
      %v1144 = vadd.f32 0.0, %v1143
      %1145 = vdwg.mxu0
      %v1146 = vadd.f32 %v384, %v1142
      %v1147 = vadd.f32 %v386, %v1144
      %v1148 = vld [vmem:[%s6] sm:$0x1]
      %v1149 = vmul.f32 %v1146, %v1146
      %v1150 = vmul.f32 %v1147, %v1147
      %1151 = vadd.xlane.f32.xlu0 %v1149
      %v1152 = vpop.xlane.xlu0 %1151
      %1153 = vadd.xlane.f32.xlu0 %v1150
      %v1154 = vpop.xlane.xlu0 %1153
      %v1155 = vmul.f32 %v1152, %v417
      %v1156 = vmul.f32 %v1154, %v417
      %v1157 = vadd.f32 %v1155, 1e-05
      %v1158 = vadd.f32 %v1156, 1e-05
      %v1159 = vrsqrt.pop %v1157
      %v1160 = vmul.f32 %v1159, %v1157
      %v1161 = vmul.f32 %v1160, %v1159
      %v1162 = vmul.f32 0.5, %v1161
      %v1163 = vsub.f32 1.5, %v1162
      %v1164 = vmul.f32 %v1159, %v1163
      %vm1165 = vweird.f32 %v1157
      %vm1166 = vweird.f32 %v1159
      %vm1167 = vmor %vm1165, %vm1166
      %v1168 = vsel %vm1167, %v1159, %v1164
      %v1169 = vrsqrt.pop %v1158
      %v1170 = vmul.f32 %v1169, %v1158
      %v1171 = vmul.f32 %v1170, %v1169
      %v1172 = vmul.f32 0.5, %v1171
      %v1173 = vsub.f32 1.5, %v1172
      %v1174 = vmul.f32 %v1169, %v1173
      %vm1175 = vweird.f32 %v1158
      %vm1176 = vweird.f32 %v1169
      %vm1177 = vmor %vm1175, %vm1176
      %v1178 = vsel %vm1177, %v1169, %v1174
      %v1179 = vmul.f32 %v1146, %v1168
      %v1180 = vmul.f32 %v1147, %v1178
      %v1182 = vperm.slane %v1148, 0
      %v1184 = vmul.f32 %v1179, %v1182
      %v1185 = vmul.f32 %v1180, %v1182
      %v1186 = vpack.c.bf16 %v1185, %v1184
      %v1187 = vld [vmem:[#allocation9] sm:$0xff]
      %v1188 = vld [vmem:[#allocation9 + $0x8] sm:$0xff]
      %v1189 = vld [vmem:[#allocation9 + $0x10] sm:$0xff]
      %v1190 = vld [vmem:[#allocation9 + $0x18] sm:$0xff]
      %v1191 = vld [vmem:[#allocation9 + $0x20] sm:$0xff]
      %v1192 = vld [vmem:[#allocation9 + $0x28] sm:$0xff]
      %v1193 = vld [vmem:[#allocation9 + $0x30] sm:$0xff]
      %v1194 = vld [vmem:[#allocation9 + $0x38] sm:$0xff]
      %v1195 = vld [vmem:[#allocation9 + $0x40] sm:$0xff]
      %v1196 = vld [vmem:[#allocation9 + $0x48] sm:$0xff]
      %v1197 = vld [vmem:[#allocation9 + $0x50] sm:$0xff]
      %v1198 = vld [vmem:[#allocation9 + $0x58] sm:$0xff]
      %v1199 = vld [vmem:[#allocation9 + $0x60] sm:$0xff]
      %v1200 = vld [vmem:[#allocation9 + $0x68] sm:$0xff]
      %v1201 = vld [vmem:[#allocation9 + $0x70] sm:$0xff]
      %v1202 = vld [vmem:[#allocation9 + $0x78] sm:$0xff]
      %v1203 = vld [vmem:[#allocation9 + $0x80] sm:$0xff]
      %v1204 = vld [vmem:[#allocation9 + $0x88] sm:$0xff]
      %v1205 = vld [vmem:[#allocation9 + $0x90] sm:$0xff]
      %v1206 = vld [vmem:[#allocation9 + $0x98] sm:$0xff]
      %v1207 = vld [vmem:[#allocation9 + $0xa0] sm:$0xff]
      %v1208 = vld [vmem:[#allocation9 + $0xa8] sm:$0xff]
      %v1209 = vld [vmem:[#allocation9 + $0xb0] sm:$0xff]
      %v1210 = vld [vmem:[#allocation9 + $0xb8] sm:$0xff]
      %v1211 = vld [vmem:[#allocation9 + $0xc0] sm:$0xff]
      %v1212 = vld [vmem:[#allocation9 + $0xc8] sm:$0xff]
      %v1213 = vld [vmem:[#allocation9 + $0xd0] sm:$0xff]
      %v1214 = vld [vmem:[#allocation9 + $0xd8] sm:$0xff]
      %v1215 = vld [vmem:[#allocation9 + $0xe0] sm:$0xff]
      %v1216 = vld [vmem:[#allocation9 + $0xe8] sm:$0xff]
      %v1217 = vld [vmem:[#allocation9 + $0xf0] sm:$0xff]
      %v1218 = vld [vmem:[#allocation9 + $0xf8] sm:$0xff]
      %v1251 = vunpack.c.l.b16 %v1187
      %v1252 = vunpack.c.h.b16 %v1187
      %v1253 = vunpack.c.l.b16 %v1188
      %v1254 = vunpack.c.h.b16 %v1188
      %v1255 = vunpack.c.l.b16 %v1189
      %v1256 = vunpack.c.h.b16 %v1189
      %v1257 = vunpack.c.l.b16 %v1190
      %v1258 = vunpack.c.h.b16 %v1190
      %v1259 = vunpack.c.l.b16 %v1191
      %v1260 = vunpack.c.h.b16 %v1191
      %v1261 = vunpack.c.l.b16 %v1192
      %v1262 = vunpack.c.h.b16 %v1192
      %v1263 = vunpack.c.l.b16 %v1193
      %v1264 = vunpack.c.h.b16 %v1193
      %v1265 = vunpack.c.l.b16 %v1194
      %v1266 = vunpack.c.h.b16 %v1194
      %v1267 = vunpack.c.l.b16 %v1195
      %v1268 = vunpack.c.h.b16 %v1195
      %v1269 = vunpack.c.l.b16 %v1196
      %v1270 = vunpack.c.h.b16 %v1196
      %v1271 = vunpack.c.l.b16 %v1197
      %v1272 = vunpack.c.h.b16 %v1197
      %v1273 = vunpack.c.l.b16 %v1198
      %v1274 = vunpack.c.h.b16 %v1198
      %v1275 = vunpack.c.l.b16 %v1199
      %v1276 = vunpack.c.h.b16 %v1199
      %v1277 = vunpack.c.l.b16 %v1200
      %v1278 = vunpack.c.h.b16 %v1200
      %v1279 = vunpack.c.l.b16 %v1201
      %v1280 = vunpack.c.h.b16 %v1201
      %v1281 = vunpack.c.l.b16 %v1202
      %v1282 = vunpack.c.h.b16 %v1202
      %v1283 = vunpack.c.l.b16 %v1203
      %v1284 = vunpack.c.h.b16 %v1203
      %v1285 = vunpack.c.l.b16 %v1204
      %v1286 = vunpack.c.h.b16 %v1204
      %v1287 = vunpack.c.l.b16 %v1205
      %v1288 = vunpack.c.h.b16 %v1205
      %v1289 = vunpack.c.l.b16 %v1206
      %v1290 = vunpack.c.h.b16 %v1206
      %v1291 = vunpack.c.l.b16 %v1207
      %v1292 = vunpack.c.h.b16 %v1207
      %v1293 = vunpack.c.l.b16 %v1208
      %v1294 = vunpack.c.h.b16 %v1208
      %v1295 = vunpack.c.l.b16 %v1209
      %v1296 = vunpack.c.h.b16 %v1209
      %v1297 = vunpack.c.l.b16 %v1210
      %v1298 = vunpack.c.h.b16 %v1210
      %v1299 = vunpack.c.l.b16 %v1211
      %v1300 = vunpack.c.h.b16 %v1211
      %v1301 = vunpack.c.l.b16 %v1212
      %v1302 = vunpack.c.h.b16 %v1212
      %v1303 = vunpack.c.l.b16 %v1213
      %v1304 = vunpack.c.h.b16 %v1213
      %v1305 = vunpack.c.l.b16 %v1214
      %v1306 = vunpack.c.h.b16 %v1214
      %v1307 = vunpack.c.l.b16 %v1215
      %v1308 = vunpack.c.h.b16 %v1215
      %v1309 = vunpack.c.l.b16 %v1216
      %v1310 = vunpack.c.h.b16 %v1216
      %v1311 = vunpack.c.l.b16 %v1217
      %v1312 = vunpack.c.h.b16 %v1217
      %v1313 = vunpack.c.l.b16 %v1218
      %v1314 = vunpack.c.h.b16 %v1218
      %v1315 = vpack.c.b16 %v1255, %v1251
      %v1316 = vpack.c.b16 %v1256, %v1252
      %v1317 = vpack.c.b16 %v1257, %v1253
      %v1318 = vpack.c.b16 %v1258, %v1254
      %v1319 = vpack.c.b16 %v1263, %v1259
      %v1320 = vpack.c.b16 %v1264, %v1260
      %v1321 = vpack.c.b16 %v1265, %v1261
      %v1322 = vpack.c.b16 %v1266, %v1262
      %v1323 = vpack.c.b16 %v1271, %v1267
      %v1324 = vpack.c.b16 %v1272, %v1268
      %v1325 = vpack.c.b16 %v1273, %v1269
      %v1326 = vpack.c.b16 %v1274, %v1270
      %v1327 = vpack.c.b16 %v1279, %v1275
      %v1328 = vpack.c.b16 %v1280, %v1276
      %v1329 = vpack.c.b16 %v1281, %v1277
      %v1330 = vpack.c.b16 %v1282, %v1278
      %v1331 = vpack.c.b16 %v1287, %v1283
      %v1332 = vpack.c.b16 %v1288, %v1284
      %v1333 = vpack.c.b16 %v1289, %v1285
      %v1334 = vpack.c.b16 %v1290, %v1286
      %v1335 = vpack.c.b16 %v1295, %v1291
      %v1336 = vpack.c.b16 %v1296, %v1292
      %v1337 = vpack.c.b16 %v1297, %v1293
      %v1338 = vpack.c.b16 %v1298, %v1294
      %v1339 = vpack.c.b16 %v1303, %v1299
      %v1340 = vpack.c.b16 %v1304, %v1300
      %v1341 = vpack.c.b16 %v1305, %v1301
      %v1342 = vpack.c.b16 %v1306, %v1302
      %v1343 = vpack.c.b16 %v1311, %v1307
      %v1344 = vpack.c.b16 %v1312, %v1308
      %v1345 = vpack.c.b16 %v1313, %v1309
      %v1346 = vpack.c.b16 %v1314, %v1310
      %1379 = vmatpush.bf16.msra.mxu0 %v1343
      %1380 = vmatpush.bf16.msra.mxu0 %v1339
      %1381 = vmatpush.bf16.msra.mxu0 %v1335
      %1382 = vmatpush.bf16.msra.mxu0 %v1331
      %1383 = vmatpush.bf16.msra.mxu0 %v1327
      %1384 = vmatpush.bf16.msra.mxu0 %v1323
      %1385 = vmatpush.bf16.msra.mxu0 %v1319
      %1386 = vmatpush.bf16.msra.mxu0 %v1315
      %1387 = vmatmul.bf16.gmra.mxu0 %v1186
      %v1388 = vpop.f32.mrf.mxu0
      %v1389 = vadd.f32 0.0, %v1388
      %v1390 = vpop.f32.mrf.mxu0
      %v1391 = vadd.f32 0.0, %v1390
      %1392 = vdwg.mxu0
      %1393 = vmatpush.bf16.msra.mxu0 %v1344
      %1394 = vmatpush.bf16.msra.mxu0 %v1340
      %1395 = vmatpush.bf16.msra.mxu0 %v1336
      %1396 = vmatpush.bf16.msra.mxu0 %v1332
      %1397 = vmatpush.bf16.msra.mxu0 %v1328
      %1398 = vmatpush.bf16.msra.mxu0 %v1324
      %1399 = vmatpush.bf16.msra.mxu0 %v1320
      %1400 = vmatpush.bf16.msra.mxu0 %v1316
      %1401 = vmatmul.bf16.gmra.mxu0 %v1186
      %v1402 = vpop.f32.mrf.mxu0
      %v1403 = vadd.f32 0.0, %v1402
      %v1404 = vpop.f32.mrf.mxu0
      %v1405 = vadd.f32 0.0, %v1404
      %1406 = vdwg.mxu0
      %1407 = vmatpush.bf16.msra.mxu0 %v1345
      %1408 = vmatpush.bf16.msra.mxu0 %v1341
      %1409 = vmatpush.bf16.msra.mxu0 %v1337
      %1410 = vmatpush.bf16.msra.mxu0 %v1333
      %1411 = vmatpush.bf16.msra.mxu0 %v1329
      %1412 = vmatpush.bf16.msra.mxu0 %v1325
      %1413 = vmatpush.bf16.msra.mxu0 %v1321
      %1414 = vmatpush.bf16.msra.mxu0 %v1317
      %1415 = vmatmul.bf16.gmra.mxu0 %v1186
      %v1416 = vpop.f32.mrf.mxu0
      %v1417 = vadd.f32 0.0, %v1416
      %v1418 = vpop.f32.mrf.mxu0
      %v1419 = vadd.f32 0.0, %v1418
      %1420 = vdwg.mxu0
      %1421 = vmatpush.bf16.msra.mxu0 %v1346
      %1422 = vmatpush.bf16.msra.mxu0 %v1342
      %1423 = vmatpush.bf16.msra.mxu0 %v1338
      %1424 = vmatpush.bf16.msra.mxu0 %v1334
      %1425 = vmatpush.bf16.msra.mxu0 %v1330
      %1426 = vmatpush.bf16.msra.mxu0 %v1326
      %1427 = vmatpush.bf16.msra.mxu0 %v1322
      %1428 = vmatpush.bf16.msra.mxu0 %v1318
      %1429 = vmatmul.bf16.gmra.mxu0 %v1186
      %v1430 = vpop.f32.mrf.mxu0
      %v1431 = vadd.f32 0.0, %v1430
      %v1432 = vpop.f32.mrf.mxu0
      %v1433 = vadd.f32 0.0, %v1432
      %1434 = vdwg.mxu0
      %v1435 = vxor.u32 %v1389, 2147483648
      %v1436 = vxor.u32 %v1403, 2147483648
      %v1437 = vxor.u32 %v1391, 2147483648
      %v1438 = vxor.u32 %v1405, 2147483648
      %v1439 = vmul.f32 %v1435, 1.442695
      %v1440 = vpow.pop %v1439
      %v1441 = vmul.f32 %v1436, 1.442695
      %v1442 = vpow.pop %v1441
      %v1443 = vmul.f32 %v1437, 1.442695
      %v1444 = vpow.pop %v1443
      %v1445 = vmul.f32 %v1438, 1.442695
      %v1446 = vpow.pop %v1445
      %v1447 = vadd.f32 %v1440, 1.0
      %v1448 = vadd.f32 %v1442, 1.0
      %v1449 = vadd.f32 %v1444, 1.0
      %v1450 = vadd.f32 %v1446, 1.0
      %v1451 = vrcp.pop %v1447
      %v1452 = vmul.f32 %v1447, %v1451
      %v1453 = vsub.f32 1.0, %v1452
      %v1454 = vmul.f32 %v1451, %v1453
      %v1455 = vadd.f32 %v1451, %v1454
      %vm1456 = vweird.f32 %v1447
      %vm1457 = vweird.f32 %v1451
      %vm1458 = vmor %vm1456, %vm1457
      %v1459 = vsel %vm1458, %v1451, %v1455
      %v1460 = vand.u32 2147483647, %v1447
      %vm1461 = vcmp.eq.f32.partialorder %v1460, 8.507059e+37
      %v1462 = vand.u32 %v1447, 2147483648
      %v1463 = vor.u32 1.1754944e-38, %v1462
      %v1464 = vsel %vm1461, %v1463, %v1459
      %v1465 = vmul.f32 1.0, %v1464
      %v1466 = vrcp.pop %v1448
      %v1467 = vmul.f32 %v1448, %v1466
      %v1468 = vsub.f32 1.0, %v1467
      %v1469 = vmul.f32 %v1466, %v1468
      %v1470 = vadd.f32 %v1466, %v1469
      %vm1471 = vweird.f32 %v1448
      %vm1472 = vweird.f32 %v1466
      %vm1473 = vmor %vm1471, %vm1472
      %v1474 = vsel %vm1473, %v1466, %v1470
      %v1475 = vand.u32 2147483647, %v1448
      %vm1476 = vcmp.eq.f32.partialorder %v1475, 8.507059e+37
      %v1477 = vand.u32 %v1448, 2147483648
      %v1478 = vor.u32 1.1754944e-38, %v1477
      %v1479 = vsel %vm1476, %v1478, %v1474
      %v1480 = vmul.f32 1.0, %v1479
      %v1481 = vrcp.pop %v1449
      %v1482 = vmul.f32 %v1449, %v1481
      %v1483 = vsub.f32 1.0, %v1482
      %v1484 = vmul.f32 %v1481, %v1483
      %v1485 = vadd.f32 %v1481, %v1484
      %vm1486 = vweird.f32 %v1449
      %vm1487 = vweird.f32 %v1481
      %vm1488 = vmor %vm1486, %vm1487
      %v1489 = vsel %vm1488, %v1481, %v1485
      %v1490 = vand.u32 2147483647, %v1449
      %vm1491 = vcmp.eq.f32.partialorder %v1490, 8.507059e+37
      %v1492 = vand.u32 %v1449, 2147483648
      %v1493 = vor.u32 1.1754944e-38, %v1492
      %v1494 = vsel %vm1491, %v1493, %v1489
      %v1495 = vmul.f32 1.0, %v1494
      %v1496 = vrcp.pop %v1450
      %v1497 = vmul.f32 %v1450, %v1496
      %v1498 = vsub.f32 1.0, %v1497
      %v1499 = vmul.f32 %v1496, %v1498
      %v1500 = vadd.f32 %v1496, %v1499
      %vm1501 = vweird.f32 %v1450
      %vm1502 = vweird.f32 %v1496
      %vm1503 = vmor %vm1501, %vm1502
      %v1504 = vsel %vm1503, %v1496, %v1500
      %v1505 = vand.u32 2147483647, %v1450
      %vm1506 = vcmp.eq.f32.partialorder %v1505, 8.507059e+37
      %v1507 = vand.u32 %v1450, 2147483648
      %v1508 = vor.u32 1.1754944e-38, %v1507
      %v1509 = vsel %vm1506, %v1508, %v1504
      %v1510 = vmul.f32 1.0, %v1509
      %v1511 = vmul.f32 %v1389, %v1465
      %v1512 = vmul.f32 %v1403, %v1480
      %v1513 = vmul.f32 %v1391, %v1495
      %v1514 = vmul.f32 %v1405, %v1510
      %v1515 = vmul.f32 %v1511, %v1417
      %v1516 = vmul.f32 %v1512, %v1431
      %v1517 = vmul.f32 %v1513, %v1419
      %v1518 = vmul.f32 %v1514, %v1433
      %v1519 = vpack.c.bf16 %v1517, %v1515
      %v1520 = vpack.c.bf16 %v1518, %v1516
      %v1521 = vld [vmem:[#allocation11] sm:$0xf]
      %v1522 = vld [vmem:[#allocation11 + $0x4] sm:$0xf]
      %v1523 = vld [vmem:[#allocation11 + $0x8] sm:$0xf]
      %v1524 = vld [vmem:[#allocation11 + $0xc] sm:$0xf]
      %v1525 = vld [vmem:[#allocation11 + $0x10] sm:$0xf]
      %v1526 = vld [vmem:[#allocation11 + $0x14] sm:$0xf]
      %v1527 = vld [vmem:[#allocation11 + $0x18] sm:$0xf]
      %v1528 = vld [vmem:[#allocation11 + $0x1c] sm:$0xf]
      %v1529 = vld [vmem:[#allocation11 + $0x20] sm:$0xf]
      %v1530 = vld [vmem:[#allocation11 + $0x24] sm:$0xf]
      %v1531 = vld [vmem:[#allocation11 + $0x28] sm:$0xf]
      %v1532 = vld [vmem:[#allocation11 + $0x2c] sm:$0xf]
      %v1533 = vld [vmem:[#allocation11 + $0x30] sm:$0xf]
      %v1534 = vld [vmem:[#allocation11 + $0x34] sm:$0xf]
      %v1535 = vld [vmem:[#allocation11 + $0x38] sm:$0xf]
      %v1536 = vld [vmem:[#allocation11 + $0x3c] sm:$0xf]
      %v1537 = vld [vmem:[#allocation11 + $0x40] sm:$0xf]
      %v1538 = vld [vmem:[#allocation11 + $0x44] sm:$0xf]
      %v1539 = vld [vmem:[#allocation11 + $0x48] sm:$0xf]
      %v1540 = vld [vmem:[#allocation11 + $0x4c] sm:$0xf]
      %v1541 = vld [vmem:[#allocation11 + $0x50] sm:$0xf]
      %v1542 = vld [vmem:[#allocation11 + $0x54] sm:$0xf]
      %v1543 = vld [vmem:[#allocation11 + $0x58] sm:$0xf]
      %v1544 = vld [vmem:[#allocation11 + $0x5c] sm:$0xf]
      %v1545 = vld [vmem:[#allocation11 + $0x60] sm:$0xf]
      %v1546 = vld [vmem:[#allocation11 + $0x64] sm:$0xf]
      %v1547 = vld [vmem:[#allocation11 + $0x68] sm:$0xf]
      %v1548 = vld [vmem:[#allocation11 + $0x6c] sm:$0xf]
      %v1549 = vld [vmem:[#allocation11 + $0x70] sm:$0xf]
      %v1550 = vld [vmem:[#allocation11 + $0x74] sm:$0xf]
      %v1551 = vld [vmem:[#allocation11 + $0x78] sm:$0xf]
      %v1552 = vld [vmem:[#allocation11 + $0x7c] sm:$0xf]
      %v1585 = vunpack.c.l.b16 %v1521
      %v1586 = vunpack.c.l.b16 %v1522
      %v1587 = vunpack.c.l.b16 %v1523
      %v1588 = vunpack.c.l.b16 %v1524
      %v1589 = vunpack.c.l.b16 %v1525
      %v1590 = vunpack.c.l.b16 %v1526
      %v1591 = vunpack.c.l.b16 %v1527
      %v1592 = vunpack.c.l.b16 %v1528
      %v1593 = vunpack.c.l.b16 %v1529
      %v1594 = vunpack.c.l.b16 %v1530
      %v1595 = vunpack.c.l.b16 %v1531
      %v1596 = vunpack.c.l.b16 %v1532
      %v1597 = vunpack.c.l.b16 %v1533
      %v1598 = vunpack.c.l.b16 %v1534
      %v1599 = vunpack.c.l.b16 %v1535
      %v1600 = vunpack.c.l.b16 %v1536
      %v1601 = vunpack.c.l.b16 %v1537
      %v1602 = vunpack.c.l.b16 %v1538
      %v1603 = vunpack.c.l.b16 %v1539
      %v1604 = vunpack.c.l.b16 %v1540
      %v1605 = vunpack.c.l.b16 %v1541
      %v1606 = vunpack.c.l.b16 %v1542
      %v1607 = vunpack.c.l.b16 %v1543
      %v1608 = vunpack.c.l.b16 %v1544
      %v1609 = vunpack.c.l.b16 %v1545
      %v1610 = vunpack.c.l.b16 %v1546
      %v1611 = vunpack.c.l.b16 %v1547
      %v1612 = vunpack.c.l.b16 %v1548
      %v1613 = vunpack.c.l.b16 %v1549
      %v1614 = vunpack.c.l.b16 %v1550
      %v1615 = vunpack.c.l.b16 %v1551
      %v1616 = vunpack.c.l.b16 %v1552
      %v1617 = vpack.c.b16 %v1586, %v1585
      %v1618 = vpack.c.b16 %v1588, %v1587
      %v1619 = vpack.c.b16 %v1590, %v1589
      %v1620 = vpack.c.b16 %v1592, %v1591
      %v1621 = vpack.c.b16 %v1594, %v1593
      %v1622 = vpack.c.b16 %v1596, %v1595
      %v1623 = vpack.c.b16 %v1598, %v1597
      %v1624 = vpack.c.b16 %v1600, %v1599
      %v1625 = vpack.c.b16 %v1602, %v1601
      %v1626 = vpack.c.b16 %v1604, %v1603
      %v1627 = vpack.c.b16 %v1606, %v1605
      %v1628 = vpack.c.b16 %v1608, %v1607
      %v1629 = vpack.c.b16 %v1610, %v1609
      %v1630 = vpack.c.b16 %v1612, %v1611
      %v1631 = vpack.c.b16 %v1614, %v1613
      %v1632 = vpack.c.b16 %v1616, %v1615
      %1649 = vmatpush.bf16.msra.mxu0 %v1624
      %1650 = vmatpush.bf16.msra.mxu0 %v1623
      %1651 = vmatpush.bf16.msra.mxu0 %v1622
      %1652 = vmatpush.bf16.msra.mxu0 %v1621
      %1653 = vmatpush.bf16.msra.mxu0 %v1620
      %1654 = vmatpush.bf16.msra.mxu0 %v1619
      %1655 = vmatpush.bf16.msra.mxu0 %v1618
      %1656 = vmatpush.bf16.msra.mxu0 %v1617
      %1657 = vmatmul.bf16.gmra.mxu0 %v1519
      %v1658 = vpop.f32.mrf.mxu0
      %v1659 = vadd.f32 0.0, %v1658
      %v1660 = vpop.f32.mrf.mxu0
      %v1661 = vadd.f32 0.0, %v1660
      %1662 = vdwg.mxu0
      %1663 = vmatpush.bf16.msra.mxu0 %v1632
      %1664 = vmatpush.bf16.msra.mxu0 %v1631
      %1665 = vmatpush.bf16.msra.mxu0 %v1630
      %1666 = vmatpush.bf16.msra.mxu0 %v1629
      %1667 = vmatpush.bf16.msra.mxu0 %v1628
      %1668 = vmatpush.bf16.msra.mxu0 %v1627
      %1669 = vmatpush.bf16.msra.mxu0 %v1626
      %1670 = vmatpush.bf16.msra.mxu0 %v1625
      %1671 = vmatmul.bf16.gmra.mxu0 %v1520
      %v1672 = vpop.f32.mrf.mxu0
      %v1673 = vadd.f32 %v1659, %v1672
      %v1674 = vpop.f32.mrf.mxu0
      %v1675 = vadd.f32 %v1661, %v1674
      %1676 = vdwg.mxu0
      %v1677 = vadd.f32 %v1146, %v1673
      %v1678 = vadd.f32 %v1147, %v1675
      %s1679 = scalar_lea.vmem %s3, 1
      %v1680 = vld [vmem:[%s1679] sm:$0x1]
      %v1681 = vmul.f32 %v1677, %v1677
      %v1682 = vmul.f32 %v1678, %v1678
      %1683 = vadd.xlane.f32.xlu0 %v1681
      %v1684 = vpop.xlane.xlu0 %1683
      %1685 = vadd.xlane.f32.xlu0 %v1682
      %v1686 = vpop.xlane.xlu0 %1685
      %v1687 = vmul.f32 %v1684, %v417
      %v1688 = vmul.f32 %v1686, %v417
      %v1689 = vadd.f32 %v1687, 1e-05
      %v1690 = vadd.f32 %v1688, 1e-05
      %v1691 = vrsqrt.pop %v1689
      %v1692 = vmul.f32 %v1691, %v1689
      %v1693 = vmul.f32 %v1692, %v1691
      %v1694 = vmul.f32 0.5, %v1693
      %v1695 = vsub.f32 1.5, %v1694
      %v1696 = vmul.f32 %v1691, %v1695
      %vm1697 = vweird.f32 %v1689
      %vm1698 = vweird.f32 %v1691
      %vm1699 = vmor %vm1697, %vm1698
      %v1700 = vsel %vm1699, %v1691, %v1696
      %v1701 = vrsqrt.pop %v1690
      %v1702 = vmul.f32 %v1701, %v1690
      %v1703 = vmul.f32 %v1702, %v1701
      %v1704 = vmul.f32 0.5, %v1703
      %v1705 = vsub.f32 1.5, %v1704
      %v1706 = vmul.f32 %v1701, %v1705
      %vm1707 = vweird.f32 %v1690
      %vm1708 = vweird.f32 %v1701
      %vm1709 = vmor %vm1707, %vm1708
      %v1710 = vsel %vm1709, %v1701, %v1706
      %v1711 = vmul.f32 %v1677, %v1700
      %v1712 = vmul.f32 %v1678, %v1710
      %v1714 = vperm.slane %v1680, 0
      %v1716 = vmul.f32 %v1711, %v1714
      %v1717 = vmul.f32 %v1712, %v1714
      %v1718 = vpack.c.bf16 %v1717, %v1716
      %s1719 = scalar_lea.vmem [#allocation6], 192
      %v1720 = vld [vmem:[%s1719] sm:$0xff]
      %v1721 = vld [vmem:[%s1719 + $0x8] sm:$0xf]
      %v1722 = vld [vmem:[%s1719 + $0xc] sm:$0xff]
      %v1723 = vld [vmem:[%s1719 + $0x14] sm:$0xf]
      %v1724 = vld [vmem:[%s1719 + $0x18] sm:$0xff]
      %v1725 = vld [vmem:[%s1719 + $0x20] sm:$0xf]
      %v1726 = vld [vmem:[%s1719 + $0x24] sm:$0xff]
      %v1727 = vld [vmem:[%s1719 + $0x2c] sm:$0xf]
      %v1728 = vld [vmem:[%s1719 + $0x30] sm:$0xff]
      %v1729 = vld [vmem:[%s1719 + $0x38] sm:$0xf]
      %v1730 = vld [vmem:[%s1719 + $0x3c] sm:$0xff]
      %v1731 = vld [vmem:[%s1719 + $0x44] sm:$0xf]
      %v1732 = vld [vmem:[%s1719 + $0x48] sm:$0xff]
      %v1733 = vld [vmem:[%s1719 + $0x50] sm:$0xf]
      %v1734 = vld [vmem:[%s1719 + $0x54] sm:$0xff]
      %v1735 = vld [vmem:[%s1719 + $0x5c] sm:$0xf]
      %v1736 = vld [vmem:[%s1719 + $0x60] sm:$0xff]
      %v1737 = vld [vmem:[%s1719 + $0x68] sm:$0xf]
      %v1738 = vld [vmem:[%s1719 + $0x6c] sm:$0xff]
      %v1739 = vld [vmem:[%s1719 + $0x74] sm:$0xf]
      %v1740 = vld [vmem:[%s1719 + $0x78] sm:$0xff]
      %v1741 = vld [vmem:[%s1719 + $0x80] sm:$0xf]
      %v1742 = vld [vmem:[%s1719 + $0x84] sm:$0xff]
      %v1743 = vld [vmem:[%s1719 + $0x8c] sm:$0xf]
      %v1744 = vld [vmem:[%s1719 + $0x90] sm:$0xff]
      %v1745 = vld [vmem:[%s1719 + $0x98] sm:$0xf]
      %v1746 = vld [vmem:[%s1719 + $0x9c] sm:$0xff]
      %v1747 = vld [vmem:[%s1719 + $0xa4] sm:$0xf]
      %v1748 = vld [vmem:[%s1719 + $0xa8] sm:$0xff]
      %v1749 = vld [vmem:[%s1719 + $0xb0] sm:$0xf]
      %v1750 = vld [vmem:[%s1719 + $0xb4] sm:$0xff]
      %v1751 = vld [vmem:[%s1719 + $0xbc] sm:$0xf]
      %v1784 = vunpack.c.l.b16 %v1720
      %v1785 = vunpack.c.h.b16 %v1720
      %v1786 = vunpack.c.l.b16 %v1721
      %v1787 = vunpack.c.l.b16 %v1722
      %v1788 = vunpack.c.h.b16 %v1722
      %v1789 = vunpack.c.l.b16 %v1723
      %v1790 = vunpack.c.l.b16 %v1724
      %v1791 = vunpack.c.h.b16 %v1724
      %v1792 = vunpack.c.l.b16 %v1725
      %v1793 = vunpack.c.l.b16 %v1726
      %v1794 = vunpack.c.h.b16 %v1726
      %v1795 = vunpack.c.l.b16 %v1727
      %v1796 = vunpack.c.l.b16 %v1728
      %v1797 = vunpack.c.h.b16 %v1728
      %v1798 = vunpack.c.l.b16 %v1729
      %v1799 = vunpack.c.l.b16 %v1730
      %v1800 = vunpack.c.h.b16 %v1730
      %v1801 = vunpack.c.l.b16 %v1731
      %v1802 = vunpack.c.l.b16 %v1732
      %v1803 = vunpack.c.h.b16 %v1732
      %v1804 = vunpack.c.l.b16 %v1733
      %v1805 = vunpack.c.l.b16 %v1734
      %v1806 = vunpack.c.h.b16 %v1734
      %v1807 = vunpack.c.l.b16 %v1735
      %v1808 = vunpack.c.l.b16 %v1736
      %v1809 = vunpack.c.h.b16 %v1736
      %v1810 = vunpack.c.l.b16 %v1737
      %v1811 = vunpack.c.l.b16 %v1738
      %v1812 = vunpack.c.h.b16 %v1738
      %v1813 = vunpack.c.l.b16 %v1739
      %v1814 = vunpack.c.l.b16 %v1740
      %v1815 = vunpack.c.h.b16 %v1740
      %v1816 = vunpack.c.l.b16 %v1741
      %v1817 = vunpack.c.l.b16 %v1742
      %v1818 = vunpack.c.h.b16 %v1742
      %v1819 = vunpack.c.l.b16 %v1743
      %v1820 = vunpack.c.l.b16 %v1744
      %v1821 = vunpack.c.h.b16 %v1744
      %v1822 = vunpack.c.l.b16 %v1745
      %v1823 = vunpack.c.l.b16 %v1746
      %v1824 = vunpack.c.h.b16 %v1746
      %v1825 = vunpack.c.l.b16 %v1747
      %v1826 = vunpack.c.l.b16 %v1748
      %v1827 = vunpack.c.h.b16 %v1748
      %v1828 = vunpack.c.l.b16 %v1749
      %v1829 = vunpack.c.l.b16 %v1750
      %v1830 = vunpack.c.h.b16 %v1750
      %v1831 = vunpack.c.l.b16 %v1751
      %v1832 = vpack.c.b16 %v1787, %v1784
      %v1833 = vpack.c.b16 %v1788, %v1785
      %v1834 = vpack.c.b16 %v1789, %v1786
      %v1835 = vpack.c.b16 %v1793, %v1790
      %v1836 = vpack.c.b16 %v1794, %v1791
      %v1837 = vpack.c.b16 %v1795, %v1792
      %v1838 = vpack.c.b16 %v1799, %v1796
      %v1839 = vpack.c.b16 %v1800, %v1797
      %v1840 = vpack.c.b16 %v1801, %v1798
      %v1841 = vpack.c.b16 %v1805, %v1802
      %v1842 = vpack.c.b16 %v1806, %v1803
      %v1843 = vpack.c.b16 %v1807, %v1804
      %v1844 = vpack.c.b16 %v1811, %v1808
      %v1845 = vpack.c.b16 %v1812, %v1809
      %v1846 = vpack.c.b16 %v1813, %v1810
      %v1847 = vpack.c.b16 %v1817, %v1814
      %v1848 = vpack.c.b16 %v1818, %v1815
      %v1849 = vpack.c.b16 %v1819, %v1816
      %v1850 = vpack.c.b16 %v1823, %v1820
      %v1851 = vpack.c.b16 %v1824, %v1821
      %v1852 = vpack.c.b16 %v1825, %v1822
      %v1853 = vpack.c.b16 %v1829, %v1826
      %v1854 = vpack.c.b16 %v1830, %v1827
      %v1855 = vpack.c.b16 %v1831, %v1828
      %1880 = vmatpush.bf16.msra.mxu0 %v1853
      %1881 = vmatpush.bf16.msra.mxu0 %v1850
      %1882 = vmatpush.bf16.msra.mxu0 %v1847
      %1883 = vmatpush.bf16.msra.mxu0 %v1844
      %1884 = vmatpush.bf16.msra.mxu0 %v1841
      %1885 = vmatpush.bf16.msra.mxu0 %v1838
      %1886 = vmatpush.bf16.msra.mxu0 %v1835
      %1887 = vmatpush.bf16.msra.mxu0 %v1832
      %1888 = vmatmul.bf16.gmra.mxu0 %v1718
      %v1889 = vpop.f32.mrf.mxu0
      %v1890 = vadd.f32 0.0, %v1889
      %v1891 = vpop.f32.mrf.mxu0
      %v1892 = vadd.f32 0.0, %v1891
      %1893 = vdwg.mxu0
      %1894 = vmatpush.bf16.msra.mxu0 %v1854
      %1895 = vmatpush.bf16.msra.mxu0 %v1851
      %1896 = vmatpush.bf16.msra.mxu0 %v1848
      %1897 = vmatpush.bf16.msra.mxu0 %v1845
      %1898 = vmatpush.bf16.msra.mxu0 %v1842
      %1899 = vmatpush.bf16.msra.mxu0 %v1839
      %1900 = vmatpush.bf16.msra.mxu0 %v1836
      %1901 = vmatpush.bf16.msra.mxu0 %v1833
      %1902 = vmatmul.bf16.gmra.mxu0 %v1718
      %v1903 = vpop.f32.mrf.mxu0
      %v1904 = vadd.f32 0.0, %v1903
      %v1905 = vpop.f32.mrf.mxu0
      %v1906 = vadd.f32 0.0, %v1905
      %1907 = vdwg.mxu0
      %1908 = vmatpush.bf16.msra.mxu0 %v1855
      %1909 = vmatpush.bf16.msra.mxu0 %v1852
      %1910 = vmatpush.bf16.msra.mxu0 %v1849
      %1911 = vmatpush.bf16.msra.mxu0 %v1846
      %1912 = vmatpush.bf16.msra.mxu0 %v1843
      %1913 = vmatpush.bf16.msra.mxu0 %v1840
      %1914 = vmatpush.bf16.msra.mxu0 %v1837
      %1915 = vmatpush.bf16.msra.mxu0 %v1834
      %1916 = vmatmul.bf16.gmra.mxu0 %v1718
      %v1917 = vpop.f32.mrf.mxu0
      %v1918 = vadd.f32 0.0, %v1917
      %v1919 = vpop.f32.mrf.mxu0
      %v1920 = vadd.f32 0.0, %v1919
      %1921 = vdwg.mxu0
      %v1922 = vpack.c.bf16 %v1918, %v1918
      %v1923 = vpack.c.bf16 %v1920, %v1920
      %v1924 = vmul.f32 %v1890, %v199
      %v1925 = vmul.f32 %v1892, %v200
      %v1926 = vpack.c.bf16 %v1892, %v1890
      %1927 = vmatpush.bf16.msra.mxu0 %v696
      %1928 = vmatpush.bf16.msra.mxu0 %v695
      %1929 = vmatpush.bf16.msra.mxu0 %v694
      %1930 = vmatpush.bf16.msra.mxu0 %v693
      %1931 = vmatpush.bf16.msra.mxu0 %v692
      %1932 = vmatpush.bf16.msra.mxu0 %v691
      %1933 = vmatpush.bf16.msra.mxu0 %v690
      %1934 = vmatpush.bf16.msra.mxu0 %v689
      %1935 = vmatmul.bf16.gmra.mxu0 %v1926
      %v1936 = vpop.f32.mrf.mxu0
      %v1937 = vadd.f32 0.0, %v1936
      %v1938 = vpop.f32.mrf.mxu0
      %v1939 = vadd.f32 0.0, %v1938
      %1940 = vdwg.mxu0
      %v1941 = vmul.f32 %v1937, %v201
      %v1942 = vmul.f32 %v1939, %v202
      %v1943 = vadd.f32 %v1924, %v1941
      %v1944 = vadd.f32 %v1925, %v1942
      %v1945 = vmul.f32 %v1904, %v199
      %v1946 = vmul.f32 %v1906, %v200
      %v1947 = vpack.c.bf16 %v1906, %v1904
      %1948 = vmatpush.bf16.msra.mxu0 %v696
      %1949 = vmatpush.bf16.msra.mxu0 %v695
      %1950 = vmatpush.bf16.msra.mxu0 %v694
      %1951 = vmatpush.bf16.msra.mxu0 %v693
      %1952 = vmatpush.bf16.msra.mxu0 %v692
      %1953 = vmatpush.bf16.msra.mxu0 %v691
      %1954 = vmatpush.bf16.msra.mxu0 %v690
      %1955 = vmatpush.bf16.msra.mxu0 %v689
      %1956 = vmatmul.bf16.gmra.mxu0 %v1947
      %v1957 = vpop.f32.mrf.mxu0
      %v1958 = vadd.f32 0.0, %v1957
      %v1959 = vpop.f32.mrf.mxu0
      %v1960 = vadd.f32 0.0, %v1959
      %1961 = vdwg.mxu0
      %v1962 = vmul.f32 %v1958, %v201
      %v1963 = vmul.f32 %v1960, %v202
      %v1964 = vadd.f32 %v1945, %v1962
      %v1965 = vadd.f32 %v1946, %v1963
      %v1966 = vpack.c.bf16 %v1943, %v1943
      %v1967 = vpack.c.bf16 %v1944, %v1944
      %v1968 = vpack.c.bf16 %v1964, %v1964
      %v1969 = vpack.c.bf16 %v1965, %v1965
      %v1972 = vunpack.c.l.b16 %v1966
      %v1973 = vunpack.c.l.b16 %v1967
      %v1974 = vpack.c.b16 %v1973, %v1972
      %v1977 = vunpack.c.l.b16 %v1968
      %v1978 = vunpack.c.l.b16 %v1969
      %v1979 = vpack.c.b16 %v1978, %v1977
      %v1981 = vsel %vm758, %v1974, 0
      %v1984 = vsel %vm758, %v1979, 0
      %1986 = vmatpush.bf16.xpose.msra.mxu0 0
      %1987 = vmatpush.bf16.xpose.msra.mxu0 0
      %1988 = vmatpush.bf16.xpose.msra.mxu0 0
      %1989 = vmatpush.bf16.xpose.msra.mxu0 0
      %1990 = vmatpush.bf16.xpose.msra.mxu0 0
      %1991 = vmatpush.bf16.xpose.msra.mxu0 0
      %1992 = vmatpush.bf16.xpose.msra.mxu0 0
      %1993 = vmatpush.bf16.xpose.msra.mxu0 %v1984
      %1994 = vmatmul.bf16.gmra.mxu0 %v1981
      %v1995 = vpop.f32.mrf.mxu0
      %v1996 = vadd.f32 0.0, %v1995
      %v1997 = vpop.f32.mrf.mxu0
      %v1998 = vadd.f32 0.0, %v1997
      %1999 = vdwg.mxu0
      %v2000 = vsel %vm196, %v1996, -1e+30
      %v2001 = vsel %vm197, %v1998, -1e+30
      %v2002 = vsel %vm781, %v2000, -inf
      %2003 = vmax.xlane.f32.xlu0 %v2002
      %v2004 = vpop.xlane.xlu0 %2003
      %v2005 = vsel %vm781, %v2001, -inf
      %2006 = vmax.xlane.f32.xlu0 %v2005
      %v2007 = vpop.xlane.xlu0 %2006
      %v2008 = vsub.f32 %v2000, %v2004
      %v2009 = vsub.f32 %v2001, %v2007
      %v2010 = vmul.f32 %v2008, 1.442695
      %v2011 = vpow.pop %v2010
      %v2012 = vmul.f32 %v2009, 1.442695
      %v2013 = vpow.pop %v2012
      %v2014 = vsel %vm781, %v2011, 0.0
      %2015 = vadd.xlane.f32.xlu0 %v2014
      %v2016 = vpop.xlane.xlu0 %2015
      %v2017 = vsel %vm781, %v2013, 0.0
      %2018 = vadd.xlane.f32.xlu0 %v2017
      %v2019 = vpop.xlane.xlu0 %2018
      %v2020 = vrcp.pop %v2016
      %v2021 = vrcp.pop %v2019
      %v2022 = vmul.f32 %v2011, %v2020
      %v2023 = vmul.f32 %v2013, %v2021
      %v2024 = vpack.c.bf16 %v2023, %v2022
      %v2027 = vunpack.c.l.b16 %v1922
      %v2028 = vunpack.c.l.b16 %v1923
      %v2029 = vpack.c.b16 %v2028, %v2027
      %v2032 = vsel %vm781, %v2024, 0
      %2034 = vmatpush.bf16.msra.mxu0 0
      %2035 = vmatpush.bf16.msra.mxu0 0
      %2036 = vmatpush.bf16.msra.mxu0 0
      %2037 = vmatpush.bf16.msra.mxu0 0
      %2038 = vmatpush.bf16.msra.mxu0 0
      %2039 = vmatpush.bf16.msra.mxu0 0
      %2040 = vmatpush.bf16.msra.mxu0 0
      %2041 = vmatpush.bf16.msra.mxu0 %v2029
      %2042 = vmatmul.bf16.gmra.mxu0 %v2032
      %v2043 = vpop.f32.mrf.mxu0
      %v2044 = vadd.f32 0.0, %v2043
      %v2045 = vpop.f32.mrf.mxu0
      %v2046 = vadd.f32 0.0, %v2045
      %2047 = vdwg.mxu0
      %2048 = vrot.lane.b32.xlu0 %v1974, 96
      %v2049 = vpop.permute.xlu0 %2048
      %2050 = vrot.lane.b32.xlu0 %v1979, 96
      %v2051 = vpop.permute.xlu0 %2050
      %v2053 = vsel %vm758, %v2049, 0
      %v2056 = vsel %vm758, %v2051, 0
      %2058 = vmatpush.bf16.xpose.msra.mxu0 0
      %2059 = vmatpush.bf16.xpose.msra.mxu0 0
      %2060 = vmatpush.bf16.xpose.msra.mxu0 0
      %2061 = vmatpush.bf16.xpose.msra.mxu0 0
      %2062 = vmatpush.bf16.xpose.msra.mxu0 0
      %2063 = vmatpush.bf16.xpose.msra.mxu0 0
      %2064 = vmatpush.bf16.xpose.msra.mxu0 0
      %2065 = vmatpush.bf16.xpose.msra.mxu0 %v2056
      %2066 = vmatmul.bf16.gmra.mxu0 %v2053
      %v2067 = vpop.f32.mrf.mxu0
      %v2068 = vadd.f32 0.0, %v2067
      %v2069 = vpop.f32.mrf.mxu0
      %v2070 = vadd.f32 0.0, %v2069
      %2071 = vdwg.mxu0
      %v2072 = vsel %vm196, %v2068, -1e+30
      %v2073 = vsel %vm197, %v2070, -1e+30
      %v2074 = vsel %vm781, %v2072, -inf
      %2075 = vmax.xlane.f32.xlu0 %v2074
      %v2076 = vpop.xlane.xlu0 %2075
      %v2077 = vsel %vm781, %v2073, -inf
      %2078 = vmax.xlane.f32.xlu0 %v2077
      %v2079 = vpop.xlane.xlu0 %2078
      %v2080 = vsub.f32 %v2072, %v2076
      %v2081 = vsub.f32 %v2073, %v2079
      %v2082 = vmul.f32 %v2080, 1.442695
      %v2083 = vpow.pop %v2082
      %v2084 = vmul.f32 %v2081, 1.442695
      %v2085 = vpow.pop %v2084
      %v2086 = vsel %vm781, %v2083, 0.0
      %2087 = vadd.xlane.f32.xlu0 %v2086
      %v2088 = vpop.xlane.xlu0 %2087
      %v2089 = vsel %vm781, %v2085, 0.0
      %2090 = vadd.xlane.f32.xlu0 %v2089
      %v2091 = vpop.xlane.xlu0 %2090
      %v2092 = vrcp.pop %v2088
      %v2093 = vrcp.pop %v2091
      %v2094 = vmul.f32 %v2083, %v2092
      %v2095 = vmul.f32 %v2085, %v2093
      %v2096 = vpack.c.bf16 %v2095, %v2094
      %2097 = vrot.lane.b32.xlu0 %v2029, 96
      %v2098 = vpop.permute.xlu0 %2097
      %v2101 = vsel %vm781, %v2096, 0
      %2103 = vmatpush.bf16.msra.mxu0 0
      %2104 = vmatpush.bf16.msra.mxu0 0
      %2105 = vmatpush.bf16.msra.mxu0 0
      %2106 = vmatpush.bf16.msra.mxu0 0
      %2107 = vmatpush.bf16.msra.mxu0 0
      %2108 = vmatpush.bf16.msra.mxu0 0
      %2109 = vmatpush.bf16.msra.mxu0 0
      %2110 = vmatpush.bf16.msra.mxu0 %v2098
      %2111 = vmatmul.bf16.gmra.mxu0 %v2101
      %v2112 = vpop.f32.mrf.mxu0
      %v2113 = vadd.f32 0.0, %v2112
      %v2114 = vpop.f32.mrf.mxu0
      %v2115 = vadd.f32 0.0, %v2114
      %2116 = vdwg.mxu0
      %2117 = vrot.lane.b32.xlu0 %v1974, 64
      %v2118 = vpop.permute.xlu0 %2117
      %2119 = vrot.lane.b32.xlu0 %v1979, 64
      %v2120 = vpop.permute.xlu0 %2119
      %v2122 = vsel %vm758, %v2118, 0
      %v2125 = vsel %vm758, %v2120, 0
      %2127 = vmatpush.bf16.xpose.msra.mxu0 0
      %2128 = vmatpush.bf16.xpose.msra.mxu0 0
      %2129 = vmatpush.bf16.xpose.msra.mxu0 0
      %2130 = vmatpush.bf16.xpose.msra.mxu0 0
      %2131 = vmatpush.bf16.xpose.msra.mxu0 0
      %2132 = vmatpush.bf16.xpose.msra.mxu0 0
      %2133 = vmatpush.bf16.xpose.msra.mxu0 0
      %2134 = vmatpush.bf16.xpose.msra.mxu0 %v2125
      %2135 = vmatmul.bf16.gmra.mxu0 %v2122
      %v2136 = vpop.f32.mrf.mxu0
      %v2137 = vadd.f32 0.0, %v2136
      %v2138 = vpop.f32.mrf.mxu0
      %v2139 = vadd.f32 0.0, %v2138
      %2140 = vdwg.mxu0
      %v2141 = vsel %vm196, %v2137, -1e+30
      %v2142 = vsel %vm197, %v2139, -1e+30
      %v2143 = vsel %vm781, %v2141, -inf
      %2144 = vmax.xlane.f32.xlu0 %v2143
      %v2145 = vpop.xlane.xlu0 %2144
      %v2146 = vsel %vm781, %v2142, -inf
      %2147 = vmax.xlane.f32.xlu0 %v2146
      %v2148 = vpop.xlane.xlu0 %2147
      %v2149 = vsub.f32 %v2141, %v2145
      %v2150 = vsub.f32 %v2142, %v2148
      %v2151 = vmul.f32 %v2149, 1.442695
      %v2152 = vpow.pop %v2151
      %v2153 = vmul.f32 %v2150, 1.442695
      %v2154 = vpow.pop %v2153
      %v2155 = vsel %vm781, %v2152, 0.0
      %2156 = vadd.xlane.f32.xlu0 %v2155
      %v2157 = vpop.xlane.xlu0 %2156
      %v2158 = vsel %vm781, %v2154, 0.0
      %2159 = vadd.xlane.f32.xlu0 %v2158
      %v2160 = vpop.xlane.xlu0 %2159
      %v2161 = vrcp.pop %v2157
      %v2162 = vrcp.pop %v2160
      %v2163 = vmul.f32 %v2152, %v2161
      %v2164 = vmul.f32 %v2154, %v2162
      %v2165 = vpack.c.bf16 %v2164, %v2163
      %2166 = vrot.lane.b32.xlu0 %v2029, 64
      %v2167 = vpop.permute.xlu0 %2166
      %v2170 = vsel %vm781, %v2165, 0
      %2172 = vmatpush.bf16.msra.mxu0 0
      %2173 = vmatpush.bf16.msra.mxu0 0
      %2174 = vmatpush.bf16.msra.mxu0 0
      %2175 = vmatpush.bf16.msra.mxu0 0
      %2176 = vmatpush.bf16.msra.mxu0 0
      %2177 = vmatpush.bf16.msra.mxu0 0
      %2178 = vmatpush.bf16.msra.mxu0 0
      %2179 = vmatpush.bf16.msra.mxu0 %v2167
      %2180 = vmatmul.bf16.gmra.mxu0 %v2170
      %v2181 = vpop.f32.mrf.mxu0
      %v2182 = vadd.f32 0.0, %v2181
      %v2183 = vpop.f32.mrf.mxu0
      %v2184 = vadd.f32 0.0, %v2183
      %2185 = vdwg.mxu0
      %2186 = vrot.lane.b32.xlu0 %v1974, 32
      %v2187 = vpop.permute.xlu0 %2186
      %2188 = vrot.lane.b32.xlu0 %v1979, 32
      %v2189 = vpop.permute.xlu0 %2188
      %v2191 = vsel %vm758, %v2187, 0
      %v2194 = vsel %vm758, %v2189, 0
      %2196 = vmatpush.bf16.xpose.msra.mxu0 0
      %2197 = vmatpush.bf16.xpose.msra.mxu0 0
      %2198 = vmatpush.bf16.xpose.msra.mxu0 0
      %2199 = vmatpush.bf16.xpose.msra.mxu0 0
      %2200 = vmatpush.bf16.xpose.msra.mxu0 0
      %2201 = vmatpush.bf16.xpose.msra.mxu0 0
      %2202 = vmatpush.bf16.xpose.msra.mxu0 0
      %2203 = vmatpush.bf16.xpose.msra.mxu0 %v2194
      %2204 = vmatmul.bf16.gmra.mxu0 %v2191
      %v2205 = vpop.f32.mrf.mxu0
      %v2206 = vadd.f32 0.0, %v2205
      %v2207 = vpop.f32.mrf.mxu0
      %v2208 = vadd.f32 0.0, %v2207
      %2209 = vdwg.mxu0
      %v2210 = vsel %vm196, %v2206, -1e+30
      %v2211 = vsel %vm197, %v2208, -1e+30
      %v2212 = vsel %vm781, %v2210, -inf
      %2213 = vmax.xlane.f32.xlu0 %v2212
      %v2214 = vpop.xlane.xlu0 %2213
      %v2215 = vsel %vm781, %v2211, -inf
      %2216 = vmax.xlane.f32.xlu0 %v2215
      %v2217 = vpop.xlane.xlu0 %2216
      %v2218 = vsub.f32 %v2210, %v2214
      %v2219 = vsub.f32 %v2211, %v2217
      %v2220 = vmul.f32 %v2218, 1.442695
      %v2221 = vpow.pop %v2220
      %v2222 = vmul.f32 %v2219, 1.442695
      %v2223 = vpow.pop %v2222
      %v2224 = vsel %vm781, %v2221, 0.0
      %2225 = vadd.xlane.f32.xlu0 %v2224
      %v2226 = vpop.xlane.xlu0 %2225
      %v2227 = vsel %vm781, %v2223, 0.0
      %2228 = vadd.xlane.f32.xlu0 %v2227
      %v2229 = vpop.xlane.xlu0 %2228
      %v2230 = vrcp.pop %v2226
      %v2231 = vrcp.pop %v2229
      %v2232 = vmul.f32 %v2221, %v2230
      %v2233 = vmul.f32 %v2223, %v2231
      %v2234 = vpack.c.bf16 %v2233, %v2232
      %2235 = vrot.lane.b32.xlu0 %v2029, 32
      %v2236 = vpop.permute.xlu0 %2235
      %v2239 = vsel %vm781, %v2234, 0
      %2241 = vmatpush.bf16.msra.mxu0 0
      %2242 = vmatpush.bf16.msra.mxu0 0
      %2243 = vmatpush.bf16.msra.mxu0 0
      %2244 = vmatpush.bf16.msra.mxu0 0
      %2245 = vmatpush.bf16.msra.mxu0 0
      %2246 = vmatpush.bf16.msra.mxu0 0
      %2247 = vmatpush.bf16.msra.mxu0 0
      %2248 = vmatpush.bf16.msra.mxu0 %v2236
      %2249 = vmatmul.bf16.gmra.mxu0 %v2239
      %v2250 = vpop.f32.mrf.mxu0
      %v2251 = vadd.f32 0.0, %v2250
      %v2252 = vpop.f32.mrf.mxu0
      %v2253 = vadd.f32 0.0, %v2252
      %2254 = vdwg.mxu0
      %2257 = vrot.lane.b32.xlu0 %v2113, 32
      %v2258 = vpop.permute.xlu0 %2257
      %2259 = vrot.lane.b32.xlu0 %v2115, 32
      %v2260 = vpop.permute.xlu0 %2259
      %2265 = vrot.lane.b32.xlu0 %v2182, 64
      %v2266 = vpop.permute.xlu0 %2265
      %2267 = vrot.lane.b32.xlu0 %v2184, 64
      %v2268 = vpop.permute.xlu0 %2267
      %2273 = vrot.lane.b32.xlu0 %v2251, 96
      %v2274 = vpop.permute.xlu0 %2273
      %2275 = vrot.lane.b32.xlu0 %v2253, 96
      %v2276 = vpop.permute.xlu0 %2275
      %v2279 = vsel %vm758, %v2044, %v2258
      %v2280 = vsel %vm758, %v2046, %v2260
      %v2281 = vsel %vm1061, %v2279, %v2266
      %v2282 = vsel %vm1061, %v2280, %v2268
      %v2283 = vsel %vm1064, %v2281, %v2274
      %v2284 = vsel %vm1064, %v2282, %v2276
      %v2285 = vpack.c.bf16 %v2284, %v2283
      %s2286 = scalar_lea.vmem [#allocation8], 64
      %v2287 = vld [vmem:[%s2286] sm:$0xf]
      %v2288 = vld [vmem:[%s2286 + $0x4] sm:$0xf]
      %v2289 = vld [vmem:[%s2286 + $0x8] sm:$0xf]
      %v2290 = vld [vmem:[%s2286 + $0xc] sm:$0xf]
      %v2291 = vld [vmem:[%s2286 + $0x10] sm:$0xf]
      %v2292 = vld [vmem:[%s2286 + $0x14] sm:$0xf]
      %v2293 = vld [vmem:[%s2286 + $0x18] sm:$0xf]
      %v2294 = vld [vmem:[%s2286 + $0x1c] sm:$0xf]
      %v2295 = vld [vmem:[%s2286 + $0x20] sm:$0xf]
      %v2296 = vld [vmem:[%s2286 + $0x24] sm:$0xf]
      %v2297 = vld [vmem:[%s2286 + $0x28] sm:$0xf]
      %v2298 = vld [vmem:[%s2286 + $0x2c] sm:$0xf]
      %v2299 = vld [vmem:[%s2286 + $0x30] sm:$0xf]
      %v2300 = vld [vmem:[%s2286 + $0x34] sm:$0xf]
      %v2301 = vld [vmem:[%s2286 + $0x38] sm:$0xf]
      %v2302 = vld [vmem:[%s2286 + $0x3c] sm:$0xf]
      %v2319 = vunpack.c.l.b16 %v2287
      %v2320 = vunpack.c.l.b16 %v2288
      %v2321 = vunpack.c.l.b16 %v2289
      %v2322 = vunpack.c.l.b16 %v2290
      %v2323 = vunpack.c.l.b16 %v2291
      %v2324 = vunpack.c.l.b16 %v2292
      %v2325 = vunpack.c.l.b16 %v2293
      %v2326 = vunpack.c.l.b16 %v2294
      %v2327 = vunpack.c.l.b16 %v2295
      %v2328 = vunpack.c.l.b16 %v2296
      %v2329 = vunpack.c.l.b16 %v2297
      %v2330 = vunpack.c.l.b16 %v2298
      %v2331 = vunpack.c.l.b16 %v2299
      %v2332 = vunpack.c.l.b16 %v2300
      %v2333 = vunpack.c.l.b16 %v2301
      %v2334 = vunpack.c.l.b16 %v2302
      %v2335 = vpack.c.b16 %v2320, %v2319
      %v2336 = vpack.c.b16 %v2322, %v2321
      %v2337 = vpack.c.b16 %v2324, %v2323
      %v2338 = vpack.c.b16 %v2326, %v2325
      %v2339 = vpack.c.b16 %v2328, %v2327
      %v2340 = vpack.c.b16 %v2330, %v2329
      %v2341 = vpack.c.b16 %v2332, %v2331
      %v2342 = vpack.c.b16 %v2334, %v2333
      %2351 = vmatpush.bf16.msra.mxu0 %v2342
      %2352 = vmatpush.bf16.msra.mxu0 %v2341
      %2353 = vmatpush.bf16.msra.mxu0 %v2340
      %2354 = vmatpush.bf16.msra.mxu0 %v2339
      %2355 = vmatpush.bf16.msra.mxu0 %v2338
      %2356 = vmatpush.bf16.msra.mxu0 %v2337
      %2357 = vmatpush.bf16.msra.mxu0 %v2336
      %2358 = vmatpush.bf16.msra.mxu0 %v2335
      %2359 = vmatmul.bf16.gmra.mxu0 %v2285
      %v2360 = vpop.f32.mrf.mxu0
      %v2361 = vadd.f32 0.0, %v2360
      %v2362 = vpop.f32.mrf.mxu0
      %v2363 = vadd.f32 0.0, %v2362
      %2364 = vdwg.mxu0
      %v2365 = vadd.f32 %v1677, %v2361
      %v2366 = vadd.f32 %v1678, %v2363
      %s2367 = scalar_lea.vmem %s6, 1
      %v2368 = vld [vmem:[%s2367] sm:$0x1]
      %v2369 = vmul.f32 %v2365, %v2365
      %v2370 = vmul.f32 %v2366, %v2366
      %2371 = vadd.xlane.f32.xlu0 %v2369
      %v2372 = vpop.xlane.xlu0 %2371
      %2373 = vadd.xlane.f32.xlu0 %v2370
      %v2374 = vpop.xlane.xlu0 %2373
      %v2375 = vmul.f32 %v2372, %v417
      %v2376 = vmul.f32 %v2374, %v417
      %v2377 = vadd.f32 %v2375, 1e-05
      %v2378 = vadd.f32 %v2376, 1e-05
      %v2379 = vrsqrt.pop %v2377
      %v2380 = vmul.f32 %v2379, %v2377
      %v2381 = vmul.f32 %v2380, %v2379
      %v2382 = vmul.f32 0.5, %v2381
      %v2383 = vsub.f32 1.5, %v2382
      %v2384 = vmul.f32 %v2379, %v2383
      %vm2385 = vweird.f32 %v2377
      %vm2386 = vweird.f32 %v2379
      %vm2387 = vmor %vm2385, %vm2386
      %v2388 = vsel %vm2387, %v2379, %v2384
      %v2389 = vrsqrt.pop %v2378
      %v2390 = vmul.f32 %v2389, %v2378
      %v2391 = vmul.f32 %v2390, %v2389
      %v2392 = vmul.f32 0.5, %v2391
      %v2393 = vsub.f32 1.5, %v2392
      %v2394 = vmul.f32 %v2389, %v2393
      %vm2395 = vweird.f32 %v2378
      %vm2396 = vweird.f32 %v2389
      %vm2397 = vmor %vm2395, %vm2396
      %v2398 = vsel %vm2397, %v2389, %v2394
      %v2399 = vmul.f32 %v2365, %v2388
      %v2400 = vmul.f32 %v2366, %v2398
      %v2402 = vperm.slane %v2368, 0
      %v2404 = vmul.f32 %v2399, %v2402
      %v2405 = vmul.f32 %v2400, %v2402
      %v2406 = vpack.c.bf16 %v2405, %v2404
      %s2407 = scalar_lea.vmem [#allocation9], 256
      %v2408 = vld [vmem:[%s2407] sm:$0xff]
      %v2409 = vld [vmem:[%s2407 + $0x8] sm:$0xff]
      %v2410 = vld [vmem:[%s2407 + $0x10] sm:$0xff]
      %v2411 = vld [vmem:[%s2407 + $0x18] sm:$0xff]
      %v2412 = vld [vmem:[%s2407 + $0x20] sm:$0xff]
      %v2413 = vld [vmem:[%s2407 + $0x28] sm:$0xff]
      %v2414 = vld [vmem:[%s2407 + $0x30] sm:$0xff]
      %v2415 = vld [vmem:[%s2407 + $0x38] sm:$0xff]
      %v2416 = vld [vmem:[%s2407 + $0x40] sm:$0xff]
      %v2417 = vld [vmem:[%s2407 + $0x48] sm:$0xff]
      %v2418 = vld [vmem:[%s2407 + $0x50] sm:$0xff]
      %v2419 = vld [vmem:[%s2407 + $0x58] sm:$0xff]
      %v2420 = vld [vmem:[%s2407 + $0x60] sm:$0xff]
      %v2421 = vld [vmem:[%s2407 + $0x68] sm:$0xff]
      %v2422 = vld [vmem:[%s2407 + $0x70] sm:$0xff]
      %v2423 = vld [vmem:[%s2407 + $0x78] sm:$0xff]
      %v2424 = vld [vmem:[%s2407 + $0x80] sm:$0xff]
      %v2425 = vld [vmem:[%s2407 + $0x88] sm:$0xff]
      %v2426 = vld [vmem:[%s2407 + $0x90] sm:$0xff]
      %v2427 = vld [vmem:[%s2407 + $0x98] sm:$0xff]
      %v2428 = vld [vmem:[%s2407 + $0xa0] sm:$0xff]
      %v2429 = vld [vmem:[%s2407 + $0xa8] sm:$0xff]
      %v2430 = vld [vmem:[%s2407 + $0xb0] sm:$0xff]
      %v2431 = vld [vmem:[%s2407 + $0xb8] sm:$0xff]
      %v2432 = vld [vmem:[%s2407 + $0xc0] sm:$0xff]
      %v2433 = vld [vmem:[%s2407 + $0xc8] sm:$0xff]
      %v2434 = vld [vmem:[%s2407 + $0xd0] sm:$0xff]
      %v2435 = vld [vmem:[%s2407 + $0xd8] sm:$0xff]
      %v2436 = vld [vmem:[%s2407 + $0xe0] sm:$0xff]
      %v2437 = vld [vmem:[%s2407 + $0xe8] sm:$0xff]
      %v2438 = vld [vmem:[%s2407 + $0xf0] sm:$0xff]
      %v2439 = vld [vmem:[%s2407 + $0xf8] sm:$0xff]
      %v2472 = vunpack.c.l.b16 %v2408
      %v2473 = vunpack.c.h.b16 %v2408
      %v2474 = vunpack.c.l.b16 %v2409
      %v2475 = vunpack.c.h.b16 %v2409
      %v2476 = vunpack.c.l.b16 %v2410
      %v2477 = vunpack.c.h.b16 %v2410
      %v2478 = vunpack.c.l.b16 %v2411
      %v2479 = vunpack.c.h.b16 %v2411
      %v2480 = vunpack.c.l.b16 %v2412
      %v2481 = vunpack.c.h.b16 %v2412
      %v2482 = vunpack.c.l.b16 %v2413
      %v2483 = vunpack.c.h.b16 %v2413
      %v2484 = vunpack.c.l.b16 %v2414
      %v2485 = vunpack.c.h.b16 %v2414
      %v2486 = vunpack.c.l.b16 %v2415
      %v2487 = vunpack.c.h.b16 %v2415
      %v2488 = vunpack.c.l.b16 %v2416
      %v2489 = vunpack.c.h.b16 %v2416
      %v2490 = vunpack.c.l.b16 %v2417
      %v2491 = vunpack.c.h.b16 %v2417
      %v2492 = vunpack.c.l.b16 %v2418
      %v2493 = vunpack.c.h.b16 %v2418
      %v2494 = vunpack.c.l.b16 %v2419
      %v2495 = vunpack.c.h.b16 %v2419
      %v2496 = vunpack.c.l.b16 %v2420
      %v2497 = vunpack.c.h.b16 %v2420
      %v2498 = vunpack.c.l.b16 %v2421
      %v2499 = vunpack.c.h.b16 %v2421
      %v2500 = vunpack.c.l.b16 %v2422
      %v2501 = vunpack.c.h.b16 %v2422
      %v2502 = vunpack.c.l.b16 %v2423
      %v2503 = vunpack.c.h.b16 %v2423
      %v2504 = vunpack.c.l.b16 %v2424
      %v2505 = vunpack.c.h.b16 %v2424
      %v2506 = vunpack.c.l.b16 %v2425
      %v2507 = vunpack.c.h.b16 %v2425
      %v2508 = vunpack.c.l.b16 %v2426
      %v2509 = vunpack.c.h.b16 %v2426
      %v2510 = vunpack.c.l.b16 %v2427
      %v2511 = vunpack.c.h.b16 %v2427
      %v2512 = vunpack.c.l.b16 %v2428
      %v2513 = vunpack.c.h.b16 %v2428
      %v2514 = vunpack.c.l.b16 %v2429
      %v2515 = vunpack.c.h.b16 %v2429
      %v2516 = vunpack.c.l.b16 %v2430
      %v2517 = vunpack.c.h.b16 %v2430
      %v2518 = vunpack.c.l.b16 %v2431
      %v2519 = vunpack.c.h.b16 %v2431
      %v2520 = vunpack.c.l.b16 %v2432
      %v2521 = vunpack.c.h.b16 %v2432
      %v2522 = vunpack.c.l.b16 %v2433
      %v2523 = vunpack.c.h.b16 %v2433
      %v2524 = vunpack.c.l.b16 %v2434
      %v2525 = vunpack.c.h.b16 %v2434
      %v2526 = vunpack.c.l.b16 %v2435
      %v2527 = vunpack.c.h.b16 %v2435
      %v2528 = vunpack.c.l.b16 %v2436
      %v2529 = vunpack.c.h.b16 %v2436
      %v2530 = vunpack.c.l.b16 %v2437
      %v2531 = vunpack.c.h.b16 %v2437
      %v2532 = vunpack.c.l.b16 %v2438
      %v2533 = vunpack.c.h.b16 %v2438
      %v2534 = vunpack.c.l.b16 %v2439
      %v2535 = vunpack.c.h.b16 %v2439
      %v2536 = vpack.c.b16 %v2476, %v2472
      %v2537 = vpack.c.b16 %v2477, %v2473
      %v2538 = vpack.c.b16 %v2478, %v2474
      %v2539 = vpack.c.b16 %v2479, %v2475
      %v2540 = vpack.c.b16 %v2484, %v2480
      %v2541 = vpack.c.b16 %v2485, %v2481
      %v2542 = vpack.c.b16 %v2486, %v2482
      %v2543 = vpack.c.b16 %v2487, %v2483
      %v2544 = vpack.c.b16 %v2492, %v2488
      %v2545 = vpack.c.b16 %v2493, %v2489
      %v2546 = vpack.c.b16 %v2494, %v2490
      %v2547 = vpack.c.b16 %v2495, %v2491
      %v2548 = vpack.c.b16 %v2500, %v2496
      %v2549 = vpack.c.b16 %v2501, %v2497
      %v2550 = vpack.c.b16 %v2502, %v2498
      %v2551 = vpack.c.b16 %v2503, %v2499
      %v2552 = vpack.c.b16 %v2508, %v2504
      %v2553 = vpack.c.b16 %v2509, %v2505
      %v2554 = vpack.c.b16 %v2510, %v2506
      %v2555 = vpack.c.b16 %v2511, %v2507
      %v2556 = vpack.c.b16 %v2516, %v2512
      %v2557 = vpack.c.b16 %v2517, %v2513
      %v2558 = vpack.c.b16 %v2518, %v2514
      %v2559 = vpack.c.b16 %v2519, %v2515
      %v2560 = vpack.c.b16 %v2524, %v2520
      %v2561 = vpack.c.b16 %v2525, %v2521
      %v2562 = vpack.c.b16 %v2526, %v2522
      %v2563 = vpack.c.b16 %v2527, %v2523
      %v2564 = vpack.c.b16 %v2532, %v2528
      %v2565 = vpack.c.b16 %v2533, %v2529
      %v2566 = vpack.c.b16 %v2534, %v2530
      %v2567 = vpack.c.b16 %v2535, %v2531
      %2600 = vmatpush.bf16.msra.mxu0 %v2564
      %2601 = vmatpush.bf16.msra.mxu0 %v2560
      %2602 = vmatpush.bf16.msra.mxu0 %v2556
      %2603 = vmatpush.bf16.msra.mxu0 %v2552
      %2604 = vmatpush.bf16.msra.mxu0 %v2548
      %2605 = vmatpush.bf16.msra.mxu0 %v2544
      %2606 = vmatpush.bf16.msra.mxu0 %v2540
      %2607 = vmatpush.bf16.msra.mxu0 %v2536
      %2608 = vmatmul.bf16.gmra.mxu0 %v2406
      %v2609 = vpop.f32.mrf.mxu0
      %v2610 = vadd.f32 0.0, %v2609
      %v2611 = vpop.f32.mrf.mxu0
      %v2612 = vadd.f32 0.0, %v2611
      %2613 = vdwg.mxu0
      %2614 = vmatpush.bf16.msra.mxu0 %v2565
      %2615 = vmatpush.bf16.msra.mxu0 %v2561
      %2616 = vmatpush.bf16.msra.mxu0 %v2557
      %2617 = vmatpush.bf16.msra.mxu0 %v2553
      %2618 = vmatpush.bf16.msra.mxu0 %v2549
      %2619 = vmatpush.bf16.msra.mxu0 %v2545
      %2620 = vmatpush.bf16.msra.mxu0 %v2541
      %2621 = vmatpush.bf16.msra.mxu0 %v2537
      %2622 = vmatmul.bf16.gmra.mxu0 %v2406
      %v2623 = vpop.f32.mrf.mxu0
      %v2624 = vadd.f32 0.0, %v2623
      %v2625 = vpop.f32.mrf.mxu0
      %v2626 = vadd.f32 0.0, %v2625
      %2627 = vdwg.mxu0
      %2628 = vmatpush.bf16.msra.mxu0 %v2566
      %2629 = vmatpush.bf16.msra.mxu0 %v2562
      %2630 = vmatpush.bf16.msra.mxu0 %v2558
      %2631 = vmatpush.bf16.msra.mxu0 %v2554
      %2632 = vmatpush.bf16.msra.mxu0 %v2550
      %2633 = vmatpush.bf16.msra.mxu0 %v2546
      %2634 = vmatpush.bf16.msra.mxu0 %v2542
      %2635 = vmatpush.bf16.msra.mxu0 %v2538
      %2636 = vmatmul.bf16.gmra.mxu0 %v2406
      %v2637 = vpop.f32.mrf.mxu0
      %v2638 = vadd.f32 0.0, %v2637
      %v2639 = vpop.f32.mrf.mxu0
      %v2640 = vadd.f32 0.0, %v2639
      %2641 = vdwg.mxu0
      %2642 = vmatpush.bf16.msra.mxu0 %v2567
      %2643 = vmatpush.bf16.msra.mxu0 %v2563
      %2644 = vmatpush.bf16.msra.mxu0 %v2559
      %2645 = vmatpush.bf16.msra.mxu0 %v2555
      %2646 = vmatpush.bf16.msra.mxu0 %v2551
      %2647 = vmatpush.bf16.msra.mxu0 %v2547
      %2648 = vmatpush.bf16.msra.mxu0 %v2543
      %2649 = vmatpush.bf16.msra.mxu0 %v2539
      %2650 = vmatmul.bf16.gmra.mxu0 %v2406
      %v2651 = vpop.f32.mrf.mxu0
      %v2652 = vadd.f32 0.0, %v2651
      %v2653 = vpop.f32.mrf.mxu0
      %v2654 = vadd.f32 0.0, %v2653
      %2655 = vdwg.mxu0
      %v2656 = vxor.u32 %v2610, 2147483648
      %v2657 = vxor.u32 %v2624, 2147483648
      %v2658 = vxor.u32 %v2612, 2147483648
      %v2659 = vxor.u32 %v2626, 2147483648
      %v2660 = vmul.f32 %v2656, 1.442695
      %v2661 = vpow.pop %v2660
      %v2662 = vmul.f32 %v2657, 1.442695
      %v2663 = vpow.pop %v2662
      %v2664 = vmul.f32 %v2658, 1.442695
      %v2665 = vpow.pop %v2664
      %v2666 = vmul.f32 %v2659, 1.442695
      %v2667 = vpow.pop %v2666
      %v2668 = vadd.f32 %v2661, 1.0
      %v2669 = vadd.f32 %v2663, 1.0
      %v2670 = vadd.f32 %v2665, 1.0
      %v2671 = vadd.f32 %v2667, 1.0
      %v2672 = vrcp.pop %v2668
      %v2673 = vmul.f32 %v2668, %v2672
      %v2674 = vsub.f32 1.0, %v2673
      %v2675 = vmul.f32 %v2672, %v2674
      %v2676 = vadd.f32 %v2672, %v2675
      %vm2677 = vweird.f32 %v2668
      %vm2678 = vweird.f32 %v2672
      %vm2679 = vmor %vm2677, %vm2678
      %v2680 = vsel %vm2679, %v2672, %v2676
      %v2681 = vand.u32 2147483647, %v2668
      %vm2682 = vcmp.eq.f32.partialorder %v2681, 8.507059e+37
      %v2683 = vand.u32 %v2668, 2147483648
      %v2684 = vor.u32 1.1754944e-38, %v2683
      %v2685 = vsel %vm2682, %v2684, %v2680
      %v2686 = vmul.f32 1.0, %v2685
      %v2687 = vrcp.pop %v2669
      %v2688 = vmul.f32 %v2669, %v2687
      %v2689 = vsub.f32 1.0, %v2688
      %v2690 = vmul.f32 %v2687, %v2689
      %v2691 = vadd.f32 %v2687, %v2690
      %vm2692 = vweird.f32 %v2669
      %vm2693 = vweird.f32 %v2687
      %vm2694 = vmor %vm2692, %vm2693
      %v2695 = vsel %vm2694, %v2687, %v2691
      %v2696 = vand.u32 2147483647, %v2669
      %vm2697 = vcmp.eq.f32.partialorder %v2696, 8.507059e+37
      %v2698 = vand.u32 %v2669, 2147483648
      %v2699 = vor.u32 1.1754944e-38, %v2698
      %v2700 = vsel %vm2697, %v2699, %v2695
      %v2701 = vmul.f32 1.0, %v2700
      %v2702 = vrcp.pop %v2670
      %v2703 = vmul.f32 %v2670, %v2702
      %v2704 = vsub.f32 1.0, %v2703
      %v2705 = vmul.f32 %v2702, %v2704
      %v2706 = vadd.f32 %v2702, %v2705
      %vm2707 = vweird.f32 %v2670
      %vm2708 = vweird.f32 %v2702
      %vm2709 = vmor %vm2707, %vm2708
      %v2710 = vsel %vm2709, %v2702, %v2706
      %v2711 = vand.u32 2147483647, %v2670
      %vm2712 = vcmp.eq.f32.partialorder %v2711, 8.507059e+37
      %v2713 = vand.u32 %v2670, 2147483648
      %v2714 = vor.u32 1.1754944e-38, %v2713
      %v2715 = vsel %vm2712, %v2714, %v2710
      %v2716 = vmul.f32 1.0, %v2715
      %v2717 = vrcp.pop %v2671
      %v2718 = vmul.f32 %v2671, %v2717
      %v2719 = vsub.f32 1.0, %v2718
      %v2720 = vmul.f32 %v2717, %v2719
      %v2721 = vadd.f32 %v2717, %v2720
      %vm2722 = vweird.f32 %v2671
      %vm2723 = vweird.f32 %v2717
      %vm2724 = vmor %vm2722, %vm2723
      %v2725 = vsel %vm2724, %v2717, %v2721
      %v2726 = vand.u32 2147483647, %v2671
      %vm2727 = vcmp.eq.f32.partialorder %v2726, 8.507059e+37
      %v2728 = vand.u32 %v2671, 2147483648
      %v2729 = vor.u32 1.1754944e-38, %v2728
      %v2730 = vsel %vm2727, %v2729, %v2725
      %v2731 = vmul.f32 1.0, %v2730
      %v2732 = vmul.f32 %v2610, %v2686
      %v2733 = vmul.f32 %v2624, %v2701
      %v2734 = vmul.f32 %v2612, %v2716
      %v2735 = vmul.f32 %v2626, %v2731
      %v2736 = vmul.f32 %v2732, %v2638
      %v2737 = vmul.f32 %v2733, %v2652
      %v2738 = vmul.f32 %v2734, %v2640
      %v2739 = vmul.f32 %v2735, %v2654
      %v2740 = vpack.c.bf16 %v2738, %v2736
      %v2741 = vpack.c.bf16 %v2739, %v2737
      %s2742 = scalar_lea.vmem [#allocation11], 128
      %v2743 = vld [vmem:[%s2742] sm:$0xf]
      %v2744 = vld [vmem:[%s2742 + $0x4] sm:$0xf]
      %v2745 = vld [vmem:[%s2742 + $0x8] sm:$0xf]
      %v2746 = vld [vmem:[%s2742 + $0xc] sm:$0xf]
      %v2747 = vld [vmem:[%s2742 + $0x10] sm:$0xf]
      %v2748 = vld [vmem:[%s2742 + $0x14] sm:$0xf]
      %v2749 = vld [vmem:[%s2742 + $0x18] sm:$0xf]
      %v2750 = vld [vmem:[%s2742 + $0x1c] sm:$0xf]
      %v2751 = vld [vmem:[%s2742 + $0x20] sm:$0xf]
      %v2752 = vld [vmem:[%s2742 + $0x24] sm:$0xf]
      %v2753 = vld [vmem:[%s2742 + $0x28] sm:$0xf]
      %v2754 = vld [vmem:[%s2742 + $0x2c] sm:$0xf]
      %v2755 = vld [vmem:[%s2742 + $0x30] sm:$0xf]
      %v2756 = vld [vmem:[%s2742 + $0x34] sm:$0xf]
      %v2757 = vld [vmem:[%s2742 + $0x38] sm:$0xf]
      %v2758 = vld [vmem:[%s2742 + $0x3c] sm:$0xf]
      %v2759 = vld [vmem:[%s2742 + $0x40] sm:$0xf]
      %v2760 = vld [vmem:[%s2742 + $0x44] sm:$0xf]
      %v2761 = vld [vmem:[%s2742 + $0x48] sm:$0xf]
      %v2762 = vld [vmem:[%s2742 + $0x4c] sm:$0xf]
      %v2763 = vld [vmem:[%s2742 + $0x50] sm:$0xf]
      %v2764 = vld [vmem:[%s2742 + $0x54] sm:$0xf]
      %v2765 = vld [vmem:[%s2742 + $0x58] sm:$0xf]
      %v2766 = vld [vmem:[%s2742 + $0x5c] sm:$0xf]
      %v2767 = vld [vmem:[%s2742 + $0x60] sm:$0xf]
      %v2768 = vld [vmem:[%s2742 + $0x64] sm:$0xf]
      %v2769 = vld [vmem:[%s2742 + $0x68] sm:$0xf]
      %v2770 = vld [vmem:[%s2742 + $0x6c] sm:$0xf]
      %v2771 = vld [vmem:[%s2742 + $0x70] sm:$0xf]
      %v2772 = vld [vmem:[%s2742 + $0x74] sm:$0xf]
      %v2773 = vld [vmem:[%s2742 + $0x78] sm:$0xf]
      %v2774 = vld [vmem:[%s2742 + $0x7c] sm:$0xf]
      %v2807 = vunpack.c.l.b16 %v2743
      %v2808 = vunpack.c.l.b16 %v2744
      %v2809 = vunpack.c.l.b16 %v2745
      %v2810 = vunpack.c.l.b16 %v2746
      %v2811 = vunpack.c.l.b16 %v2747
      %v2812 = vunpack.c.l.b16 %v2748
      %v2813 = vunpack.c.l.b16 %v2749
      %v2814 = vunpack.c.l.b16 %v2750
      %v2815 = vunpack.c.l.b16 %v2751
      %v2816 = vunpack.c.l.b16 %v2752
      %v2817 = vunpack.c.l.b16 %v2753
      %v2818 = vunpack.c.l.b16 %v2754
      %v2819 = vunpack.c.l.b16 %v2755
      %v2820 = vunpack.c.l.b16 %v2756
      %v2821 = vunpack.c.l.b16 %v2757
      %v2822 = vunpack.c.l.b16 %v2758
      %v2823 = vunpack.c.l.b16 %v2759
      %v2824 = vunpack.c.l.b16 %v2760
      %v2825 = vunpack.c.l.b16 %v2761
      %v2826 = vunpack.c.l.b16 %v2762
      %v2827 = vunpack.c.l.b16 %v2763
      %v2828 = vunpack.c.l.b16 %v2764
      %v2829 = vunpack.c.l.b16 %v2765
      %v2830 = vunpack.c.l.b16 %v2766
      %v2831 = vunpack.c.l.b16 %v2767
      %v2832 = vunpack.c.l.b16 %v2768
      %v2833 = vunpack.c.l.b16 %v2769
      %v2834 = vunpack.c.l.b16 %v2770
      %v2835 = vunpack.c.l.b16 %v2771
      %v2836 = vunpack.c.l.b16 %v2772
      %v2837 = vunpack.c.l.b16 %v2773
      %v2838 = vunpack.c.l.b16 %v2774
      %v2839 = vpack.c.b16 %v2808, %v2807
      %v2840 = vpack.c.b16 %v2810, %v2809
      %v2841 = vpack.c.b16 %v2812, %v2811
      %v2842 = vpack.c.b16 %v2814, %v2813
      %v2843 = vpack.c.b16 %v2816, %v2815
      %v2844 = vpack.c.b16 %v2818, %v2817
      %v2845 = vpack.c.b16 %v2820, %v2819
      %v2846 = vpack.c.b16 %v2822, %v2821
      %v2847 = vpack.c.b16 %v2824, %v2823
      %v2848 = vpack.c.b16 %v2826, %v2825
      %v2849 = vpack.c.b16 %v2828, %v2827
      %v2850 = vpack.c.b16 %v2830, %v2829
      %v2851 = vpack.c.b16 %v2832, %v2831
      %v2852 = vpack.c.b16 %v2834, %v2833
      %v2853 = vpack.c.b16 %v2836, %v2835
      %v2854 = vpack.c.b16 %v2838, %v2837
      %2871 = vmatpush.bf16.msra.mxu0 %v2846
      %2872 = vmatpush.bf16.msra.mxu0 %v2845
      %2873 = vmatpush.bf16.msra.mxu0 %v2844
      %2874 = vmatpush.bf16.msra.mxu0 %v2843
      %2875 = vmatpush.bf16.msra.mxu0 %v2842
      %2876 = vmatpush.bf16.msra.mxu0 %v2841
      %2877 = vmatpush.bf16.msra.mxu0 %v2840
      %2878 = vmatpush.bf16.msra.mxu0 %v2839
      %2879 = vmatmul.bf16.gmra.mxu0 %v2740
      %v2880 = vpop.f32.mrf.mxu0
      %v2881 = vadd.f32 0.0, %v2880
      %v2882 = vpop.f32.mrf.mxu0
      %v2883 = vadd.f32 0.0, %v2882
      %2884 = vdwg.mxu0
      %2885 = vmatpush.bf16.msra.mxu0 %v2854
      %2886 = vmatpush.bf16.msra.mxu0 %v2853
      %2887 = vmatpush.bf16.msra.mxu0 %v2852
      %2888 = vmatpush.bf16.msra.mxu0 %v2851
      %2889 = vmatpush.bf16.msra.mxu0 %v2850
      %2890 = vmatpush.bf16.msra.mxu0 %v2849
      %2891 = vmatpush.bf16.msra.mxu0 %v2848
      %2892 = vmatpush.bf16.msra.mxu0 %v2847
      %2893 = vmatmul.bf16.gmra.mxu0 %v2741
      %v2894 = vpop.f32.mrf.mxu0
      %v2895 = vadd.f32 %v2881, %v2894
      %v2896 = vpop.f32.mrf.mxu0
      %v2897 = vadd.f32 %v2883, %v2896
      %2898 = vdwg.mxu0
      %v2899 = vadd.f32 %v2365, %v2895
      %v2900 = vadd.f32 %v2366, %v2897
      %v2901 = vsub.s32 %v214, 1
      %v2902 = vperm.slane %v2901, 0
      %vm2903 = vcmp.eq.s32.totalorder %v192, %v2902
      %vm2904 = vcmp.eq.s32.totalorder %v193, %v2902
      %v2905 = vsel %vm2903, 1.0, 0.0
      %v2906 = vsel %vm2904, 1.0, 0.0
      %2908 = vset.pattern.permute.xlu0 0
      %2909 = vperm.xlu0 %2908, %v2905
      %v2910 = vpop.permute.xlu0 %2909
      %2913 = vset.pattern.permute.xlu0 0
      %2914 = vperm.xlu0 %2913, %v2906
      %v2915 = vpop.permute.xlu0 %2914
      %v2917 = vmul.f32 %v2899, %v2910
      %v2918 = vmul.f32 %v2900, %v2915
      %v2919 = vadd.f32 %v2917, %v2918
      %v2920 = vrot.slane %v2919, 4
      %v2921 = vadd.f32 %v2919, %v2920
      %v2922 = vrot.slane %v2921, 2
      %v2923 = vadd.f32 %v2921, %v2922
      %v2924 = vrot.slane %v2923, 1
      %v2925 = vadd.f32 %v2923, %v2924
      %v2926 = vld [vmem:[#allocation12] sm:$0x1]
      %v2927 = vmul.f32 %v2925, %v2925
      %2928 = vadd.xlane.f32.xlu0 %v2927
      %v2929 = vpop.xlane.xlu0 %2928
      %v2930 = vmul.f32 %v2929, %v417
      %v2931 = vadd.f32 %v2930, 1e-05
      %v2932 = vrsqrt.pop %v2931
      %v2933 = vmul.f32 %v2932, %v2931
      %v2934 = vmul.f32 %v2933, %v2932
      %v2935 = vmul.f32 0.5, %v2934
      %v2936 = vsub.f32 1.5, %v2935
      %v2937 = vmul.f32 %v2932, %v2936
      %vm2938 = vweird.f32 %v2931
      %vm2939 = vweird.f32 %v2932
      %vm2940 = vmor %vm2938, %vm2939
      %v2941 = vsel %vm2940, %v2932, %v2937
      %v2942 = vmul.f32 %v2925, %v2941
      %v2943 = vmul.f32 %v2942, %v2926
      %v2944 = vpack.c.bf16 %v2943, %v2943
      %v2945 = vld [vmem:[#allocation14] sm:$0xff]
      %v2946 = vld [vmem:[#allocation14 + $0x8] sm:$0xff]
      %v2947 = vld [vmem:[#allocation14 + $0x10] sm:$0xff]
      %v2948 = vld [vmem:[#allocation14 + $0x18] sm:$0xff]
      %v2949 = vld [vmem:[#allocation14 + $0x20] sm:$0xff]
      %v2950 = vld [vmem:[#allocation14 + $0x28] sm:$0xff]
      %v2951 = vld [vmem:[#allocation14 + $0x30] sm:$0xff]
      %v2952 = vld [vmem:[#allocation14 + $0x38] sm:$0xff]
      %v2953 = vld [vmem:[#allocation14 + $0x40] sm:$0xff]
      %v2954 = vld [vmem:[#allocation14 + $0x48] sm:$0xff]
      %v2955 = vld [vmem:[#allocation14 + $0x50] sm:$0xff]
      %v2956 = vld [vmem:[#allocation14 + $0x58] sm:$0xff]
      %v2957 = vld [vmem:[#allocation14 + $0x60] sm:$0xff]
      %v2958 = vld [vmem:[#allocation14 + $0x68] sm:$0xff]
      %v2959 = vld [vmem:[#allocation14 + $0x70] sm:$0xff]
      %v2960 = vld [vmem:[#allocation14 + $0x78] sm:$0xff]
      %v2977 = vunpack.c.l.b16 %v2945
      %v2978 = vunpack.c.h.b16 %v2945
      %v2979 = vunpack.c.l.b16 %v2946
      %v2980 = vunpack.c.h.b16 %v2946
      %v2981 = vunpack.c.l.b16 %v2947
      %v2982 = vunpack.c.h.b16 %v2947
      %v2983 = vunpack.c.l.b16 %v2948
      %v2984 = vunpack.c.h.b16 %v2948
      %v2985 = vunpack.c.l.b16 %v2949
      %v2986 = vunpack.c.h.b16 %v2949
      %v2987 = vunpack.c.l.b16 %v2950
      %v2988 = vunpack.c.h.b16 %v2950
      %v2989 = vunpack.c.l.b16 %v2951
      %v2990 = vunpack.c.h.b16 %v2951
      %v2991 = vunpack.c.l.b16 %v2952
      %v2992 = vunpack.c.h.b16 %v2952
      %v2993 = vunpack.c.l.b16 %v2953
      %v2994 = vunpack.c.h.b16 %v2953
      %v2995 = vunpack.c.l.b16 %v2954
      %v2996 = vunpack.c.h.b16 %v2954
      %v2997 = vunpack.c.l.b16 %v2955
      %v2998 = vunpack.c.h.b16 %v2955
      %v2999 = vunpack.c.l.b16 %v2956
      %v3000 = vunpack.c.h.b16 %v2956
      %v3001 = vunpack.c.l.b16 %v2957
      %v3002 = vunpack.c.h.b16 %v2957
      %v3003 = vunpack.c.l.b16 %v2958
      %v3004 = vunpack.c.h.b16 %v2958
      %v3005 = vunpack.c.l.b16 %v2959
      %v3006 = vunpack.c.h.b16 %v2959
      %v3007 = vunpack.c.l.b16 %v2960
      %v3008 = vunpack.c.h.b16 %v2960
      %v3009 = vpack.c.b16 %v2979, %v2977
      %v3010 = vpack.c.b16 %v2980, %v2978
      %v3011 = vpack.c.b16 %v2983, %v2981
      %v3012 = vpack.c.b16 %v2984, %v2982
      %v3013 = vpack.c.b16 %v2987, %v2985
      %v3014 = vpack.c.b16 %v2988, %v2986
      %v3015 = vpack.c.b16 %v2991, %v2989
      %v3016 = vpack.c.b16 %v2992, %v2990
      %v3017 = vpack.c.b16 %v2995, %v2993
      %v3018 = vpack.c.b16 %v2996, %v2994
      %v3019 = vpack.c.b16 %v2999, %v2997
      %v3020 = vpack.c.b16 %v3000, %v2998
      %v3021 = vpack.c.b16 %v3003, %v3001
      %v3022 = vpack.c.b16 %v3004, %v3002
      %v3023 = vpack.c.b16 %v3007, %v3005
      %v3024 = vpack.c.b16 %v3008, %v3006
      %3041 = vmatpush.bf16.msra.mxu0 %v3023
      %3042 = vmatpush.bf16.msra.mxu0 %v3021
      %3043 = vmatpush.bf16.msra.mxu0 %v3019
      %3044 = vmatpush.bf16.msra.mxu0 %v3017
      %3045 = vmatpush.bf16.msra.mxu0 %v3015
      %3046 = vmatpush.bf16.msra.mxu0 %v3013
      %3047 = vmatpush.bf16.msra.mxu0 %v3011
      %3048 = vmatpush.bf16.msra.mxu0 %v3009
      %3049 = vmatmul.bf16.gmra.mxu0 %v2944
      %v3050 = vpop.f32.mrf.mxu0
      %v3051 = vadd.f32 0.0, %v3050
      %v3052 = vpop.f32.mrf.mxu0
      %3053 = vdwg.mxu0
      %3054 = vmatpush.bf16.msra.mxu0 %v3024
      %3055 = vmatpush.bf16.msra.mxu0 %v3022
      %3056 = vmatpush.bf16.msra.mxu0 %v3020
      %3057 = vmatpush.bf16.msra.mxu0 %v3018
      %3058 = vmatpush.bf16.msra.mxu0 %v3016
      %3059 = vmatpush.bf16.msra.mxu0 %v3014
      %3060 = vmatpush.bf16.msra.mxu0 %v3012
      %3061 = vmatpush.bf16.msra.mxu0 %v3010
      %3062 = vmatmul.bf16.gmra.mxu0 %v2944
      %v3063 = vpop.f32.mrf.mxu0
      %v3064 = vadd.f32 0.0, %v3063
      %v3065 = vpop.f32.mrf.mxu0
      %3066 = vdwg.mxu0
      %vm3067 = vcmask 1040384
      %v3068 = vsel %vm3067, %v3051, -inf
      %v3069 = vsel %vm3067, %v3064, -inf
      %v3070 = vmax.f32 %v3068, %v3069
      %3071 = vmax.xlane.f32.xlu0 %v3070
      %v3072 = vpop.xlane.xlu0 %3071
      %vm3073 = vcmp.ge.f32.partialorder %v3051, %v3072
      %vm3074 = vcmp.ge.f32.partialorder %v3064, %v3072
      %v3075 = vsel %vm3073, %v195, 256
      %v3076 = vsel %vm3074, %v198, 256
      %v3077 = vsel %vm3067, %v3075, 2147483647
      %v3078 = vsel %vm3067, %v3076, 2147483647
      %vm3079 = vcmp.lt.s32.totalorder %v3077, %v3078
      %v3080 = vsel %vm3079, %v3077, %v3078
      %v3081 = vand.u32 %v3080, 65535
      %v3082 = vshra.s32 %v3080, 16
      %v3083 = vcvt.s32.f32 %v3081
      %v3084 = vcvt.s32.f32 %v3082
      %3085 = vmin.xlane.f32.xlu0 %v3084
      %v3086 = vpop.xlane.xlu0 %3085
      %vm3087 = vcmp.eq.f32.partialorder %v3084, %v3086
      %v3088 = vsel %vm3087, %v3083, inf
      %3089 = vmin.xlane.f32.xlu0 %v3088
      %v3090 = vpop.xlane.xlu0 %3089
      %v3091 = vcvt.f32.s32 %v3090
      %v3092 = vcvt.f32.s32 %v3086
      %v3093 = vshll.u32 %v3092, 16
      %v3094 = vadd.s32 %v3093, %v3091
      %vm3095 = vcmp.eq.s32.totalorder %v3094, 0
      %vm3096 = vcmp.eq.s32.totalorder %v215, 0
      %vm3097 = vmxor %vm3095, 1
      %vm3098 = vmand %vm3096, %vm3097
      %vm3099 = vcmp.lt.s32.totalorder %v214, 16
      %vm3100 = vmand %vm3098, %vm3099
      %v3101 = vperm.slane %v214, 0
      %vm3102 = vcmp.eq.s32.totalorder %v192, %v3101
      %vm3103 = vcmp.eq.s32.totalorder %v193, %v3101
      %v3104 = vsel %vm3100, 1, 0
      %v3105 = vperm.slane %v3104, 0
      %vm3106 = vcmp.eq.s32.totalorder %v3105, 1
      %vm3107 = vmand %vm3102, %vm3106
      %vm3108 = vmand %vm3103, %vm3106
      %v3109 = vperm.slane %v3094, 0
      %v3110 = vsel %vm3107, %v3109, %v212
      %v3111 = vsel %vm3108, %v3109, %v213
      %v3112 = vadd.s32 %v214, 1
      %v3113 = vsel %vm3100, %v3112, %v214
      %vm3114 = vcmp.ge.s32.totalorder %v3113, 16
      %vm3115 = vmor %vm3095, %vm3114
      %v3116 = vsel %vm3115, 1, %v215
    $region98: #{generate.1} parent=1 // loop_footer
      %s211 = sadd.s32 1, %s207
    $region99: #{generate.1} parent=1 // loop_footer_branch
      %206 = sbr.rel target = $region95
    $region100: #{generate.1} parent=1 // loop_exit
      _
    %vm3117 = vcmask 7168
    %3118 = vst.msk [vmem:[%s14] sm:$0xff] %vm3117, %v212
    %3119 = vst.msk [vmem:[%s14 + $0x8] sm:$0xff] %vm3117, %v213
    %vm3120 = vcmask 0
    %3121 = vst.msk [vmem:[#allocation18] sm:$0x1] %vm3120, %v214
    // Predicated region
    $region101: #{generate.1} parent=1 // pred_check
      _
    $region102: #{generate.1} parent=1 // pred_check_branch
      %3123 = sbr.rel (0) target = $region104
    $region103: #{generate.1} parent=1 // pred_region
      _
    $region104: #{generate.1} parent=1 // pred_fallthru
      _
    // Predicated region
    $region105: #{generate.1} parent=1 // pred_check
      _
    $region106: #{generate.1} parent=1 // pred_check_branch
      %3125 = sbr.rel (0) target = $region108
    $region107: #{generate.1} parent=1 // pred_region
      %3127 = vsyncadd [#allocation5], 0
      %s3129 = sshll.u32 [#allocation18], 4
      %s3130 = int_to_ptr.vmem [resolvable:$true] %s3129
      %s3131 = sshll.u32 %s15, 4
      %s3132 = int_to_ptr.hbm [resolvable:$true] %s3131
      %3134 = dma.vmem_to_hbm [thread:$0]  %s3130, 16, %s3132, [#allocation5]
    $region108: #{generate.1} parent=1 // pred_fallthru
      _
    // Predicated region
    $region109: #{generate.1} parent=1 // pred_check
      _
    $region110: #{generate.1} parent=1 // pred_check_branch
      %3136 = sbr.rel (0) target = $region112
    $region111: #{generate.1} parent=1 // pred_region
      _
    $region112: #{generate.1} parent=1 // pred_fallthru
      _
    // Predicated region
    $region113: #{generate.1} parent=1 // pred_check
      _
    $region114: #{generate.1} parent=1 // pred_check_branch
      %3138 = sbr.rel (0) target = $region116
    $region115: #{generate.1} parent=1 // pred_region
      %3140 = dma.done [#allocation5], 16
    $region116: #{generate.1} parent=1 // pred_fallthru
      _
    %3141 = vsyncpa [#allocation4], 1
    %3142 = vsyncpa [#allocation7], 1
    %3143 = vsyncpa [#allocation10], 1
    %3144 = vsyncpa [#allocation13], 1
    %3145 = vsyncpa [#allocation16], 1
    %3146 = vsyncpa [#allocation5], 1

</llo_original>
